<compile_context>
chip_gen: v5e
topology: v5e:2x2
jax: 0.10.0
libtpu: 0.0.40
codegen_flags: <defaults>
</compile_context>

<pallas_src>
import functools

import jax
import jax.numpy as jnp
import numpy as np
from jax.experimental import pallas as pl
from jax.experimental.pallas import tpu as pltpu

_SUBLANE = 8


def _make_decoder_lstm_kernel(n_layers, chunk, batch_blk, hidden, mxu_dtype):
    """Fused multi-layer LSTM kernel for one (batch_block, time_chunk) grid step."""
    L, C, Bb, H = n_layers, chunk, batch_blk, hidden
    prec = None if mxu_dtype is not None else jax.lax.Precision.HIGHEST
    hbuf_dtype = jnp.float32 if mxu_dtype is None else mxu_dtype
    unroll = C if C <= 16 else 8

    def kernel(*refs):
        # inputs
        x_ref = refs[0]                                   # (C*Bb, E) time-major chunk
        w_refs = refs[1:1 + 3 * L]                        # per layer: W_ih^T, W_hh^T, b
        h0_ref = refs[1 + 3 * L]                          # (1, L, Bb, H)
        c0_ref = refs[2 + 3 * L]                          # (1, L, Bb, H)
        # outputs
        out_ref = refs[3 + 3 * L]                         # (C*Bb, H) chunk of outputs
        hN_ref = refs[4 + 3 * L]                          # (1, L, Bb, H)
        cN_ref = refs[5 + 3 * L]                          # (1, L, Bb, H)
        # scratch
        pre_sc, hbuf_sc, hst_sc, cst_sc = refs[6 + 3 * L:]

        ci = pl.program_id(1)                             # time-chunk index (inner axis)

        @pl.when(ci == 0)
        def _():
            hst_sc[...] = h0_ref[0]
            cst_sc[...] = c0_ref[0]

        for l in range(L):
            w_ih_t = w_refs[3 * l][...]                   # (IN_l, 4H) pre-transposed
            w_hh_t = w_refs[3 * l + 1][...]               # (H, 4H)
            bias = w_refs[3 * l + 2][...]                 # (1, 4H) fp32, order (i,f,o,g)

            # Layer input for this chunk: embedded tokens (layer 0) or previous layer's
            # hidden sequence kept in VMEM.  Hoisted input projection: one MXU matmul
            # over all chunk timesteps.
            layer_in = x_ref[...] if l == 0 else hbuf_sc[...]
            pre_sc[...] = jnp.dot(layer_in, w_ih_t,
                                  preferred_element_type=jnp.float32,
                                  precision=prec) + bias  # (C*Bb, 4H) fp32

            dst_ref = out_ref if l == L - 1 else hbuf_sc
            dst_dtype = jnp.float32 if l == L - 1 else hbuf_dtype

            def step(t, carry, w_hh_t=w_hh_t, dst_ref=dst_ref, dst_dtype=dst_dtype):
                h, c = carry                              # fp32 values (no VMEM round trip)
                row = pl.multiple_of(t * Bb, Bb)          # Bb is a multiple of 8
                h_op = h if mxu_dtype is None else h.astype(mxu_dtype)
                gates = pre_sc[pl.ds(row, Bb), :] + jnp.dot(
                    h_op, w_hh_t, preferred_element_type=jnp.float32,
                    precision=prec)                       # (Bb, 4H) fp32

                # Gate order (i, f, o, g): sigmoid on one contiguous 3H slab, tanh on H.
                # sigmoid(x) = 0.5*(1 + tanh(x/2)) -> single EUP op per element.
                sig = 0.5 * (1.0 + jnp.tanh(0.5 * gates[:, :3 * H]))
                g = jnp.tanh(gates[:, 3 * H:])
                i_g = sig[:, 0 * H:1 * H]
                f_g = sig[:, 1 * H:2 * H]
                o_g = sig[:, 2 * H:3 * H]

                c_new = f_g * c + i_g * g
                h_new = o_g * jnp.tanh(c_new)

                dst_ref[pl.ds(row, Bb), :] = h_new.astype(dst_dtype)
                return (h_new, c_new)

            h_fin, c_fin = jax.lax.fori_loop(
                0, C, step, (hst_sc[l], cst_sc[l]), unroll=unroll)
            hst_sc[l] = h_fin
            cst_sc[l] = c_fin

        @pl.when(ci == pl.num_programs(1) - 1)
        def _():
            hN_ref[0] = hst_sc[...]
            cN_ref[0] = cst_sc[...]

    return kernel


def _prepare_weights(lstm_layers, hidden_size, mxu_dtype):
    """Reorder gate rows (i,f,g,o)->(i,f,o,g), pre-transpose, optional bf16 cast."""
    H = hidden_size
    prepared = []
    for lp in lstm_layers:
        def _reorder(w):                                  # blocks of H along axis 0
            return jnp.concatenate(
                [w[0 * H:2 * H], w[3 * H:4 * H], w[2 * H:3 * H]], axis=0)

        w_ih_t = _reorder(lp["w_ih"]).T                   # (IN, 4H)
        w_hh_t = _reorder(lp["w_hh"]).T                   # (H, 4H)
        b = _reorder(lp["b"]).reshape(1, 4 * H).astype(jnp.float32)
        if mxu_dtype is not None:
            w_ih_t = w_ih_t.astype(mxu_dtype)
            w_hh_t = w_hh_t.astype(mxu_dtype)
        prepared.append((w_ih_t, w_hh_t, b))
    return prepared


def _pick_time_chunk(seq_len):
    for c in (128, 64, 32, 16, 8, 4, 2, 1):
        if c <= seq_len and seq_len % c == 0:
            return c
    return seq_len


@functools.partial(jax.jit, static_argnames=("mxu_dtype", "time_chunk"))
def decoder_forward(params, x_ids, hidden, cell, mxu_dtype=jnp.bfloat16,
                    time_chunk=None):
    """Matches Decoder.forward:
       x_ids : (B, S) int32 token ids
       hidden, cell : (n_layers, B, H)
       returns (output (B, S, H), hidden (L, B, H), cell (L, B, H))

       mxu_dtype=jnp.bfloat16 (default): bf16 MXU operands, fp32 accumulation/gates
       (recommended for v6e/v7x).  mxu_dtype=None: exact fp32 nn.LSTM semantics.
    """
    B, S = x_ids.shape
    L, _, H = hidden.shape
    E = params["embedding"].shape[1]

    C = _pick_time_chunk(S) if time_chunk is None else time_chunk
    assert S % C == 0, "time_chunk must divide the sequence length"
    nC = S // C

    # Time-major embedding gather: transpose the cheap int32 ids, not (B,S,E) activations.
    emb_tm = jnp.take(params["embedding"], x_ids.T, axis=0)       # (S, B, E)

    # Pad batch to a sublane multiple; split into batch blocks for the "parallel" axis.
    Bp = max(_SUBLANE, ((B + _SUBLANE - 1) // _SUBLANE) * _SUBLANE)
    pad = Bp - B
    nb = 2 if (Bp >= 2 * _SUBLANE and Bp % (2 * _SUBLANE) == 0) else 1
    Bb = Bp // nb

    in_dtype = jnp.float32 if mxu_dtype is None else mxu_dtype

    x_tm = jnp.pad(emb_tm, ((0, 0), (0, pad), (0, 0)))            # (S, Bp, E)
    x2d = (x_tm.reshape(S, nb, Bb, E).transpose(1, 0, 2, 3)
           .reshape(nb * S * Bb, E).astype(in_dtype))

    h0 = jnp.pad(hidden, ((0, 0), (0, pad), (0, 0)))              # (L, Bp, H)
    c0 = jnp.pad(cell, ((0, 0), (0, pad), (0, 0)))
    h0b = h0.reshape(L, nb, Bb, H).transpose(1, 0, 2, 3)          # (nb, L, Bb, H)
    c0b = c0.reshape(L, nb, Bb, H).transpose(1, 0, 2, 3)

    weights = _prepare_weights(params["lstm"], H, mxu_dtype)
    flat_w = [w for lw in weights for w in lw]

    kernel = _make_decoder_lstm_kernel(L, C, Bb, H, mxu_dtype)

    x_map = lambda bb, ci: (bb * nC + ci, 0)
    state_map = lambda bb, ci: (bb, 0, 0, 0)
    w_map = lambda bb, ci: (0, 0)

    in_specs = [pl.BlockSpec((C * Bb, E), x_map)]
    for (w_ih_t, w_hh_t, b) in weights:
        in_specs.append(pl.BlockSpec(w_ih_t.shape, w_map))
        in_specs.append(pl.BlockSpec(w_hh_t.shape, w_map))
        in_specs.append(pl.BlockSpec(b.shape, w_map))
    in_specs.append(pl.BlockSpec((1, L, Bb, H), state_map))
    in_specs.append(pl.BlockSpec((1, L, Bb, H), state_map))

    out_specs = (
        pl.BlockSpec((C * Bb, H), x_map),
        pl.BlockSpec((1, L, Bb, H), state_map),
        pl.BlockSpec((1, L, Bb, H), state_map),
    )

    out2d, hNb, cNb = pl.pallas_call(
        kernel,
        out_shape=(
            jax.ShapeDtypeStruct((nb * S * Bb, H), jnp.float32),
            jax.ShapeDtypeStruct((nb, L, Bb, H), jnp.float32),
            jax.ShapeDtypeStruct((nb, L, Bb, H), jnp.float32),
        ),
        grid_spec=pltpu.PrefetchScalarGridSpec(
            num_scalar_prefetch=0,
            grid=(nb, nC),
            in_specs=in_specs,
            out_specs=out_specs,
            scratch_shapes=[
                pltpu.VMEM((C * Bb, 4 * H), jnp.float32),   # hoisted pre-gates (one chunk)
                pltpu.VMEM((C * Bb, H), in_dtype),          # inter-layer hidden (one chunk)
                pltpu.VMEM((L, Bb, H), jnp.float32),        # h carry across chunks
                pltpu.VMEM((L, Bb, H), jnp.float32),        # c carry across chunks
            ],
        ),
        compiler_params=pltpu.CompilerParams(
            dimension_semantics=("parallel", "arbitrary"),
            vmem_limit_bytes=64 * 1024 * 1024),
    )(x2d, *flat_w, h0b, c0b)

    out = (out2d.reshape(nb, S, Bb, H).transpose(1, 0, 2, 3)
           .reshape(S, Bp, H)[:, :B, :].transpose(1, 0, 2))       # (B, S, H)
    hN = hNb.transpose(1, 0, 2, 3).reshape(L, Bp, H)[:, :B, :]
    cN = cNb.transpose(1, 0, 2, 3).reshape(L, Bp, H)[:, :B, :]
    return out, hN, cN


def init_decoder_params(key, vocab_size, embed_size, hidden_size, n_layers):
    """Deterministic parameter init mirroring nn.Embedding + nn.LSTM shapes/layout."""
    keys = jax.random.split(key, 1 + 4 * n_layers)
    params = {"embedding": jax.random.normal(
        keys[0], (vocab_size, embed_size), jnp.float32)}
    stdv = 1.0 / jnp.sqrt(hidden_size)
    layers = []
    for l in range(n_layers):
        in_dim = embed_size if l == 0 else hidden_size
        k_ih, k_hh, k_bih, k_bhh = keys[1 + 4 * l: 1 + 4 * (l + 1)]
        w_ih = jax.random.uniform(k_ih, (4 * hidden_size, in_dim),
                                  jnp.float32, -stdv, stdv)
        w_hh = jax.random.uniform(k_hh, (4 * hidden_size, hidden_size),
                                  jnp.float32, -stdv, stdv)
        b_ih = jax.random.uniform(k_bih, (4 * hidden_size,),
                                  jnp.float32, -stdv, stdv)
        b_hh = jax.random.uniform(k_bhh, (4 * hidden_size,),
                                  jnp.float32, -stdv, stdv)
        layers.append({"w_ih": w_ih, "w_hh": w_hh, "b": b_ih + b_hh})
    params["lstm"] = layers
    return params


def decoder_reference(params, x_ids, hidden, cell):
    """Pure-JAX reference of nn.Embedding + nn.LSTM (batch_first), full fp32 precision."""
    emb = jnp.take(params["embedding"], x_ids, axis=0)             # (B, S, E)
    H = hidden.shape[-1]
    hi = jax.lax.Precision.HIGHEST
    layer_in = jnp.transpose(emb, (1, 0, 2))                       # (S, B, E)
    h_finals, c_finals = [], []
    for lp in params["lstm"]:
        w_ih, w_hh, b = lp["w_ih"], lp["w_hh"], lp["b"]

        def step(carry, x_t, w_ih=w_ih, w_hh=w_hh, b=b):
            h, c = carry
            gates = (jnp.dot(x_t, w_ih.T, precision=hi)
                     + jnp.dot(h, w_hh.T, precision=hi) + b)
            i = jax.nn.sigmoid(gates[:, 0 * H:1 * H])
            f = jax.nn.sigmoid(gates[:, 1 * H:2 * H])
            g = jnp.tanh(gates[:, 2 * H:3 * H])
            o = jax.nn.sigmoid(gates[:, 3 * H:4 * H])
            c_new = f * c + i * g
            h_new = o * jnp.tanh(c_new)
            return (h_new, c_new), h_new

        (hN, cN), out_tm = jax.lax.scan(step, (hidden[l := len(h_finals)], cell[l]),
                                        layer_in)
        h_finals.append(hN)
        c_finals.append(cN)
        layer_in = out_tm
    return (jnp.transpose(layer_in, (1, 0, 2)),
            jnp.stack(h_finals, 0), jnp.stack(c_finals, 0))


if __name__ == "__main__":
    vocab_size = 16
    embed_size = 32
    hidden_size = 32
    n_layers = 2
    batch = 2
    seq = 8

    key = jax.random.PRNGKey(0)
    k_params, k_ids, k_h, k_c = jax.random.split(key, 4)

    params = init_decoder_params(k_params, vocab_size, embed_size,
                                 hidden_size, n_layers)
    x_ids = jax.random.randint(k_ids, (batch, seq), 0, vocab_size, jnp.int32)
    hidden0 = jax.random.normal(k_h, (n_layers, batch, hidden_size), jnp.float32)
    cell0 = jax.random.normal(k_c, (n_layers, batch, hidden_size), jnp.float32)

    ref_out, ref_h, ref_c = decoder_reference(params, x_ids, hidden0, cell0)

    # Exact-fp32 path (precision=HIGHEST), time_chunk=4 -> 2 chunks exercises the
    # carry-across-grid-steps logic.  Tight tolerance per review.
    out32, h32, c32 = decoder_forward(params, x_ids, hidden0, cell0,
                                      mxu_dtype=None, time_chunk=4)
    jax.block_until_ready((out32, h32, c32))
    assert out32.shape == (batch, seq, hidden_size)
    assert h32.shape == (n_layers, batch, hidden_size)
    assert c32.shape == (n_layers, batch, hidden_size)
    np.testing.assert_allclose(np.asarray(out32), np.asarray(ref_out),
                               rtol=1e-5, atol=1e-5)
    np.testing.assert_allclose(np.asarray(h32), np.asarray(ref_h),
                               rtol=1e-5, atol=1e-5)
    np.testing.assert_allclose(np.asarray(c32), np.asarray(ref_c),
                               rtol=1e-5, atol=1e-5)

    # Default bf16-MXU-operand path (fp32 accumulation / gate math) for v6e / v7x.
    out_bf, h_bf, c_bf = decoder_forward(params, x_ids, hidden0, cell0)
    jax.block_until_ready((out_bf, h_bf, c_bf))
    np.testing.assert_allclose(np.asarray(out_bf), np.asarray(ref_out),
                               rtol=5e-2, atol=5e-2)
    np.testing.assert_allclose(np.asarray(h_bf), np.asarray(ref_h),
                               rtol=5e-2, atol=5e-2)
    np.testing.assert_allclose(np.asarray(c_bf), np.asarray(ref_c),
                               rtol=5e-2, atol=5e-2)

    print("KERNEL_OK")
</pallas_src>

<mosaic_0001>
module attributes {stable_mosaic.version = 11 : i64} {
  func.func @kernel(%arg0: i32, %arg1: i32, %arg2: memref<32x32xf32, #tpu.memory_space<vmem>>, %arg3: memref<32x128xf32, #tpu.memory_space<vmem>>, %arg4: memref<32x128xf32, #tpu.memory_space<vmem>>, %arg5: memref<1x128xf32, #tpu.memory_space<vmem>>, %arg6: memref<32x128xf32, #tpu.memory_space<vmem>>, %arg7: memref<32x128xf32, #tpu.memory_space<vmem>>, %arg8: memref<1x128xf32, #tpu.memory_space<vmem>>, %arg9: memref<1x2x8x32xf32, #tpu.memory_space<vmem>>, %arg10: memref<1x2x8x32xf32, #tpu.memory_space<vmem>>, %arg11: memref<32x32xf32, #tpu.memory_space<vmem>>, %arg12: memref<1x2x8x32xf32, #tpu.memory_space<vmem>>, %arg13: memref<1x2x8x32xf32, #tpu.memory_space<vmem>>, %arg14: memref<32x128xf32, #tpu.memory_space<vmem>>, %arg15: memref<32x32xf32, #tpu.memory_space<vmem>>, %arg16: memref<2x8x32xf32, #tpu.memory_space<vmem>>, %arg17: memref<2x8x32xf32, #tpu.memory_space<vmem>>) attributes {dimension_semantics = [#tpu.dimension_semantics<parallel>, #tpu.dimension_semantics<arbitrary>], iteration_bounds = array<i64: 1, 2>, scalar_prefetch = 0 : i64, scratch_operands = 4 : i64, tpu.core_type = #tpu.core_type<tc>, window_params = [{transform_indices = @transform_0, window_bounds = array<i64: 32, 32>}, {pipeline_mode = #tpu.pipeline_mode<synchronous>, transform_indices = @transform_1, window_bounds = array<i64: 32, 128>}, {pipeline_mode = #tpu.pipeline_mode<synchronous>, transform_indices = @transform_2, window_bounds = array<i64: 32, 128>}, {pipeline_mode = #tpu.pipeline_mode<synchronous>, transform_indices = @transform_3, window_bounds = array<i64: 1, 128>}, {pipeline_mode = #tpu.pipeline_mode<synchronous>, transform_indices = @transform_4, window_bounds = array<i64: 32, 128>}, {pipeline_mode = #tpu.pipeline_mode<synchronous>, transform_indices = @transform_5, window_bounds = array<i64: 32, 128>}, {pipeline_mode = #tpu.pipeline_mode<synchronous>, transform_indices = @transform_6, window_bounds = array<i64: 1, 128>}, {transform_indices = @transform_7, window_bounds = array<i64: 1, 2, 8, 32>}, {transform_indices = @transform_8, window_bounds = array<i64: 1, 2, 8, 32>}, {transform_indices = @transform_9, window_bounds = array<i64: 32, 32>}, {transform_indices = @transform_10, window_bounds = array<i64: 1, 2, 8, 32>}, {transform_indices = @transform_11, window_bounds = array<i64: 1, 2, 8, 32>}]} {
    %c0_i32 = arith.constant 0 : i32
    %0 = arith.cmpi eq, %arg1, %c0_i32 : i32
    %1 = arith.extui %0 : i1 to i32
    %c0_i32_0 = arith.constant 0 : i32
    %2 = arith.cmpi ne, %1, %c0_i32_0 : i32
    scf.if %2 {
      %c0_107 = arith.constant 0 : index
      %c0_108 = arith.constant 0 : index
      %c0_109 = arith.constant 0 : index
      %c0_110 = arith.constant 0 : index
      %250 = vector.load %arg9[%c0_107, %c0_108, %c0_109, %c0_110] : memref<1x2x8x32xf32, #tpu.memory_space<vmem>>, vector<1x2x8x32xf32>
      %251 = vector.shape_cast %250 : vector<1x2x8x32xf32> to vector<2x8x32xf32>
      %c0_111 = arith.constant 0 : index
      %c0_112 = arith.constant 0 : index
      %c0_113 = arith.constant 0 : index
      %252 = vector.load %arg16[%c0_111, %c0_112, %c0_113] : memref<2x8x32xf32, #tpu.memory_space<vmem>>, vector<2x8x32xf32>
      tpu.vector_store %arg16[%c0_111, %c0_112, %c0_113], %251 {strides = array<i32>} : memref<2x8x32xf32, #tpu.memory_space<vmem>>, vector<2x8x32xf32>,
      %c0_114 = arith.constant 0 : index
      %c0_115 = arith.constant 0 : index
      %c0_116 = arith.constant 0 : index
      %c0_117 = arith.constant 0 : index
      %253 = vector.load %arg10[%c0_114, %c0_115, %c0_116, %c0_117] : memref<1x2x8x32xf32, #tpu.memory_space<vmem>>, vector<1x2x8x32xf32>
      %254 = vector.shape_cast %253 : vector<1x2x8x32xf32> to vector<2x8x32xf32>
      %c0_118 = arith.constant 0 : index
      %c0_119 = arith.constant 0 : index
      %c0_120 = arith.constant 0 : index
      %255 = vector.load %arg17[%c0_118, %c0_119, %c0_120] : memref<2x8x32xf32, #tpu.memory_space<vmem>>, vector<2x8x32xf32>
      tpu.vector_store %arg17[%c0_118, %c0_119, %c0_120], %254 {strides = array<i32>} : memref<2x8x32xf32, #tpu.memory_space<vmem>>, vector<2x8x32xf32>,
    } else {
    }
    %c0 = arith.constant 0 : index
    %c0_1 = arith.constant 0 : index
    %3 = vector.load %arg3[%c0, %c0_1] : memref<32x128xf32, #tpu.memory_space<vmem>>, vector<32x128xf32>
    %c0_2 = arith.constant 0 : index
    %c0_3 = arith.constant 0 : index
    %4 = vector.load %arg4[%c0_2, %c0_3] : memref<32x128xf32, #tpu.memory_space<vmem>>, vector<32x128xf32>
    %c0_4 = arith.constant 0 : index
    %c0_5 = arith.constant 0 : index
    %5 = vector.load %arg5[%c0_4, %c0_5] : memref<1x128xf32, #tpu.memory_space<vmem>>, vector<1x128xf32>
    %c0_6 = arith.constant 0 : index
    %c0_7 = arith.constant 0 : index
    %6 = vector.load %arg2[%c0_6, %c0_7] : memref<32x32xf32, #tpu.memory_space<vmem>>, vector<32x32xf32>
    %cst = arith.constant dense<0.000000e+00> : vector<32x128xf32>
    %7 = tpu.matmul %6, %3, %cst {dimension_numbers = #tpu.dot_dimension_numbers<[1], [0], [0], [1], [0, 0, 1, 1], [], []>, precision = #tpu.contract_precision<fp32>} : vector<32x32xf32>, vector<32x128xf32>, vector<32x128xf32> -> vector<32x128xf32>
    %8 = vector.broadcast %5 : vector<1x128xf32> to vector<32x128xf32>
    %9 = arith.addf %7, %8 : vector<32x128xf32>
    %c0_8 = arith.constant 0 : index
    %c0_9 = arith.constant 0 : index
    %10 = vector.load %arg14[%c0_8, %c0_9] : memref<32x128xf32, #tpu.memory_space<vmem>>, vector<32x128xf32>
    tpu.vector_store %arg14[%c0_8, %c0_9], %9 {strides = array<i32>} : memref<32x128xf32, #tpu.memory_space<vmem>>, vector<32x128xf32>,
    %c0_10 = arith.constant 0 : index
    %c0_11 = arith.constant 0 : index
    %c0_12 = arith.constant 0 : index
    %11 = vector.load %arg16[%c0_10, %c0_11, %c0_12] : memref<2x8x32xf32, #tpu.memory_space<vmem>>, vector<1x8x32xf32>
    %12 = vector.shape_cast %11 : vector<1x8x32xf32> to vector<8x32xf32>
    %c0_13 = arith.constant 0 : index
    %c0_14 = arith.constant 0 : index
    %c0_15 = arith.constant 0 : index
    %13 = vector.load %arg17[%c0_13, %c0_14, %c0_15] : memref<2x8x32xf32, #tpu.memory_space<vmem>>, vector<1x8x32xf32>
    %14 = vector.shape_cast %13 : vector<1x8x32xf32> to vector<8x32xf32>
    %c0_i32_16 = arith.constant 0 : i32
    %c8_i32 = arith.constant 8 : i32
    %15 = arith.muli %c0_i32_16, %c8_i32 : i32
    %16 = tpu.assume_multiple %15, 8 : i32
    %17 = arith.index_cast %16 : i32 to index
    %c0_17 = arith.constant 0 : index
    %18 = vector.load %arg14[%17, %c0_17] : memref<32x128xf32, #tpu.memory_space<vmem>>, vector<8x128xf32>
    %cst_18 = arith.constant dense<0.000000e+00> : vector<8x128xf32>
    %19 = tpu.matmul %12, %4, %cst_18 {dimension_numbers = #tpu.dot_dimension_numbers<[1], [0], [0], [1], [0, 0, 1, 1], [], []>, precision = #tpu.contract_precision<fp32>} : vector<8x32xf32>, vector<32x128xf32>, vector<8x128xf32> -> vector<8x128xf32>
    %20 = arith.addf %18, %19 : vector<8x128xf32>
    %21 = vector.extract_strided_slice %20 {offsets = [0, 0], sizes = [8, 96], strides = [1, 1]} : vector<8x128xf32> to vector<8x96xf32>
    %cst_19 = arith.constant 5.000000e-01 : f32
    %22 = vector.broadcast %cst_19 : f32 to vector<8x96xf32>
    %23 = arith.mulf %22, %21 : vector<8x96xf32>
    %24 = math.tanh %23 : vector<8x96xf32>
    %cst_20 = arith.constant 1.000000e+00 : f32
    %25 = vector.broadcast %cst_20 : f32 to vector<8x96xf32>
    %26 = arith.addf %25, %24 : vector<8x96xf32>
    %cst_21 = arith.constant 5.000000e-01 : f32
    %27 = vector.broadcast %cst_21 : f32 to vector<8x96xf32>
    %28 = arith.mulf %27, %26 : vector<8x96xf32>
    %29 = vector.extract_strided_slice %20 {offsets = [0, 96], sizes = [8, 32], strides = [1, 1]} : vector<8x128xf32> to vector<8x32xf32>
    %30 = math.tanh %29 : vector<8x32xf32>
    %31 = vector.extract_strided_slice %28 {offsets = [0, 0], sizes = [8, 32], strides = [1, 1]} : vector<8x96xf32> to vector<8x32xf32>
    %32 = vector.extract_strided_slice %28 {offsets = [0, 32], sizes = [8, 32], strides = [1, 1]} : vector<8x96xf32> to vector<8x32xf32>
    %33 = vector.extract_strided_slice %28 {offsets = [0, 64], sizes = [8, 32], strides = [1, 1]} : vector<8x96xf32> to vector<8x32xf32>
    %34 = arith.mulf %32, %14 : vector<8x32xf32>
    %35 = arith.mulf %31, %30 : vector<8x32xf32>
    %36 = arith.addf %34, %35 : vector<8x32xf32>
    %37 = math.tanh %36 : vector<8x32xf32>
    %38 = arith.mulf %33, %37 : vector<8x32xf32>
    %39 = arith.index_cast %16 : i32 to index
    %c0_22 = arith.constant 0 : index
    %40 = vector.load %arg15[%39, %c0_22] : memref<32x32xf32, #tpu.memory_space<vmem>>, vector<8x32xf32>
    tpu.vector_store %arg15[%39, %c0_22], %38 {strides = array<i32>} : memref<32x32xf32, #tpu.memory_space<vmem>>, vector<8x32xf32>,
    %c1_i32 = arith.constant 1 : i32
    %c8_i32_23 = arith.constant 8 : i32
    %41 = arith.muli %c1_i32, %c8_i32_23 : i32
    %42 = tpu.assume_multiple %41, 8 : i32
    %43 = arith.index_cast %42 : i32 to index
    %c0_24 = arith.constant 0 : index
    %44 = vector.load %arg14[%43, %c0_24] : memref<32x128xf32, #tpu.memory_space<vmem>>, vector<8x128xf32>
    %cst_25 = arith.constant dense<0.000000e+00> : vector<8x128xf32>
    %45 = tpu.matmul %38, %4, %cst_25 {dimension_numbers = #tpu.dot_dimension_numbers<[1], [0], [0], [1], [0, 0, 1, 1], [], []>, precision = #tpu.contract_precision<fp32>} : vector<8x32xf32>, vector<32x128xf32>, vector<8x128xf32> -> vector<8x128xf32>
    %46 = arith.addf %44, %45 : vector<8x128xf32>
    %47 = vector.extract_strided_slice %46 {offsets = [0, 0], sizes = [8, 96], strides = [1, 1]} : vector<8x128xf32> to vector<8x96xf32>
    %cst_26 = arith.constant 5.000000e-01 : f32
    %48 = vector.broadcast %cst_26 : f32 to vector<8x96xf32>
    %49 = arith.mulf %48, %47 : vector<8x96xf32>
    %50 = math.tanh %49 : vector<8x96xf32>
    %cst_27 = arith.constant 1.000000e+00 : f32
    %51 = vector.broadcast %cst_27 : f32 to vector<8x96xf32>
    %52 = arith.addf %51, %50 : vector<8x96xf32>
    %cst_28 = arith.constant 5.000000e-01 : f32
    %53 = vector.broadcast %cst_28 : f32 to vector<8x96xf32>
    %54 = arith.mulf %53, %52 : vector<8x96xf32>
    %55 = vector.extract_strided_slice %46 {offsets = [0, 96], sizes = [8, 32], strides = [1, 1]} : vector<8x128xf32> to vector<8x32xf32>
    %56 = math.tanh %55 : vector<8x32xf32>
    %57 = vector.extract_strided_slice %54 {offsets = [0, 0], sizes = [8, 32], strides = [1, 1]} : vector<8x96xf32> to vector<8x32xf32>
    %58 = vector.extract_strided_slice %54 {offsets = [0, 32], sizes = [8, 32], strides = [1, 1]} : vector<8x96xf32> to vector<8x32xf32>
    %59 = vector.extract_strided_slice %54 {offsets = [0, 64], sizes = [8, 32], strides = [1, 1]} : vector<8x96xf32> to vector<8x32xf32>
    %60 = arith.mulf %58, %36 : vector<8x32xf32>
    %61 = arith.mulf %57, %56 : vector<8x32xf32>
    %62 = arith.addf %60, %61 : vector<8x32xf32>
    %63 = math.tanh %62 : vector<8x32xf32>
    %64 = arith.mulf %59, %63 : vector<8x32xf32>
    %65 = arith.index_cast %42 : i32 to index
    %c0_29 = arith.constant 0 : index
    %66 = vector.load %arg15[%65, %c0_29] : memref<32x32xf32, #tpu.memory_space<vmem>>, vector<8x32xf32>
    tpu.vector_store %arg15[%65, %c0_29], %64 {strides = array<i32>} : memref<32x32xf32, #tpu.memory_space<vmem>>, vector<8x32xf32>,
    %c2_i32 = arith.constant 2 : i32
    %c8_i32_30 = arith.constant 8 : i32
    %67 = arith.muli %c2_i32, %c8_i32_30 : i32
    %68 = tpu.assume_multiple %67, 8 : i32
    %69 = arith.index_cast %68 : i32 to index
    %c0_31 = arith.constant 0 : index
    %70 = vector.load %arg14[%69, %c0_31] : memref<32x128xf32, #tpu.memory_space<vmem>>, vector<8x128xf32>
    %cst_32 = arith.constant dense<0.000000e+00> : vector<8x128xf32>
    %71 = tpu.matmul %64, %4, %cst_32 {dimension_numbers = #tpu.dot_dimension_numbers<[1], [0], [0], [1], [0, 0, 1, 1], [], []>, precision = #tpu.contract_precision<fp32>} : vector<8x32xf32>, vector<32x128xf32>, vector<8x128xf32> -> vector<8x128xf32>
    %72 = arith.addf %70, %71 : vector<8x128xf32>
    %73 = vector.extract_strided_slice %72 {offsets = [0, 0], sizes = [8, 96], strides = [1, 1]} : vector<8x128xf32> to vector<8x96xf32>
    %cst_33 = arith.constant 5.000000e-01 : f32
    %74 = vector.broadcast %cst_33 : f32 to vector<8x96xf32>
    %75 = arith.mulf %74, %73 : vector<8x96xf32>
    %76 = math.tanh %75 : vector<8x96xf32>
    %cst_34 = arith.constant 1.000000e+00 : f32
    %77 = vector.broadcast %cst_34 : f32 to vector<8x96xf32>
    %78 = arith.addf %77, %76 : vector<8x96xf32>
    %cst_35 = arith.constant 5.000000e-01 : f32
    %79 = vector.broadcast %cst_35 : f32 to vector<8x96xf32>
    %80 = arith.mulf %79, %78 : vector<8x96xf32>
    %81 = vector.extract_strided_slice %72 {offsets = [0, 96], sizes = [8, 32], strides = [1, 1]} : vector<8x128xf32> to vector<8x32xf32>
    %82 = math.tanh %81 : vector<8x32xf32>
    %83 = vector.extract_strided_slice %80 {offsets = [0, 0], sizes = [8, 32], strides = [1, 1]} : vector<8x96xf32> to vector<8x32xf32>
    %84 = vector.extract_strided_slice %80 {offsets = [0, 32], sizes = [8, 32], strides = [1, 1]} : vector<8x96xf32> to vector<8x32xf32>
    %85 = vector.extract_strided_slice %80 {offsets = [0, 64], sizes = [8, 32], strides = [1, 1]} : vector<8x96xf32> to vector<8x32xf32>
    %86 = arith.mulf %84, %62 : vector<8x32xf32>
    %87 = arith.mulf %83, %82 : vector<8x32xf32>
    %88 = arith.addf %86, %87 : vector<8x32xf32>
    %89 = math.tanh %88 : vector<8x32xf32>
    %90 = arith.mulf %85, %89 : vector<8x32xf32>
    %91 = arith.index_cast %68 : i32 to index
    %c0_36 = arith.constant 0 : index
    %92 = vector.load %arg15[%91, %c0_36] : memref<32x32xf32, #tpu.memory_space<vmem>>, vector<8x32xf32>
    tpu.vector_store %arg15[%91, %c0_36], %90 {strides = array<i32>} : memref<32x32xf32, #tpu.memory_space<vmem>>, vector<8x32xf32>,
    %c3_i32 = arith.constant 3 : i32
    %c8_i32_37 = arith.constant 8 : i32
    %93 = arith.muli %c3_i32, %c8_i32_37 : i32
    %94 = tpu.assume_multiple %93, 8 : i32
    %95 = arith.index_cast %94 : i32 to index
    %c0_38 = arith.constant 0 : index
    %96 = vector.load %arg14[%95, %c0_38] : memref<32x128xf32, #tpu.memory_space<vmem>>, vector<8x128xf32>
    %cst_39 = arith.constant dense<0.000000e+00> : vector<8x128xf32>
    %97 = tpu.matmul %90, %4, %cst_39 {dimension_numbers = #tpu.dot_dimension_numbers<[1], [0], [0], [1], [0, 0, 1, 1], [], []>, precision = #tpu.contract_precision<fp32>} : vector<8x32xf32>, vector<32x128xf32>, vector<8x128xf32> -> vector<8x128xf32>
    %98 = arith.addf %96, %97 : vector<8x128xf32>
    %99 = vector.extract_strided_slice %98 {offsets = [0, 0], sizes = [8, 96], strides = [1, 1]} : vector<8x128xf32> to vector<8x96xf32>
    %cst_40 = arith.constant 5.000000e-01 : f32
    %100 = vector.broadcast %cst_40 : f32 to vector<8x96xf32>
    %101 = arith.mulf %100, %99 : vector<8x96xf32>
    %102 = math.tanh %101 : vector<8x96xf32>
    %cst_41 = arith.constant 1.000000e+00 : f32
    %103 = vector.broadcast %cst_41 : f32 to vector<8x96xf32>
    %104 = arith.addf %103, %102 : vector<8x96xf32>
    %cst_42 = arith.constant 5.000000e-01 : f32
    %105 = vector.broadcast %cst_42 : f32 to vector<8x96xf32>
    %106 = arith.mulf %105, %104 : vector<8x96xf32>
    %107 = vector.extract_strided_slice %98 {offsets = [0, 96], sizes = [8, 32], strides = [1, 1]} : vector<8x128xf32> to vector<8x32xf32>
    %108 = math.tanh %107 : vector<8x32xf32>
    %109 = vector.extract_strided_slice %106 {offsets = [0, 0], sizes = [8, 32], strides = [1, 1]} : vector<8x96xf32> to vector<8x32xf32>
    %110 = vector.extract_strided_slice %106 {offsets = [0, 32], sizes = [8, 32], strides = [1, 1]} : vector<8x96xf32> to vector<8x32xf32>
    %111 = vector.extract_strided_slice %106 {offsets = [0, 64], sizes = [8, 32], strides = [1, 1]} : vector<8x96xf32> to vector<8x32xf32>
    %112 = arith.mulf %110, %88 : vector<8x32xf32>
    %113 = arith.mulf %109, %108 : vector<8x32xf32>
    %114 = arith.addf %112, %113 : vector<8x32xf32>
    %115 = math.tanh %114 : vector<8x32xf32>
    %116 = arith.mulf %111, %115 : vector<8x32xf32>
    %117 = arith.index_cast %94 : i32 to index
    %c0_43 = arith.constant 0 : index
    %118 = vector.load %arg15[%117, %c0_43] : memref<32x32xf32, #tpu.memory_space<vmem>>, vector<8x32xf32>
    tpu.vector_store %arg15[%117, %c0_43], %116 {strides = array<i32>} : memref<32x32xf32, #tpu.memory_space<vmem>>, vector<8x32xf32>,
    %c4_i32 = arith.constant 4 : i32
    %c0_44 = arith.constant 0 : index
    %c0_45 = arith.constant 0 : index
    %c0_46 = arith.constant 0 : index
    %119 = vector.load %arg16[%c0_44, %c0_45, %c0_46] : memref<2x8x32xf32, #tpu.memory_space<vmem>>, vector<1x8x32xf32>
    %120 = vector.shape_cast %119 : vector<1x8x32xf32> to vector<8x32xf32>
    %121 = vector.shape_cast %116 : vector<8x32xf32> to vector<1x8x32xf32>
    tpu.vector_store %arg16[%c0_44, %c0_45, %c0_46], %121 {strides = array<i32>} : memref<2x8x32xf32, #tpu.memory_space<vmem>>, vector<1x8x32xf32>,
    %c0_47 = arith.constant 0 : index
    %c0_48 = arith.constant 0 : index
    %c0_49 = arith.constant 0 : index
    %122 = vector.load %arg17[%c0_47, %c0_48, %c0_49] : memref<2x8x32xf32, #tpu.memory_space<vmem>>, vector<1x8x32xf32>
    %123 = vector.shape_cast %122 : vector<1x8x32xf32> to vector<8x32xf32>
    %124 = vector.shape_cast %114 : vector<8x32xf32> to vector<1x8x32xf32>
    tpu.vector_store %arg17[%c0_47, %c0_48, %c0_49], %124 {strides = array<i32>} : memref<2x8x32xf32, #tpu.memory_space<vmem>>, vector<1x8x32xf32>,
    %c0_50 = arith.constant 0 : index
    %c0_51 = arith.constant 0 : index
    %125 = vector.load %arg6[%c0_50, %c0_51] : memref<32x128xf32, #tpu.memory_space<vmem>>, vector<32x128xf32>
    %c0_52 = arith.constant 0 : index
    %c0_53 = arith.constant 0 : index
    %126 = vector.load %arg7[%c0_52, %c0_53] : memref<32x128xf32, #tpu.memory_space<vmem>>, vector<32x128xf32>
    %c0_54 = arith.constant 0 : index
    %c0_55 = arith.constant 0 : index
    %127 = vector.load %arg8[%c0_54, %c0_55] : memref<1x128xf32, #tpu.memory_space<vmem>>, vector<1x128xf32>
    %c0_56 = arith.constant 0 : index
    %c0_57 = arith.constant 0 : index
    %128 = vector.load %arg15[%c0_56, %c0_57] : memref<32x32xf32, #tpu.memory_space<vmem>>, vector<32x32xf32>
    %cst_58 = arith.constant dense<0.000000e+00> : vector<32x128xf32>
    %129 = tpu.matmul %128, %125, %cst_58 {dimension_numbers = #tpu.dot_dimension_numbers<[1], [0], [0], [1], [0, 0, 1, 1], [], []>, precision = #tpu.contract_precision<fp32>} : vector<32x32xf32>, vector<32x128xf32>, vector<32x128xf32> -> vector<32x128xf32>
    %130 = vector.broadcast %127 : vector<1x128xf32> to vector<32x128xf32>
    %131 = arith.addf %129, %130 : vector<32x128xf32>
    %c0_59 = arith.constant 0 : index
    %c0_60 = arith.constant 0 : index
    %132 = vector.load %arg14[%c0_59, %c0_60] : memref<32x128xf32, #tpu.memory_space<vmem>>, vector<32x128xf32>
    tpu.vector_store %arg14[%c0_59, %c0_60], %131 {strides = array<i32>} : memref<32x128xf32, #tpu.memory_space<vmem>>, vector<32x128xf32>,
    %c1 = arith.constant 1 : index
    %c0_61 = arith.constant 0 : index
    %c0_62 = arith.constant 0 : index
    %133 = vector.load %arg16[%c1, %c0_61, %c0_62] : memref<2x8x32xf32, #tpu.memory_space<vmem>>, vector<1x8x32xf32>
    %134 = vector.shape_cast %133 : vector<1x8x32xf32> to vector<8x32xf32>
    %c1_63 = arith.constant 1 : index
    %c0_64 = arith.constant 0 : index
    %c0_65 = arith.constant 0 : index
    %135 = vector.load %arg17[%c1_63, %c0_64, %c0_65] : memref<2x8x32xf32, #tpu.memory_space<vmem>>, vector<1x8x32xf32>
    %136 = vector.shape_cast %135 : vector<1x8x32xf32> to vector<8x32xf32>
    %c0_i32_66 = arith.constant 0 : i32
    %c8_i32_67 = arith.constant 8 : i32
    %137 = arith.muli %c0_i32_66, %c8_i32_67 : i32
    %138 = tpu.assume_multiple %137, 8 : i32
    %139 = arith.index_cast %138 : i32 to index
    %c0_68 = arith.constant 0 : index
    %140 = vector.load %arg14[%139, %c0_68] : memref<32x128xf32, #tpu.memory_space<vmem>>, vector<8x128xf32>
    %cst_69 = arith.constant dense<0.000000e+00> : vector<8x128xf32>
    %141 = tpu.matmul %134, %126, %cst_69 {dimension_numbers = #tpu.dot_dimension_numbers<[1], [0], [0], [1], [0, 0, 1, 1], [], []>, precision = #tpu.contract_precision<fp32>} : vector<8x32xf32>, vector<32x128xf32>, vector<8x128xf32> -> vector<8x128xf32>
    %142 = arith.addf %140, %141 : vector<8x128xf32>
    %143 = vector.extract_strided_slice %142 {offsets = [0, 0], sizes = [8, 96], strides = [1, 1]} : vector<8x128xf32> to vector<8x96xf32>
    %cst_70 = arith.constant 5.000000e-01 : f32
    %144 = vector.broadcast %cst_70 : f32 to vector<8x96xf32>
    %145 = arith.mulf %144, %143 : vector<8x96xf32>
    %146 = math.tanh %145 : vector<8x96xf32>
    %cst_71 = arith.constant 1.000000e+00 : f32
    %147 = vector.broadcast %cst_71 : f32 to vector<8x96xf32>
    %148 = arith.addf %147, %146 : vector<8x96xf32>
    %cst_72 = arith.constant 5.000000e-01 : f32
    %149 = vector.broadcast %cst_72 : f32 to vector<8x96xf32>
    %150 = arith.mulf %149, %148 : vector<8x96xf32>
    %151 = vector.extract_strided_slice %142 {offsets = [0, 96], sizes = [8, 32], strides = [1, 1]} : vector<8x128xf32> to vector<8x32xf32>
    %152 = math.tanh %151 : vector<8x32xf32>
    %153 = vector.extract_strided_slice %150 {offsets = [0, 0], sizes = [8, 32], strides = [1, 1]} : vector<8x96xf32> to vector<8x32xf32>
    %154 = vector.extract_strided_slice %150 {offsets = [0, 32], sizes = [8, 32], strides = [1, 1]} : vector<8x96xf32> to vector<8x32xf32>
    %155 = vector.extract_strided_slice %150 {offsets = [0, 64], sizes = [8, 32], strides = [1, 1]} : vector<8x96xf32> to vector<8x32xf32>
    %156 = arith.mulf %154, %136 : vector<8x32xf32>
    %157 = arith.mulf %153, %152 : vector<8x32xf32>
    %158 = arith.addf %156, %157 : vector<8x32xf32>
    %159 = math.tanh %158 : vector<8x32xf32>
    %160 = arith.mulf %155, %159 : vector<8x32xf32>
    %161 = arith.index_cast %138 : i32 to index
    %c0_73 = arith.constant 0 : index
    %162 = vector.load %arg11[%161, %c0_73] : memref<32x32xf32, #tpu.memory_space<vmem>>, vector<8x32xf32>
    tpu.vector_store %arg11[%161, %c0_73], %160 {strides = array<i32>} : memref<32x32xf32, #tpu.memory_space<vmem>>, vector<8x32xf32>,
    %c1_i32_74 = arith.constant 1 : i32
    %c8_i32_75 = arith.constant 8 : i32
    %163 = arith.muli %c1_i32_74, %c8_i32_75 : i32
    %164 = tpu.assume_multiple %163, 8 : i32
    %165 = arith.index_cast %164 : i32 to index
    %c0_76 = arith.constant 0 : index
    %166 = vector.load %arg14[%165, %c0_76] : memref<32x128xf32, #tpu.memory_space<vmem>>, vector<8x128xf32>
    %cst_77 = arith.constant dense<0.000000e+00> : vector<8x128xf32>
    %167 = tpu.matmul %160, %126, %cst_77 {dimension_numbers = #tpu.dot_dimension_numbers<[1], [0], [0], [1], [0, 0, 1, 1], [], []>, precision = #tpu.contract_precision<fp32>} : vector<8x32xf32>, vector<32x128xf32>, vector<8x128xf32> -> vector<8x128xf32>
    %168 = arith.addf %166, %167 : vector<8x128xf32>
    %169 = vector.extract_strided_slice %168 {offsets = [0, 0], sizes = [8, 96], strides = [1, 1]} : vector<8x128xf32> to vector<8x96xf32>
    %cst_78 = arith.constant 5.000000e-01 : f32
    %170 = vector.broadcast %cst_78 : f32 to vector<8x96xf32>
    %171 = arith.mulf %170, %169 : vector<8x96xf32>
    %172 = math.tanh %171 : vector<8x96xf32>
    %cst_79 = arith.constant 1.000000e+00 : f32
    %173 = vector.broadcast %cst_79 : f32 to vector<8x96xf32>
    %174 = arith.addf %173, %172 : vector<8x96xf32>
    %cst_80 = arith.constant 5.000000e-01 : f32
    %175 = vector.broadcast %cst_80 : f32 to vector<8x96xf32>
    %176 = arith.mulf %175, %174 : vector<8x96xf32>
    %177 = vector.extract_strided_slice %168 {offsets = [0, 96], sizes = [8, 32], strides = [1, 1]} : vector<8x128xf32> to vector<8x32xf32>
    %178 = math.tanh %177 : vector<8x32xf32>
    %179 = vector.extract_strided_slice %176 {offsets = [0, 0], sizes = [8, 32], strides = [1, 1]} : vector<8x96xf32> to vector<8x32xf32>
    %180 = vector.extract_strided_slice %176 {offsets = [0, 32], sizes = [8, 32], strides = [1, 1]} : vector<8x96xf32> to vector<8x32xf32>
    %181 = vector.extract_strided_slice %176 {offsets = [0, 64], sizes = [8, 32], strides = [1, 1]} : vector<8x96xf32> to vector<8x32xf32>
    %182 = arith.mulf %180, %158 : vector<8x32xf32>
    %183 = arith.mulf %179, %178 : vector<8x32xf32>
    %184 = arith.addf %182, %183 : vector<8x32xf32>
    %185 = math.tanh %184 : vector<8x32xf32>
    %186 = arith.mulf %181, %185 : vector<8x32xf32>
    %187 = arith.index_cast %164 : i32 to index
    %c0_81 = arith.constant 0 : index
    %188 = vector.load %arg11[%187, %c0_81] : memref<32x32xf32, #tpu.memory_space<vmem>>, vector<8x32xf32>
    tpu.vector_store %arg11[%187, %c0_81], %186 {strides = array<i32>} : memref<32x32xf32, #tpu.memory_space<vmem>>, vector<8x32xf32>,
    %c2_i32_82 = arith.constant 2 : i32
    %c8_i32_83 = arith.constant 8 : i32
    %189 = arith.muli %c2_i32_82, %c8_i32_83 : i32
    %190 = tpu.assume_multiple %189, 8 : i32
    %191 = arith.index_cast %190 : i32 to index
    %c0_84 = arith.constant 0 : index
    %192 = vector.load %arg14[%191, %c0_84] : memref<32x128xf32, #tpu.memory_space<vmem>>, vector<8x128xf32>
    %cst_85 = arith.constant dense<0.000000e+00> : vector<8x128xf32>
    %193 = tpu.matmul %186, %126, %cst_85 {dimension_numbers = #tpu.dot_dimension_numbers<[1], [0], [0], [1], [0, 0, 1, 1], [], []>, precision = #tpu.contract_precision<fp32>} : vector<8x32xf32>, vector<32x128xf32>, vector<8x128xf32> -> vector<8x128xf32>
    %194 = arith.addf %192, %193 : vector<8x128xf32>
    %195 = vector.extract_strided_slice %194 {offsets = [0, 0], sizes = [8, 96], strides = [1, 1]} : vector<8x128xf32> to vector<8x96xf32>
    %cst_86 = arith.constant 5.000000e-01 : f32
    %196 = vector.broadcast %cst_86 : f32 to vector<8x96xf32>
    %197 = arith.mulf %196, %195 : vector<8x96xf32>
    %198 = math.tanh %197 : vector<8x96xf32>
    %cst_87 = arith.constant 1.000000e+00 : f32
    %199 = vector.broadcast %cst_87 : f32 to vector<8x96xf32>
    %200 = arith.addf %199, %198 : vector<8x96xf32>
    %cst_88 = arith.constant 5.000000e-01 : f32
    %201 = vector.broadcast %cst_88 : f32 to vector<8x96xf32>
    %202 = arith.mulf %201, %200 : vector<8x96xf32>
    %203 = vector.extract_strided_slice %194 {offsets = [0, 96], sizes = [8, 32], strides = [1, 1]} : vector<8x128xf32> to vector<8x32xf32>
    %204 = math.tanh %203 : vector<8x32xf32>
    %205 = vector.extract_strided_slice %202 {offsets = [0, 0], sizes = [8, 32], strides = [1, 1]} : vector<8x96xf32> to vector<8x32xf32>
    %206 = vector.extract_strided_slice %202 {offsets = [0, 32], sizes = [8, 32], strides = [1, 1]} : vector<8x96xf32> to vector<8x32xf32>
    %207 = vector.extract_strided_slice %202 {offsets = [0, 64], sizes = [8, 32], strides = [1, 1]} : vector<8x96xf32> to vector<8x32xf32>
    %208 = arith.mulf %206, %184 : vector<8x32xf32>
    %209 = arith.mulf %205, %204 : vector<8x32xf32>
    %210 = arith.addf %208, %209 : vector<8x32xf32>
    %211 = math.tanh %210 : vector<8x32xf32>
    %212 = arith.mulf %207, %211 : vector<8x32xf32>
    %213 = arith.index_cast %190 : i32 to index
    %c0_89 = arith.constant 0 : index
    %214 = vector.load %arg11[%213, %c0_89] : memref<32x32xf32, #tpu.memory_space<vmem>>, vector<8x32xf32>
    tpu.vector_store %arg11[%213, %c0_89], %212 {strides = array<i32>} : memref<32x32xf32, #tpu.memory_space<vmem>>, vector<8x32xf32>,
    %c3_i32_90 = arith.constant 3 : i32
    %c8_i32_91 = arith.constant 8 : i32
    %215 = arith.muli %c3_i32_90, %c8_i32_91 : i32
    %216 = tpu.assume_multiple %215, 8 : i32
    %217 = arith.index_cast %216 : i32 to index
    %c0_92 = arith.constant 0 : index
    %218 = vector.load %arg14[%217, %c0_92] : memref<32x128xf32, #tpu.memory_space<vmem>>, vector<8x128xf32>
    %cst_93 = arith.constant dense<0.000000e+00> : vector<8x128xf32>
    %219 = tpu.matmul %212, %126, %cst_93 {dimension_numbers = #tpu.dot_dimension_numbers<[1], [0], [0], [1], [0, 0, 1, 1], [], []>, precision = #tpu.contract_precision<fp32>} : vector<8x32xf32>, vector<32x128xf32>, vector<8x128xf32> -> vector<8x128xf32>
    %220 = arith.addf %218, %219 : vector<8x128xf32>
    %221 = vector.extract_strided_slice %220 {offsets = [0, 0], sizes = [8, 96], strides = [1, 1]} : vector<8x128xf32> to vector<8x96xf32>
    %cst_94 = arith.constant 5.000000e-01 : f32
    %222 = vector.broadcast %cst_94 : f32 to vector<8x96xf32>
    %223 = arith.mulf %222, %221 : vector<8x96xf32>
    %224 = math.tanh %223 : vector<8x96xf32>
    %cst_95 = arith.constant 1.000000e+00 : f32
    %225 = vector.broadcast %cst_95 : f32 to vector<8x96xf32>
    %226 = arith.addf %225, %224 : vector<8x96xf32>
    %cst_96 = arith.constant 5.000000e-01 : f32
    %227 = vector.broadcast %cst_96 : f32 to vector<8x96xf32>
    %228 = arith.mulf %227, %226 : vector<8x96xf32>
    %229 = vector.extract_strided_slice %220 {offsets = [0, 96], sizes = [8, 32], strides = [1, 1]} : vector<8x128xf32> to vector<8x32xf32>
    %230 = math.tanh %229 : vector<8x32xf32>
    %231 = vector.extract_strided_slice %228 {offsets = [0, 0], sizes = [8, 32], strides = [1, 1]} : vector<8x96xf32> to vector<8x32xf32>
    %232 = vector.extract_strided_slice %228 {offsets = [0, 32], sizes = [8, 32], strides = [1, 1]} : vector<8x96xf32> to vector<8x32xf32>
    %233 = vector.extract_strided_slice %228 {offsets = [0, 64], sizes = [8, 32], strides = [1, 1]} : vector<8x96xf32> to vector<8x32xf32>
    %234 = arith.mulf %232, %210 : vector<8x32xf32>
    %235 = arith.mulf %231, %230 : vector<8x32xf32>
    %236 = arith.addf %234, %235 : vector<8x32xf32>
    %237 = math.tanh %236 : vector<8x32xf32>
    %238 = arith.mulf %233, %237 : vector<8x32xf32>
    %239 = arith.index_cast %216 : i32 to index
    %c0_97 = arith.constant 0 : index
    %240 = vector.load %arg11[%239, %c0_97] : memref<32x32xf32, #tpu.memory_space<vmem>>, vector<8x32xf32>
    tpu.vector_store %arg11[%239, %c0_97], %238 {strides = array<i32>} : memref<32x32xf32, #tpu.memory_space<vmem>>, vector<8x32xf32>,
    %c4_i32_98 = arith.constant 4 : i32
    %c1_99 = arith.constant 1 : index
    %c0_100 = arith.constant 0 : index
    %c0_101 = arith.constant 0 : index
    %241 = vector.load %arg16[%c1_99, %c0_100, %c0_101] : memref<2x8x32xf32, #tpu.memory_space<vmem>>, vector<1x8x32xf32>
    %242 = vector.shape_cast %241 : vector<1x8x32xf32> to vector<8x32xf32>
    %243 = vector.shape_cast %238 : vector<8x32xf32> to vector<1x8x32xf32>
    tpu.vector_store %arg16[%c1_99, %c0_100, %c0_101], %243 {strides = array<i32>} : memref<2x8x32xf32, #tpu.memory_space<vmem>>, vector<1x8x32xf32>,
    %c1_102 = arith.constant 1 : index
    %c0_103 = arith.constant 0 : index
    %c0_104 = arith.constant 0 : index
    %244 = vector.load %arg17[%c1_102, %c0_103, %c0_104] : memref<2x8x32xf32, #tpu.memory_space<vmem>>, vector<1x8x32xf32>
    %245 = vector.shape_cast %244 : vector<1x8x32xf32> to vector<8x32xf32>
    %246 = vector.shape_cast %236 : vector<8x32xf32> to vector<1x8x32xf32>
    tpu.vector_store %arg17[%c1_102, %c0_103, %c0_104], %246 {strides = array<i32>} : memref<2x8x32xf32, #tpu.memory_space<vmem>>, vector<1x8x32xf32>,
    %c1_i32_105 = arith.constant 1 : i32
    %247 = arith.cmpi eq, %arg1, %c1_i32_105 : i32
    %248 = arith.extui %247 : i1 to i32
    %c0_i32_106 = arith.constant 0 : i32
    %249 = arith.cmpi ne, %248, %c0_i32_106 : i32
    scf.if %249 {
      %c0_107 = arith.constant 0 : index
      %c0_108 = arith.constant 0 : index
      %c0_109 = arith.constant 0 : index
      %250 = vector.load %arg16[%c0_107, %c0_108, %c0_109] : memref<2x8x32xf32, #tpu.memory_space<vmem>>, vector<2x8x32xf32>
      %c0_110 = arith.constant 0 : index
      %c0_111 = arith.constant 0 : index
      %c0_112 = arith.constant 0 : index
      %c0_113 = arith.constant 0 : index
      %251 = vector.load %arg12[%c0_110, %c0_111, %c0_112, %c0_113] : memref<1x2x8x32xf32, #tpu.memory_space<vmem>>, vector<1x2x8x32xf32>
      %252 = vector.shape_cast %251 : vector<1x2x8x32xf32> to vector<2x8x32xf32>
      %253 = vector.shape_cast %250 : vector<2x8x32xf32> to vector<1x2x8x32xf32>
      tpu.vector_store %arg12[%c0_110, %c0_111, %c0_112, %c0_113], %253 {strides = array<i32>} : memref<1x2x8x32xf32, #tpu.memory_space<vmem>>, vector<1x2x8x32xf32>,
      %c0_114 = arith.constant 0 : index
      %c0_115 = arith.constant 0 : index
      %c0_116 = arith.constant 0 : index
      %254 = vector.load %arg17[%c0_114, %c0_115, %c0_116] : memref<2x8x32xf32, #tpu.memory_space<vmem>>, vector<2x8x32xf32>
      %c0_117 = arith.constant 0 : index
      %c0_118 = arith.constant 0 : index
      %c0_119 = arith.constant 0 : index
      %c0_120 = arith.constant 0 : index
      %255 = vector.load %arg13[%c0_117, %c0_118, %c0_119, %c0_120] : memref<1x2x8x32xf32, #tpu.memory_space<vmem>>, vector<1x2x8x32xf32>
      %256 = vector.shape_cast %255 : vector<1x2x8x32xf32> to vector<2x8x32xf32>
      %257 = vector.shape_cast %254 : vector<2x8x32xf32> to vector<1x2x8x32xf32>
      tpu.vector_store %arg13[%c0_117, %c0_118, %c0_119, %c0_120], %257 {strides = array<i32>} : memref<1x2x8x32xf32, #tpu.memory_space<vmem>>, vector<1x2x8x32xf32>,
    } else {
    }
    return
  }
  func.func @transform_0(%arg0: i32, %arg1: i32) -> (i32, i32) {
    %c2_i32 = arith.constant 2 : i32
    %0 = arith.muli %arg0, %c2_i32 : i32
    %1 = arith.addi %0, %arg1 : i32
    %c0_i32 = arith.constant 0 : i32
    %c0_i32_0 = arith.constant 0 : i32
    return %1, %c0_i32 : i32, i32
  }
  func.func @transform_1(%arg0: i32, %arg1: i32) -> (i32, i32) {
    %c0_i32 = arith.constant 0 : i32
    %c0_i32_0 = arith.constant 0 : i32
    %c0_i32_1 = arith.constant 0 : i32
    return %c0_i32, %c0_i32_0 : i32, i32
  }
  func.func @transform_2(%arg0: i32, %arg1: i32) -> (i32, i32) {
    %c0_i32 = arith.constant 0 : i32
    %c0_i32_0 = arith.constant 0 : i32
    %c0_i32_1 = arith.constant 0 : i32
    return %c0_i32, %c0_i32_0 : i32, i32
  }
  func.func @transform_3(%arg0: i32, %arg1: i32) -> (i32, i32) {
    %c0_i32 = arith.constant 0 : i32
    %c0_i32_0 = arith.constant 0 : i32
    %c0_i32_1 = arith.constant 0 : i32
    return %c0_i32, %c0_i32_0 : i32, i32
  }
  func.func @transform_4(%arg0: i32, %arg1: i32) -> (i32, i32) {
    %c0_i32 = arith.constant 0 : i32
    %c0_i32_0 = arith.constant 0 : i32
    %c0_i32_1 = arith.constant 0 : i32
    return %c0_i32, %c0_i32_0 : i32, i32
  }
  func.func @transform_5(%arg0: i32, %arg1: i32) -> (i32, i32) {
    %c0_i32 = arith.constant 0 : i32
    %c0_i32_0 = arith.constant 0 : i32
    %c0_i32_1 = arith.constant 0 : i32
    return %c0_i32, %c0_i32_0 : i32, i32
  }
  func.func @transform_6(%arg0: i32, %arg1: i32) -> (i32, i32) {
    %c0_i32 = arith.constant 0 : i32
    %c0_i32_0 = arith.constant 0 : i32
    %c0_i32_1 = arith.constant 0 : i32
    return %c0_i32, %c0_i32_0 : i32, i32
  }
  func.func @transform_7(%arg0: i32, %arg1: i32) -> (i32, i32, i32, i32) {
    %c0_i32 = arith.constant 0 : i32
    %c0_i32_0 = arith.constant 0 : i32
    %c0_i32_1 = arith.constant 0 : i32
    %c0_i32_2 = arith.constant 0 : i32
    return %arg0, %c0_i32, %c0_i32_0, %c0_i32_1 : i32, i32, i32, i32
  }
  func.func @transform_8(%arg0: i32, %arg1: i32) -> (i32, i32, i32, i32) {
    %c0_i32 = arith.constant 0 : i32
    %c0_i32_0 = arith.constant 0 : i32
    %c0_i32_1 = arith.constant 0 : i32
    %c0_i32_2 = arith.constant 0 : i32
    return %arg0, %c0_i32, %c0_i32_0, %c0_i32_1 : i32, i32, i32, i32
  }
  func.func @transform_9(%arg0: i32, %arg1: i32) -> (i32, i32) {
    %c2_i32 = arith.constant 2 : i32
    %0 = arith.muli %arg0, %c2_i32 : i32
    %1 = arith.addi %0, %arg1 : i32
    %c0_i32 = arith.constant 0 : i32
    %c0_i32_0 = arith.constant 0 : i32
    return %1, %c0_i32 : i32, i32
  }
  func.func @transform_10(%arg0: i32, %arg1: i32) -> (i32, i32, i32, i32) {
    %c0_i32 = arith.constant 0 : i32
    %c0_i32_0 = arith.constant 0 : i32
    %c0_i32_1 = arith.constant 0 : i32
    %c0_i32_2 = arith.constant 0 : i32
    return %arg0, %c0_i32, %c0_i32_0, %c0_i32_1 : i32, i32, i32, i32
  }
  func.func @transform_11(%arg0: i32, %arg1: i32) -> (i32, i32, i32, i32) {
    %c0_i32 = arith.constant 0 : i32
    %c0_i32_0 = arith.constant 0 : i32
    %c0_i32_1 = arith.constant 0 : i32
    %c0_i32_2 = arith.constant 0 : i32
    return %arg0, %c0_i32, %c0_i32_0, %c0_i32_1 : i32, i32, i32, i32
  }
}

</mosaic_0001>

<llo_original>
// kernel: decoder_forward.1
$region0: #{decoder_forward.1}
  #allocation0 [shape = 'u32[]', space=smem, size = 0x4, offset = 0x4, fixed_abs, tag = 'smem constant byte address 0x4 - core index']
  #allocation1 [shape = 'u32[72,128]{1,0:T(1,128)}', space=vmem, size = 0x9000, scoped, tag = 'internal scratch']
  #allocation2 [shape = 'f32[32,128]{1,0:T(8,128)}', space=vmem, size = 0x4000, scoped, tag = 'scratch operand']
  #allocation3 [shape = 'f32[32,32]{1,0:T(8,128)}', space=vmem, size = 0x4000, scoped, tag = 'scratch operand']
  #allocation4 [shape = 'f32[2,8,32]{2,1,0:T(8,128)}', space=vmem, size = 0x2000, scoped, tag = 'scratch operand']
  #allocation5 [shape = 'f32[2,8,32]{2,1,0:T(8,128)}', space=vmem, size = 0x2000, scoped, tag = 'scratch operand']
  %s0 = inlined_call_operand.vmem [shape: f32[64,32], index: 0, kind: input, shape index: {}]
  %s1 = inlined_call_operand.vmem [shape: f32[32,128], index: 1, kind: input, shape index: {}]
  %s2 = inlined_call_operand.vmem [shape: f32[32,128], index: 2, kind: input, shape index: {}]
  %s3 = inlined_call_operand.vmem [shape: f32[1,128], index: 3, kind: input, shape index: {}]
  %s4 = inlined_call_operand.vmem [shape: f32[32,128], index: 4, kind: input, shape index: {}]
  %s5 = inlined_call_operand.vmem [shape: f32[32,128], index: 5, kind: input, shape index: {}]
  %s6 = inlined_call_operand.vmem [shape: f32[1,128], index: 6, kind: input, shape index: {}]
  %s7 = inlined_call_operand.vmem [shape: f32[1,2,8,32], index: 7, kind: input, shape index: {}]
  %s8 = inlined_call_operand.vmem [shape: f32[1,2,8,32], index: 8, kind: input, shape index: {}]
  %s9 = inlined_call_operand.vmem [shape: f32[64,32], index: 9, kind: output, shape index: {0}]
  %s10 = inlined_call_operand.vmem [shape: f32[1,2,8,32], index: 10, kind: output, shape index: {1}]
  %s11 = inlined_call_operand.vmem [shape: f32[1,2,8,32], index: 11, kind: output, shape index: {2}]
  %12 = xla_tuple %s9, %s10, %s11
  %s13 = sld [smem:[#allocation0]]
  $region93: #{decoder_forward.1} parent=0
    _
  %s15 = ssub.s32 1, %s13
  %s16 = scalar_select 0, %s15, %s13
  loop: start=0, step=1, limit=4
  $region2: #{decoder_forward.1} parent=0 // loop_pre_header
    _
  $region3: #{decoder_forward.1} parent=0 // loop_header
    %s18 = sphi 0, %s22
    %p19 = scmp.ge.s32.totalorder %s18, 4
    %s25 = sphi 0, %s37
    %s26 = sphi 0, %s33
    %s27 = sphi 0, %s25
    %s28 = sphi 0, %s26
    %s29 = sphi 0, %s27
    %s30 = sphi 0, %s28
    %s44 = sphi 0, %s46
    %s47 = sphi 0, %s44
    %s48 = sphi 0, %s47
    %s64 = sphi 0, %s48
    %s68 = sphi 0, %s68
    %s70 = sphi 0, %s68
    %s71 = sphi 0, %s70
    %s85 = sphi 0, %s71
    %s89 = sphi 0, %s89
    %s91 = sphi 0, %s89
    %s92 = sphi 0, %s91
    %s106 = sphi 0, %s92
    %s110 = sphi 0, %s110
    %s112 = sphi 0, %s110
    %s113 = sphi 0, %s112
    %s127 = sphi 0, %s113
    %s131 = sphi 0, %s131
    %s133 = sphi 0, %s131
    %s134 = sphi 0, %s133
    %s148 = sphi 0, %s134
    %s152 = sphi 0, %s152
    %s154 = sphi 0, %s152
    %s155 = sphi 0, %s154
    %s169 = sphi 0, %s155
    %s173 = sphi 0, %s173
    %s175 = sphi 0, %s173
    %s176 = sphi 0, %s175
    %s190 = sphi 0, %s176
    %s196 = sphi 0, %s198
    %s199 = sphi 0, %s196
    %s200 = sphi 0, %s199
    %s216 = sphi 0, %s200
    %s222 = sphi 0, %s224
    %s225 = sphi 0, %s222
    %s226 = sphi 0, %s225
    %s242 = sphi 0, %s226
    %s252 = sphi 0, %s254
    %s255 = sphi 0, %s252
    %s256 = sphi 0, %s255
    %s272 = sphi 0, %s256
    %s278 = sphi 0, %s280
    %s281 = sphi 0, %s278
    %s282 = sphi 0, %s281
    %s298 = sphi 0, %s282
    %s304 = sphi 0, %s306
    %s307 = sphi 0, %s304
    %s308 = sphi 0, %s307
    %s324 = sphi 0, %s308
  $region4: #{decoder_forward.1} parent=0 // loop_header_branch
    %21 = sbr.rel (%p19) target = $region8
  $region5: #{decoder_forward.1} parent=0 // loop_body
    %s23 = ssub.s32 %s18, 1
    %s24 = ssub.s32 %s18, 2
    %s31 = sadd.s32 1, %s26
    %p32 = scmp.ge.s32.totalorder %s31, 2
    %s33 = scalar_select %p32, 0, %s31
    %s34 = sadd.s32 1, %s25
    %s35 = scalar_select %p32, %s34, %s25
    %p36 = scmp.ge.s32.totalorder %s35, 1
    %s37 = scalar_select %p36, 0, %s35
    %s38 = smul.u32 %s25, 2
    %s39 = sadd.s32 %s38, %s26
    %s40 = smul.u32 %s37, 2
    %s41 = sadd.s32 %s40, %s33
    %s42 = ssub.s32 %s39, %s41
    %p43 = scmp.eq.s32.totalorder %s42, 0
    %s45 = sadd.s32 %s44, 1
    %s46 = scalar_select %p43, %s44, %s45
    %p49 = pneg %p43
    %p50 = scmp.eq.s32.totalorder %s18, 1
    %p51 = por %p49, %p50
    %p52 = scmp.ne.s32.totalorder %s44, %s47
    %p53 = scmp.eq.s32.totalorder %s18, 0
    %p54 = por %p52, %p53
    %p55 = scmp.ne.s32.totalorder %s44, %s47
    %p56 = scmp.eq.s32.totalorder %s23, 1
    %p57 = por %p55, %p56
    %p58 = scmp.ne.s32.totalorder %s47, %s48
    %p59 = scmp.eq.s32.totalorder %s23, 0
    %p60 = por %p58, %p59
    %p61 = scmp.ne.s32.totalorder %s47, %s48
    %p62 = scmp.eq.s32.totalorder %s24, 1
    %p63 = por %p61, %p62
    %p65 = scmp.ne.s32.totalorder %s48, %s64
    %p66 = scmp.eq.s32.totalorder %s24, 0
    %p67 = por %p65, %p66
    %s69 = sadd.s32 %s68, 1
    %p72 = scmp.eq.s32.totalorder %s18, 1
    %p73 = scmp.ne.s32.totalorder %s68, %s70
    %p74 = scmp.eq.s32.totalorder %s18, 0
    %p75 = por %p73, %p74
    %p76 = scmp.ne.s32.totalorder %s68, %s70
    %p77 = scmp.eq.s32.totalorder %s23, 1
    %p78 = por %p76, %p77
    %p79 = scmp.ne.s32.totalorder %s70, %s71
    %p80 = scmp.eq.s32.totalorder %s23, 0
    %p81 = por %p79, %p80
    %p82 = scmp.ne.s32.totalorder %s70, %s71
    %p83 = scmp.eq.s32.totalorder %s24, 1
    %p84 = por %p82, %p83
    %p86 = scmp.ne.s32.totalorder %s71, %s85
    %p87 = scmp.eq.s32.totalorder %s24, 0
    %p88 = por %p86, %p87
    %s90 = sadd.s32 %s89, 1
    %p93 = scmp.eq.s32.totalorder %s18, 1
    %p94 = scmp.ne.s32.totalorder %s89, %s91
    %p95 = scmp.eq.s32.totalorder %s18, 0
    %p96 = por %p94, %p95
    %p97 = scmp.ne.s32.totalorder %s89, %s91
    %p98 = scmp.eq.s32.totalorder %s23, 1
    %p99 = por %p97, %p98
    %p100 = scmp.ne.s32.totalorder %s91, %s92
    %p101 = scmp.eq.s32.totalorder %s23, 0
    %p102 = por %p100, %p101
    %p103 = scmp.ne.s32.totalorder %s91, %s92
    %p104 = scmp.eq.s32.totalorder %s24, 1
    %p105 = por %p103, %p104
    %p107 = scmp.ne.s32.totalorder %s92, %s106
    %p108 = scmp.eq.s32.totalorder %s24, 0
    %p109 = por %p107, %p108
    %s111 = sadd.s32 %s110, 1
    %p114 = scmp.eq.s32.totalorder %s18, 1
    %p115 = scmp.ne.s32.totalorder %s110, %s112
    %p116 = scmp.eq.s32.totalorder %s18, 0
    %p117 = por %p115, %p116
    %p118 = scmp.ne.s32.totalorder %s110, %s112
    %p119 = scmp.eq.s32.totalorder %s23, 1
    %p120 = por %p118, %p119
    %p121 = scmp.ne.s32.totalorder %s112, %s113
    %p122 = scmp.eq.s32.totalorder %s23, 0
    %p123 = por %p121, %p122
    %p124 = scmp.ne.s32.totalorder %s112, %s113
    %p125 = scmp.eq.s32.totalorder %s24, 1
    %p126 = por %p124, %p125
    %p128 = scmp.ne.s32.totalorder %s113, %s127
    %p129 = scmp.eq.s32.totalorder %s24, 0
    %p130 = por %p128, %p129
    %s132 = sadd.s32 %s131, 1
    %p135 = scmp.eq.s32.totalorder %s18, 1
    %p136 = scmp.ne.s32.totalorder %s131, %s133
    %p137 = scmp.eq.s32.totalorder %s18, 0
    %p138 = por %p136, %p137
    %p139 = scmp.ne.s32.totalorder %s131, %s133
    %p140 = scmp.eq.s32.totalorder %s23, 1
    %p141 = por %p139, %p140
    %p142 = scmp.ne.s32.totalorder %s133, %s134
    %p143 = scmp.eq.s32.totalorder %s23, 0
    %p144 = por %p142, %p143
    %p145 = scmp.ne.s32.totalorder %s133, %s134
    %p146 = scmp.eq.s32.totalorder %s24, 1
    %p147 = por %p145, %p146
    %p149 = scmp.ne.s32.totalorder %s134, %s148
    %p150 = scmp.eq.s32.totalorder %s24, 0
    %p151 = por %p149, %p150
    %s153 = sadd.s32 %s152, 1
    %p156 = scmp.eq.s32.totalorder %s18, 1
    %p157 = scmp.ne.s32.totalorder %s152, %s154
    %p158 = scmp.eq.s32.totalorder %s18, 0
    %p159 = por %p157, %p158
    %p160 = scmp.ne.s32.totalorder %s152, %s154
    %p161 = scmp.eq.s32.totalorder %s23, 1
    %p162 = por %p160, %p161
    %p163 = scmp.ne.s32.totalorder %s154, %s155
    %p164 = scmp.eq.s32.totalorder %s23, 0
    %p165 = por %p163, %p164
    %p166 = scmp.ne.s32.totalorder %s154, %s155
    %p167 = scmp.eq.s32.totalorder %s24, 1
    %p168 = por %p166, %p167
    %p170 = scmp.ne.s32.totalorder %s155, %s169
    %p171 = scmp.eq.s32.totalorder %s24, 0
    %p172 = por %p170, %p171
    %s174 = sadd.s32 %s173, 1
    %p177 = scmp.eq.s32.totalorder %s18, 1
    %p178 = scmp.ne.s32.totalorder %s173, %s175
    %p179 = scmp.eq.s32.totalorder %s18, 0
    %p180 = por %p178, %p179
    %p181 = scmp.ne.s32.totalorder %s173, %s175
    %p182 = scmp.eq.s32.totalorder %s23, 1
    %p183 = por %p181, %p182
    %p184 = scmp.ne.s32.totalorder %s175, %s176
    %p185 = scmp.eq.s32.totalorder %s23, 0
    %p186 = por %p184, %p185
    %p187 = scmp.ne.s32.totalorder %s175, %s176
    %p188 = scmp.eq.s32.totalorder %s24, 1
    %p189 = por %p187, %p188
    %p191 = scmp.ne.s32.totalorder %s176, %s190
    %p192 = scmp.eq.s32.totalorder %s24, 0
    %p193 = por %p191, %p192
    %s194 = ssub.s32 %s25, %s37
    %p195 = scmp.eq.s32.totalorder %s194, 0
    %s197 = sadd.s32 %s196, 1
    %s198 = scalar_select %p195, %s196, %s197
    %p201 = pneg %p195
    %p202 = scmp.eq.s32.totalorder %s18, 1
    %p203 = por %p201, %p202
    %p204 = scmp.ne.s32.totalorder %s196, %s199
    %p205 = scmp.eq.s32.totalorder %s18, 0
    %p206 = por %p204, %p205
    %p207 = scmp.ne.s32.totalorder %s196, %s199
    %p208 = scmp.eq.s32.totalorder %s23, 1
    %p209 = por %p207, %p208
    %p210 = scmp.ne.s32.totalorder %s199, %s200
    %p211 = scmp.eq.s32.totalorder %s23, 0
    %p212 = por %p210, %p211
    %p213 = scmp.ne.s32.totalorder %s199, %s200
    %p214 = scmp.eq.s32.totalorder %s24, 1
    %p215 = por %p213, %p214
    %p217 = scmp.ne.s32.totalorder %s200, %s216
    %p218 = scmp.eq.s32.totalorder %s24, 0
    %p219 = por %p217, %p218
    %s220 = ssub.s32 %s25, %s37
    %p221 = scmp.eq.s32.totalorder %s220, 0
    %s223 = sadd.s32 %s222, 1
    %s224 = scalar_select %p221, %s222, %s223
    %p227 = pneg %p221
    %p228 = scmp.eq.s32.totalorder %s18, 1
    %p229 = por %p227, %p228
    %p230 = scmp.ne.s32.totalorder %s222, %s225
    %p231 = scmp.eq.s32.totalorder %s18, 0
    %p232 = por %p230, %p231
    %p233 = scmp.ne.s32.totalorder %s222, %s225
    %p234 = scmp.eq.s32.totalorder %s23, 1
    %p235 = por %p233, %p234
    %p236 = scmp.ne.s32.totalorder %s225, %s226
    %p237 = scmp.eq.s32.totalorder %s23, 0
    %p238 = por %p236, %p237
    %p239 = scmp.ne.s32.totalorder %s225, %s226
    %p240 = scmp.eq.s32.totalorder %s24, 1
    %p241 = por %p239, %p240
    %p243 = scmp.ne.s32.totalorder %s226, %s242
    %p244 = scmp.eq.s32.totalorder %s24, 0
    %p245 = por %p243, %p244
    %s246 = smul.u32 %s25, 2
    %s247 = sadd.s32 %s246, %s26
    %s248 = smul.u32 %s37, 2
    %s249 = sadd.s32 %s248, %s33
    %s250 = ssub.s32 %s247, %s249
    %p251 = scmp.eq.s32.totalorder %s250, 0
    %s253 = sadd.s32 %s252, 1
    %s254 = scalar_select %p251, %s252, %s253
    %p257 = pneg %p251
    %p258 = scmp.eq.s32.totalorder %s18, 1
    %p259 = por %p257, %p258
    %p260 = scmp.ne.s32.totalorder %s252, %s255
    %p261 = scmp.eq.s32.totalorder %s18, 0
    %p262 = por %p260, %p261
    %p263 = scmp.ne.s32.totalorder %s252, %s255
    %p264 = scmp.eq.s32.totalorder %s23, 1
    %p265 = por %p263, %p264
    %p266 = scmp.ne.s32.totalorder %s255, %s256
    %p267 = scmp.eq.s32.totalorder %s23, 0
    %p268 = por %p266, %p267
    %p269 = scmp.ne.s32.totalorder %s255, %s256
    %p270 = scmp.eq.s32.totalorder %s24, 1
    %p271 = por %p269, %p270
    %p273 = scmp.ne.s32.totalorder %s256, %s272
    %p274 = scmp.eq.s32.totalorder %s24, 0
    %p275 = por %p273, %p274
    %s276 = ssub.s32 %s25, %s37
    %p277 = scmp.eq.s32.totalorder %s276, 0
    %s279 = sadd.s32 %s278, 1
    %s280 = scalar_select %p277, %s278, %s279
    %p283 = pneg %p277
    %p284 = scmp.eq.s32.totalorder %s18, 1
    %p285 = por %p283, %p284
    %p286 = scmp.ne.s32.totalorder %s278, %s281
    %p287 = scmp.eq.s32.totalorder %s18, 0
    %p288 = por %p286, %p287
    %p289 = scmp.ne.s32.totalorder %s278, %s281
    %p290 = scmp.eq.s32.totalorder %s23, 1
    %p291 = por %p289, %p290
    %p292 = scmp.ne.s32.totalorder %s281, %s282
    %p293 = scmp.eq.s32.totalorder %s23, 0
    %p294 = por %p292, %p293
    %p295 = scmp.ne.s32.totalorder %s281, %s282
    %p296 = scmp.eq.s32.totalorder %s24, 1
    %p297 = por %p295, %p296
    %p299 = scmp.ne.s32.totalorder %s282, %s298
    %p300 = scmp.eq.s32.totalorder %s24, 0
    %p301 = por %p299, %p300
    %s302 = ssub.s32 %s25, %s37
    %p303 = scmp.eq.s32.totalorder %s302, 0
    %s305 = sadd.s32 %s304, 1
    %s306 = scalar_select %p303, %s304, %s305
    %p309 = pneg %p303
    %p310 = scmp.eq.s32.totalorder %s18, 1
    %p311 = por %p309, %p310
    %p312 = scmp.ne.s32.totalorder %s304, %s307
    %p313 = scmp.eq.s32.totalorder %s18, 0
    %p314 = por %p312, %p313
    %p315 = scmp.ne.s32.totalorder %s304, %s307
    %p316 = scmp.eq.s32.totalorder %s23, 1
    %p317 = por %p315, %p316
    %p318 = scmp.ne.s32.totalorder %s307, %s308
    %p319 = scmp.eq.s32.totalorder %s23, 0
    %p320 = por %p318, %p319
    %p321 = scmp.ne.s32.totalorder %s307, %s308
    %p322 = scmp.eq.s32.totalorder %s24, 1
    %p323 = por %p321, %p322
    %p325 = scmp.ne.s32.totalorder %s308, %s324
    %p326 = scmp.eq.s32.totalorder %s24, 0
    %p327 = por %p325, %p326
    %p328 = scmp.le.s32.totalorder 1, %s18
    %p329 = scmp.lt.s32.totalorder %s18, 3
    %p330 = pnand %p328, %p329
    %p331 = pneg %p330
    // Predicated region
    $region9: #{decoder_forward.1} parent=5 // pred_check
      _
    $region10: #{decoder_forward.1} parent=5 // pred_check_branch
      %333 = sbr.rel (%p330) target = $region12
    $region11: #{decoder_forward.1} parent=5 // pred_region
      %s334 = ssub.s32 %s18, 1
      // Predicated region
      $region13: #{decoder_forward.1} parent=11 // pred_check
        %p335 = pneg %p81
      $region14: #{decoder_forward.1} parent=11 // pred_check_branch
        %337 = sbr.rel (%p335) target = $region16
      $region15: #{decoder_forward.1} parent=11 // pred_region
        _
      $region16: #{decoder_forward.1} parent=11 // pred_fallthru
        _
      // Predicated region
      $region17: #{decoder_forward.1} parent=11 // pred_check
        %p338 = pneg %p102
      $region18: #{decoder_forward.1} parent=11 // pred_check_branch
        %340 = sbr.rel (%p338) target = $region20
      $region19: #{decoder_forward.1} parent=11 // pred_region
        _
      $region20: #{decoder_forward.1} parent=11 // pred_fallthru
        _
      // Predicated region
      $region21: #{decoder_forward.1} parent=11 // pred_check
        %p341 = pneg %p123
      $region22: #{decoder_forward.1} parent=11 // pred_check_branch
        %343 = sbr.rel (%p341) target = $region24
      $region23: #{decoder_forward.1} parent=11 // pred_region
        _
      $region24: #{decoder_forward.1} parent=11 // pred_fallthru
        _
      // Predicated region
      $region25: #{decoder_forward.1} parent=11 // pred_check
        %p344 = pneg %p144
      $region26: #{decoder_forward.1} parent=11 // pred_check_branch
        %346 = sbr.rel (%p344) target = $region28
      $region27: #{decoder_forward.1} parent=11 // pred_region
        _
      $region28: #{decoder_forward.1} parent=11 // pred_fallthru
        _
      // Predicated region
      $region29: #{decoder_forward.1} parent=11 // pred_check
        %p347 = pneg %p165
      $region30: #{decoder_forward.1} parent=11 // pred_check_branch
        %349 = sbr.rel (%p347) target = $region32
      $region31: #{decoder_forward.1} parent=11 // pred_region
        _
      $region32: #{decoder_forward.1} parent=11 // pred_fallthru
        _
      // Predicated region
      $region33: #{decoder_forward.1} parent=11 // pred_check
        %p350 = pneg %p186
      $region34: #{decoder_forward.1} parent=11 // pred_check_branch
        %352 = sbr.rel (%p350) target = $region36
      $region35: #{decoder_forward.1} parent=11 // pred_region
        _
      $region36: #{decoder_forward.1} parent=11 // pred_fallthru
        _
      // Predicated region
      $region37: #{decoder_forward.1} parent=11 // pred_check
        %p353 = pneg %p212
      $region38: #{decoder_forward.1} parent=11 // pred_check_branch
        %355 = sbr.rel (%p353) target = $region40
      $region39: #{decoder_forward.1} parent=11 // pred_region
        %p356 = scmp.lt.s32.totalorder %s27, 0
        %s357 = scalar_select %p356, %s27, 0
        %s358 = smul.addr %s357, 2
        %s359 = smul.addr %s358, 8
        %s360 = scalar_lea.vmem %s7, %s359
      $region40: #{decoder_forward.1} parent=11 // pred_fallthru
        _
      // Predicated region
      $region41: #{decoder_forward.1} parent=11 // pred_check
        %p361 = pneg %p238
      $region42: #{decoder_forward.1} parent=11 // pred_check_branch
        %363 = sbr.rel (%p361) target = $region44
      $region43: #{decoder_forward.1} parent=11 // pred_region
        %p364 = scmp.lt.s32.totalorder %s27, 0
        %s365 = scalar_select %p364, %s27, 0
        %s366 = smul.addr %s365, 2
        %s367 = smul.addr %s366, 8
        %s368 = scalar_lea.vmem %s8, %s367
      $region44: #{decoder_forward.1} parent=11 // pred_fallthru
        _
    $region12: #{decoder_forward.1} parent=5 // pred_fallthru
      _
    %p369 = scmp.lt.s32.totalorder %s18, 2
    // Predicated region
    $region45: #{decoder_forward.1} parent=5 // pred_check
      %p370 = pneg %p369
    $region46: #{decoder_forward.1} parent=5 // pred_check_branch
      %372 = sbr.rel (%p370) target = $region48
    $region47: #{decoder_forward.1} parent=5 // pred_region
      // Predicated region
      $region49: #{decoder_forward.1} parent=47 // pred_check
        %p373 = pneg %p54
      $region50: #{decoder_forward.1} parent=47 // pred_check_branch
        %375 = sbr.rel (%p373) target = $region52
      $region51: #{decoder_forward.1} parent=47 // pred_region
        %s376 = smul.u32 %s25, 2
        %s377 = sadd.s32 %s376, %s26
        %s378 = smul.u32 4, %s377
        %p379 = scmp.lt.s32.totalorder %s378, 7
        %s380 = scalar_select %p379, %s378, 7
        %s381 = smul.addr %s380, 8
        %s382 = scalar_lea.vmem %s0, %s381
        %s383 = smul.u32 %s25, 2
        %s384 = sadd.s32 %s383, %s26
        %s385 = smul.u32 4, %s384
      $region52: #{decoder_forward.1} parent=47 // pred_fallthru
        _
    $region48: #{decoder_forward.1} parent=5 // pred_fallthru
      _
    %p386 = scmp.le.s32.totalorder 1, %s18
    %p387 = scmp.lt.s32.totalorder %s18, 3
    %p388 = pnand %p386, %p387
    %p389 = pneg %p388
    // Predicated region
    $region53: #{decoder_forward.1} parent=5 // pred_check
      _
    $region54: #{decoder_forward.1} parent=5 // pred_check_branch
      %391 = sbr.rel (%p388) target = $region56
    $region55: #{decoder_forward.1} parent=5 // pred_region
      %s392 = ssub.s32 %s18, 1
      %s393 = smul.u32 %s27, 2
      %s394 = sadd.s32 %s393, %s28
      %s395 = smul.u32 4, %s394
      %p396 = scmp.lt.s32.totalorder %s395, 7
      %s397 = scalar_select %p396, %s395, 7
      %s398 = smul.addr %s397, 8
      %s399 = scalar_lea.vmem %s0, %s398
      %p400 = pneg %p60
      %p401 = pneg %p57
      %p402 = pneg %p81
      %p403 = pneg %p78
      %p404 = pneg %p102
      %p405 = pneg %p99
      %p406 = pneg %p123
      %p407 = pneg %p120
      %p408 = pneg %p144
      %p409 = pneg %p141
      %p410 = pneg %p165
      %p411 = pneg %p162
      %p412 = pneg %p186
      %p413 = pneg %p183
      %p414 = scmp.lt.s32.totalorder %s27, 0
      %s415 = scalar_select %p414, %s27, 0
      %s416 = smul.addr %s415, 2
      %s417 = smul.addr %s416, 8
      %s418 = scalar_lea.vmem %s7, %s417
      %p419 = pneg %p212
      %p420 = pneg %p209
      %p421 = scmp.lt.s32.totalorder %s27, 0
      %s422 = scalar_select %p421, %s27, 0
      %s423 = smul.addr %s422, 2
      %s424 = smul.addr %s423, 8
      %s425 = scalar_lea.vmem %s8, %s424
      %p426 = pneg %p238
      %p427 = pneg %p235
      %p428 = pneg %p268
      %p429 = pneg %p265
      %s430 = smul.u32 %s27, 2
      %s431 = sadd.s32 %s430, %s28
      %s432 = smul.u32 4, %s431
      %p433 = scmp.lt.s32.totalorder %s432, 7
      %s434 = scalar_select %p433, %s432, 7
      %s435 = smul.addr %s434, 8
      %s436 = scalar_lea.vmem %s9, %s435
      %p437 = pneg %p294
      %p438 = pneg %p291
      %p439 = scmp.lt.s32.totalorder %s27, 0
      %s440 = scalar_select %p439, %s27, 0
      %s441 = smul.addr %s440, 2
      %s442 = smul.addr %s441, 8
      %s443 = scalar_lea.vmem %s10, %s442
      %p444 = pneg %p320
      %p445 = pneg %p317
      %p446 = scmp.lt.s32.totalorder %s27, 0
      %s447 = scalar_select %p446, %s27, 0
      %s448 = smul.addr %s447, 2
      %s449 = smul.addr %s448, 8
      %s450 = scalar_lea.vmem %s11, %s449
      %s451 = smul.u32 %s27, 2
      %s452 = sadd.s32 %s451, %s28
      %s453 = smul.u32 4, %s452
      %p454 = scmp.lt.s32.totalorder %s453, 7
      %s455 = scalar_select %p454, %s453, 7
      %s456 = smul.addr %s455, 8
      %s457 = scalar_lea.vmem %s0, %s456
      %s458 = smul.u32 %s27, 2
      %s459 = sadd.s32 %s458, %s28
      %s460 = smul.u32 4, %s459
      %p461 = scmp.lt.s32.totalorder %s27, 0
      %s462 = scalar_select %p461, %s27, 0
      %s463 = smul.addr %s462, 2
      %s464 = smul.addr %s463, 8
      %s465 = scalar_lea.vmem %s7, %s464
      %p466 = scmp.lt.s32.totalorder %s27, 0
      %s467 = scalar_select %p466, %s27, 0
      %s468 = smul.addr %s467, 2
      %s469 = smul.addr %s468, 8
      %s470 = scalar_lea.vmem %s8, %s469
      %s471 = smul.u32 %s27, 2
      %s472 = sadd.s32 %s471, %s28
      %s473 = smul.u32 4, %s472
      %p474 = scmp.lt.s32.totalorder %s473, 7
      %s475 = scalar_select %p474, %s473, 7
      %s476 = smul.addr %s475, 8
      %s477 = scalar_lea.vmem %s9, %s476
      %s478 = smul.u32 %s27, 2
      %s479 = sadd.s32 %s478, %s28
      %s480 = smul.u32 4, %s479
      %p481 = scmp.lt.s32.totalorder %s27, 0
      %s482 = scalar_select %p481, %s27, 0
      %s483 = smul.addr %s482, 2
      %s484 = smul.addr %s483, 8
      %s485 = scalar_lea.vmem %s10, %s484
      %p486 = scmp.lt.s32.totalorder %s27, 0
      %s487 = scalar_select %p486, %s27, 0
      %s488 = smul.addr %s487, 2
      %s489 = smul.addr %s488, 8
      %s490 = scalar_lea.vmem %s11, %s489
      %p491 = scmp.eq.s32.totalorder %s28, 0
      // Predicated region
      $region57: #{decoder_forward.1} parent=55 // pred_check
        %p492 = pneg %p491
      $region58: #{decoder_forward.1} parent=55 // pred_check_branch
        %494 = sbr.rel (%p492) target = $region60
      $region59: #{decoder_forward.1} parent=55 // pred_region
        %v495 = vld [vmem:[%s465] sm:$0xff]
        %v496 = vld [vmem:[%s465 + $0x8] sm:$0xff]
        %vm497 = vcmask 261120
        %498 = vst.msk [vmem:[#allocation4] sm:$0xff] %vm497, %v495
        %499 = vst.msk [vmem:[#allocation4 + $0x8] sm:$0xff] %vm497, %v496
        %v500 = vld [vmem:[%s470] sm:$0xff]
        %v501 = vld [vmem:[%s470 + $0x8] sm:$0xff]
        %502 = vst.msk [vmem:[#allocation5] sm:$0xff] %vm497, %v500
        %503 = vst.msk [vmem:[#allocation5 + $0x8] sm:$0xff] %vm497, %v501
      $region60: #{decoder_forward.1} parent=55 // pred_fallthru
        _
      %v504 = vld [vmem:[%s1] sm:$0xff]
      %v505 = vld [vmem:[%s1 + $0x8] sm:$0xff]
      %v506 = vld [vmem:[%s1 + $0x10] sm:$0xff]
      %v507 = vld [vmem:[%s1 + $0x18] sm:$0xff]
      %v508 = vld [vmem:[%s2] sm:$0xff]
      %v509 = vld [vmem:[%s2 + $0x8] sm:$0xff]
      %v510 = vld [vmem:[%s2 + $0x10] sm:$0xff]
      %v511 = vld [vmem:[%s2 + $0x18] sm:$0xff]
      %v512 = vld [vmem:[%s3] sm:$0x1]
      %v513 = vld [vmem:[%s457] sm:$0xff]
      %v514 = vld [vmem:[%s457 + $0x8] sm:$0xff]
      %v515 = vld [vmem:[%s457 + $0x10] sm:$0xff]
      %v516 = vld [vmem:[%s457 + $0x18] sm:$0xff]
      %v518 = vperm.slane %v512, 0
      %vm520 = vcmask 261120
      %v522 = vsel %vm520, %v513, 0
      %v525 = vsel %vm520, %v514, 0
      %v528 = vsel %vm520, %v515, 0
      %v531 = vsel %vm520, %v516, 0
      %533 = vmatpush.msra.mxu0 0.0
      %534 = vmatpush.msra.mxu0 0.0
      %535 = vmatpush.msra.mxu0 0.0
      %536 = vmatpush.msra.mxu0 0.0
      %537 = vmatpush.msra.mxu0 0.0
      %538 = vmatpush.msra.mxu0 0.0
      %539 = vmatpush.msra.mxu0 0.0
      %540 = vmatpush.msra.mxu0 0.0
      %541 = vmatpush.msra.mxu0 0.0
      %542 = vmatpush.msra.mxu0 0.0
      %543 = vmatpush.msra.mxu0 0.0
      %544 = vmatpush.msra.mxu0 0.0
      %v545 = vand.u32 %v507, 4294901760
      %546 = vmatpush.msra.mxu0 %v545
      %v547 = vand.u32 %v506, 4294901760
      %548 = vmatpush.msra.mxu0 %v547
      %v549 = vand.u32 %v505, 4294901760
      %550 = vmatpush.msra.mxu0 %v549
      %v551 = vand.u32 %v504, 4294901760
      %552 = vmatpush.msra.mxu0 %v551
      %v553 = vand.u32 %v522, 4294901760
      %v554 = vsub.f32 %v522, %v553
      %v555 = vand.u32 %v554, 4294901760
      %v556 = vsub.f32 %v554, %v555
      %v557 = vand.u32 %v556, 4294901760
      %558 = vmatmul.f32.gmra.mxu0 %v557
      %v559 = vpop.f32.mrf.mxu0
      %v560 = vadd.f32 %v518, %v559
      %v561 = vand.u32 %v525, 4294901760
      %v562 = vsub.f32 %v525, %v561
      %v563 = vand.u32 %v562, 4294901760
      %v564 = vsub.f32 %v562, %v563
      %v565 = vand.u32 %v564, 4294901760
      %566 = vmatmul.f32.gmra.mxu0 %v565
      %v567 = vpop.f32.mrf.mxu0
      %v568 = vadd.f32 %v518, %v567
      %v569 = vand.u32 %v528, 4294901760
      %v570 = vsub.f32 %v528, %v569
      %v571 = vand.u32 %v570, 4294901760
      %v572 = vsub.f32 %v570, %v571
      %v573 = vand.u32 %v572, 4294901760
      %574 = vmatmul.f32.gmra.mxu0 %v573
      %v575 = vpop.f32.mrf.mxu0
      %v576 = vadd.f32 %v518, %v575
      %v577 = vand.u32 %v531, 4294901760
      %v578 = vsub.f32 %v531, %v577
      %v579 = vand.u32 %v578, 4294901760
      %v580 = vsub.f32 %v578, %v579
      %v581 = vand.u32 %v580, 4294901760
      %582 = vmatmul.f32.gmra.mxu0 %v581
      %v583 = vpop.f32.mrf.mxu0
      %v584 = vadd.f32 %v518, %v583
      %585 = vdwg.mxu0
      %586 = vmatpush.msra.mxu0 0.0
      %587 = vmatpush.msra.mxu0 0.0
      %588 = vmatpush.msra.mxu0 0.0
      %589 = vmatpush.msra.mxu0 0.0
      %590 = vmatpush.msra.mxu0 0.0
      %591 = vmatpush.msra.mxu0 0.0
      %592 = vmatpush.msra.mxu0 0.0
      %593 = vmatpush.msra.mxu0 0.0
      %594 = vmatpush.msra.mxu0 0.0
      %595 = vmatpush.msra.mxu0 0.0
      %596 = vmatpush.msra.mxu0 0.0
      %597 = vmatpush.msra.mxu0 0.0
      %v598 = vand.u32 %v507, 4294901760
      %v599 = vsub.f32 %v507, %v598
      %v600 = vand.u32 %v599, 4294901760
      %v601 = vsub.f32 %v599, %v600
      %v602 = vand.u32 %v601, 4294901760
      %603 = vmatpush.msra.mxu0 %v602
      %v604 = vand.u32 %v506, 4294901760
      %v605 = vsub.f32 %v506, %v604
      %v606 = vand.u32 %v605, 4294901760
      %v607 = vsub.f32 %v605, %v606
      %v608 = vand.u32 %v607, 4294901760
      %609 = vmatpush.msra.mxu0 %v608
      %v610 = vand.u32 %v505, 4294901760
      %v611 = vsub.f32 %v505, %v610
      %v612 = vand.u32 %v611, 4294901760
      %v613 = vsub.f32 %v611, %v612
      %v614 = vand.u32 %v613, 4294901760
      %615 = vmatpush.msra.mxu0 %v614
      %v616 = vand.u32 %v504, 4294901760
      %v617 = vsub.f32 %v504, %v616
      %v618 = vand.u32 %v617, 4294901760
      %v619 = vsub.f32 %v617, %v618
      %v620 = vand.u32 %v619, 4294901760
      %621 = vmatpush.msra.mxu0 %v620
      %v622 = vand.u32 %v522, 4294901760
      %623 = vmatmul.f32.gmra.mxu0 %v622
      %v624 = vpop.f32.mrf.mxu0
      %v625 = vadd.f32 %v560, %v624
      %v626 = vand.u32 %v525, 4294901760
      %627 = vmatmul.f32.gmra.mxu0 %v626
      %v628 = vpop.f32.mrf.mxu0
      %v629 = vadd.f32 %v568, %v628
      %v630 = vand.u32 %v528, 4294901760
      %631 = vmatmul.f32.gmra.mxu0 %v630
      %v632 = vpop.f32.mrf.mxu0
      %v633 = vadd.f32 %v576, %v632
      %v634 = vand.u32 %v531, 4294901760
      %635 = vmatmul.f32.gmra.mxu0 %v634
      %v636 = vpop.f32.mrf.mxu0
      %v637 = vadd.f32 %v584, %v636
      %638 = vdwg.mxu0
      %639 = vmatpush.msra.mxu0 0.0
      %640 = vmatpush.msra.mxu0 0.0
      %641 = vmatpush.msra.mxu0 0.0
      %642 = vmatpush.msra.mxu0 0.0
      %643 = vmatpush.msra.mxu0 0.0
      %644 = vmatpush.msra.mxu0 0.0
      %645 = vmatpush.msra.mxu0 0.0
      %646 = vmatpush.msra.mxu0 0.0
      %647 = vmatpush.msra.mxu0 0.0
      %648 = vmatpush.msra.mxu0 0.0
      %649 = vmatpush.msra.mxu0 0.0
      %650 = vmatpush.msra.mxu0 0.0
      %v651 = vand.u32 %v507, 4294901760
      %v652 = vsub.f32 %v507, %v651
      %653 = vmatpush.msra.mxu0 %v652
      %v654 = vand.u32 %v506, 4294901760
      %v655 = vsub.f32 %v506, %v654
      %656 = vmatpush.msra.mxu0 %v655
      %v657 = vand.u32 %v505, 4294901760
      %v658 = vsub.f32 %v505, %v657
      %659 = vmatpush.msra.mxu0 %v658
      %v660 = vand.u32 %v504, 4294901760
      %v661 = vsub.f32 %v504, %v660
      %662 = vmatpush.msra.mxu0 %v661
      %v663 = vand.u32 %v522, 4294901760
      %v664 = vsub.f32 %v522, %v663
      %665 = vmatmul.f32.gmra.mxu0 %v664
      %v666 = vpop.f32.mrf.mxu0
      %v667 = vadd.f32 %v625, %v666
      %v668 = vand.u32 %v525, 4294901760
      %v669 = vsub.f32 %v525, %v668
      %670 = vmatmul.f32.gmra.mxu0 %v669
      %v671 = vpop.f32.mrf.mxu0
      %v672 = vadd.f32 %v629, %v671
      %v673 = vand.u32 %v528, 4294901760
      %v674 = vsub.f32 %v528, %v673
      %675 = vmatmul.f32.gmra.mxu0 %v674
      %v676 = vpop.f32.mrf.mxu0
      %v677 = vadd.f32 %v633, %v676
      %v678 = vand.u32 %v531, 4294901760
      %v679 = vsub.f32 %v531, %v678
      %680 = vmatmul.f32.gmra.mxu0 %v679
      %v681 = vpop.f32.mrf.mxu0
      %v682 = vadd.f32 %v637, %v681
      %683 = vdwg.mxu0
      %684 = vmatpush.msra.mxu0 0.0
      %685 = vmatpush.msra.mxu0 0.0
      %686 = vmatpush.msra.mxu0 0.0
      %687 = vmatpush.msra.mxu0 0.0
      %688 = vmatpush.msra.mxu0 0.0
      %689 = vmatpush.msra.mxu0 0.0
      %690 = vmatpush.msra.mxu0 0.0
      %691 = vmatpush.msra.mxu0 0.0
      %692 = vmatpush.msra.mxu0 0.0
      %693 = vmatpush.msra.mxu0 0.0
      %694 = vmatpush.msra.mxu0 0.0
      %695 = vmatpush.msra.mxu0 0.0
      %v696 = vand.u32 %v507, 4294901760
      %697 = vmatpush.msra.mxu0 %v696
      %v698 = vand.u32 %v506, 4294901760
      %699 = vmatpush.msra.mxu0 %v698
      %v700 = vand.u32 %v505, 4294901760
      %701 = vmatpush.msra.mxu0 %v700
      %v702 = vand.u32 %v504, 4294901760
      %703 = vmatpush.msra.mxu0 %v702
      %v704 = vand.u32 %v522, 4294901760
      %v705 = vsub.f32 %v522, %v704
      %v706 = vand.u32 %v705, 4294901760
      %707 = vmatmul.f32.gmra.mxu0 %v706
      %v708 = vpop.f32.mrf.mxu0
      %v709 = vadd.f32 %v667, %v708
      %v710 = vand.u32 %v525, 4294901760
      %v711 = vsub.f32 %v525, %v710
      %v712 = vand.u32 %v711, 4294901760
      %713 = vmatmul.f32.gmra.mxu0 %v712
      %v714 = vpop.f32.mrf.mxu0
      %v715 = vadd.f32 %v672, %v714
      %v716 = vand.u32 %v528, 4294901760
      %v717 = vsub.f32 %v528, %v716
      %v718 = vand.u32 %v717, 4294901760
      %719 = vmatmul.f32.gmra.mxu0 %v718
      %v720 = vpop.f32.mrf.mxu0
      %v721 = vadd.f32 %v677, %v720
      %v722 = vand.u32 %v531, 4294901760
      %v723 = vsub.f32 %v531, %v722
      %v724 = vand.u32 %v723, 4294901760
      %725 = vmatmul.f32.gmra.mxu0 %v724
      %v726 = vpop.f32.mrf.mxu0
      %v727 = vadd.f32 %v682, %v726
      %728 = vdwg.mxu0
      %729 = vmatpush.msra.mxu0 0.0
      %730 = vmatpush.msra.mxu0 0.0
      %731 = vmatpush.msra.mxu0 0.0
      %732 = vmatpush.msra.mxu0 0.0
      %733 = vmatpush.msra.mxu0 0.0
      %734 = vmatpush.msra.mxu0 0.0
      %735 = vmatpush.msra.mxu0 0.0
      %736 = vmatpush.msra.mxu0 0.0
      %737 = vmatpush.msra.mxu0 0.0
      %738 = vmatpush.msra.mxu0 0.0
      %739 = vmatpush.msra.mxu0 0.0
      %740 = vmatpush.msra.mxu0 0.0
      %v741 = vand.u32 %v507, 4294901760
      %v742 = vsub.f32 %v507, %v741
      %v743 = vand.u32 %v742, 4294901760
      %744 = vmatpush.msra.mxu0 %v743
      %v745 = vand.u32 %v506, 4294901760
      %v746 = vsub.f32 %v506, %v745
      %v747 = vand.u32 %v746, 4294901760
      %748 = vmatpush.msra.mxu0 %v747
      %v749 = vand.u32 %v505, 4294901760
      %v750 = vsub.f32 %v505, %v749
      %v751 = vand.u32 %v750, 4294901760
      %752 = vmatpush.msra.mxu0 %v751
      %v753 = vand.u32 %v504, 4294901760
      %v754 = vsub.f32 %v504, %v753
      %v755 = vand.u32 %v754, 4294901760
      %756 = vmatpush.msra.mxu0 %v755
      %v757 = vand.u32 %v522, 4294901760
      %758 = vmatmul.f32.gmra.mxu0 %v757
      %v759 = vpop.f32.mrf.mxu0
      %v760 = vadd.f32 %v709, %v759
      %v761 = vand.u32 %v525, 4294901760
      %762 = vmatmul.f32.gmra.mxu0 %v761
      %v763 = vpop.f32.mrf.mxu0
      %v764 = vadd.f32 %v715, %v763
      %v765 = vand.u32 %v528, 4294901760
      %766 = vmatmul.f32.gmra.mxu0 %v765
      %v767 = vpop.f32.mrf.mxu0
      %v768 = vadd.f32 %v721, %v767
      %v769 = vand.u32 %v531, 4294901760
      %770 = vmatmul.f32.gmra.mxu0 %v769
      %v771 = vpop.f32.mrf.mxu0
      %v772 = vadd.f32 %v727, %v771
      %773 = vdwg.mxu0
      %774 = vmatpush.msra.mxu0 0.0
      %775 = vmatpush.msra.mxu0 0.0
      %776 = vmatpush.msra.mxu0 0.0
      %777 = vmatpush.msra.mxu0 0.0
      %778 = vmatpush.msra.mxu0 0.0
      %779 = vmatpush.msra.mxu0 0.0
      %780 = vmatpush.msra.mxu0 0.0
      %781 = vmatpush.msra.mxu0 0.0
      %782 = vmatpush.msra.mxu0 0.0
      %783 = vmatpush.msra.mxu0 0.0
      %784 = vmatpush.msra.mxu0 0.0
      %785 = vmatpush.msra.mxu0 0.0
      %v786 = vand.u32 %v507, 4294901760
      %787 = vmatpush.msra.mxu0 %v786
      %v788 = vand.u32 %v506, 4294901760
      %789 = vmatpush.msra.mxu0 %v788
      %v790 = vand.u32 %v505, 4294901760
      %791 = vmatpush.msra.mxu0 %v790
      %v792 = vand.u32 %v504, 4294901760
      %793 = vmatpush.msra.mxu0 %v792
      %v794 = vand.u32 %v522, 4294901760
      %795 = vmatmul.f32.gmra.mxu0 %v794
      %v796 = vpop.f32.mrf.mxu0
      %v797 = vadd.f32 %v760, %v796
      %v798 = vand.u32 %v525, 4294901760
      %799 = vmatmul.f32.gmra.mxu0 %v798
      %v800 = vpop.f32.mrf.mxu0
      %v801 = vadd.f32 %v764, %v800
      %v802 = vand.u32 %v528, 4294901760
      %803 = vmatmul.f32.gmra.mxu0 %v802
      %v804 = vpop.f32.mrf.mxu0
      %v805 = vadd.f32 %v768, %v804
      %v806 = vand.u32 %v531, 4294901760
      %807 = vmatmul.f32.gmra.mxu0 %v806
      %v808 = vpop.f32.mrf.mxu0
      %v809 = vadd.f32 %v772, %v808
      %810 = vdwg.mxu0
      %811 = vst [vmem:[#allocation2] sm:$0xff] %v797
      %812 = vst [vmem:[#allocation2 + $0x8] sm:$0xff] %v801
      %813 = vst [vmem:[#allocation2 + $0x10] sm:$0xff] %v805
      %814 = vst [vmem:[#allocation2 + $0x18] sm:$0xff] %v809
      %v815 = vld [vmem:[#allocation4] sm:$0xff]
      %v816 = vld [vmem:[#allocation5] sm:$0xff]
      %v817 = vld [vmem:[#allocation2] sm:$0xff]
      %v819 = vsel %vm520, %v815, 0
      %821 = vmatpush.msra.mxu0 0.0
      %822 = vmatpush.msra.mxu0 0.0
      %823 = vmatpush.msra.mxu0 0.0
      %824 = vmatpush.msra.mxu0 0.0
      %825 = vmatpush.msra.mxu0 0.0
      %826 = vmatpush.msra.mxu0 0.0
      %827 = vmatpush.msra.mxu0 0.0
      %828 = vmatpush.msra.mxu0 0.0
      %829 = vmatpush.msra.mxu0 0.0
      %830 = vmatpush.msra.mxu0 0.0
      %831 = vmatpush.msra.mxu0 0.0
      %832 = vmatpush.msra.mxu0 0.0
      %v833 = vand.u32 %v511, 4294901760
      %834 = vmatpush.msra.mxu0 %v833
      %v835 = vand.u32 %v510, 4294901760
      %836 = vmatpush.msra.mxu0 %v835
      %v837 = vand.u32 %v509, 4294901760
      %838 = vmatpush.msra.mxu0 %v837
      %v839 = vand.u32 %v508, 4294901760
      %840 = vmatpush.msra.mxu0 %v839
      %v841 = vand.u32 %v819, 4294901760
      %v842 = vsub.f32 %v819, %v841
      %v843 = vand.u32 %v842, 4294901760
      %v844 = vsub.f32 %v842, %v843
      %v845 = vand.u32 %v844, 4294901760
      %846 = vmatmul.f32.gmra.mxu0 %v845
      %v847 = vpop.f32.mrf.mxu0
      %v848 = vadd.f32 0.0, %v847
      %849 = vdwg.mxu0
      %850 = vmatpush.msra.mxu0 0.0
      %851 = vmatpush.msra.mxu0 0.0
      %852 = vmatpush.msra.mxu0 0.0
      %853 = vmatpush.msra.mxu0 0.0
      %854 = vmatpush.msra.mxu0 0.0
      %855 = vmatpush.msra.mxu0 0.0
      %856 = vmatpush.msra.mxu0 0.0
      %857 = vmatpush.msra.mxu0 0.0
      %858 = vmatpush.msra.mxu0 0.0
      %859 = vmatpush.msra.mxu0 0.0
      %860 = vmatpush.msra.mxu0 0.0
      %861 = vmatpush.msra.mxu0 0.0
      %v862 = vand.u32 %v511, 4294901760
      %v863 = vsub.f32 %v511, %v862
      %v864 = vand.u32 %v863, 4294901760
      %v865 = vsub.f32 %v863, %v864
      %v866 = vand.u32 %v865, 4294901760
      %867 = vmatpush.msra.mxu0 %v866
      %v868 = vand.u32 %v510, 4294901760
      %v869 = vsub.f32 %v510, %v868
      %v870 = vand.u32 %v869, 4294901760
      %v871 = vsub.f32 %v869, %v870
      %v872 = vand.u32 %v871, 4294901760
      %873 = vmatpush.msra.mxu0 %v872
      %v874 = vand.u32 %v509, 4294901760
      %v875 = vsub.f32 %v509, %v874
      %v876 = vand.u32 %v875, 4294901760
      %v877 = vsub.f32 %v875, %v876
      %v878 = vand.u32 %v877, 4294901760
      %879 = vmatpush.msra.mxu0 %v878
      %v880 = vand.u32 %v508, 4294901760
      %v881 = vsub.f32 %v508, %v880
      %v882 = vand.u32 %v881, 4294901760
      %v883 = vsub.f32 %v881, %v882
      %v884 = vand.u32 %v883, 4294901760
      %885 = vmatpush.msra.mxu0 %v884
      %v886 = vand.u32 %v819, 4294901760
      %887 = vmatmul.f32.gmra.mxu0 %v886
      %v888 = vpop.f32.mrf.mxu0
      %v889 = vadd.f32 %v848, %v888
      %890 = vdwg.mxu0
      %891 = vmatpush.msra.mxu0 0.0
      %892 = vmatpush.msra.mxu0 0.0
      %893 = vmatpush.msra.mxu0 0.0
      %894 = vmatpush.msra.mxu0 0.0
      %895 = vmatpush.msra.mxu0 0.0
      %896 = vmatpush.msra.mxu0 0.0
      %897 = vmatpush.msra.mxu0 0.0
      %898 = vmatpush.msra.mxu0 0.0
      %899 = vmatpush.msra.mxu0 0.0
      %900 = vmatpush.msra.mxu0 0.0
      %901 = vmatpush.msra.mxu0 0.0
      %902 = vmatpush.msra.mxu0 0.0
      %v903 = vand.u32 %v511, 4294901760
      %v904 = vsub.f32 %v511, %v903
      %905 = vmatpush.msra.mxu0 %v904
      %v906 = vand.u32 %v510, 4294901760
      %v907 = vsub.f32 %v510, %v906
      %908 = vmatpush.msra.mxu0 %v907
      %v909 = vand.u32 %v509, 4294901760
      %v910 = vsub.f32 %v509, %v909
      %911 = vmatpush.msra.mxu0 %v910
      %v912 = vand.u32 %v508, 4294901760
      %v913 = vsub.f32 %v508, %v912
      %914 = vmatpush.msra.mxu0 %v913
      %v915 = vand.u32 %v819, 4294901760
      %v916 = vsub.f32 %v819, %v915
      %917 = vmatmul.f32.gmra.mxu0 %v916
      %v918 = vpop.f32.mrf.mxu0
      %v919 = vadd.f32 %v889, %v918
      %920 = vdwg.mxu0
      %921 = vmatpush.msra.mxu0 0.0
      %922 = vmatpush.msra.mxu0 0.0
      %923 = vmatpush.msra.mxu0 0.0
      %924 = vmatpush.msra.mxu0 0.0
      %925 = vmatpush.msra.mxu0 0.0
      %926 = vmatpush.msra.mxu0 0.0
      %927 = vmatpush.msra.mxu0 0.0
      %928 = vmatpush.msra.mxu0 0.0
      %929 = vmatpush.msra.mxu0 0.0
      %930 = vmatpush.msra.mxu0 0.0
      %931 = vmatpush.msra.mxu0 0.0
      %932 = vmatpush.msra.mxu0 0.0
      %v933 = vand.u32 %v511, 4294901760
      %934 = vmatpush.msra.mxu0 %v933
      %v935 = vand.u32 %v510, 4294901760
      %936 = vmatpush.msra.mxu0 %v935
      %v937 = vand.u32 %v509, 4294901760
      %938 = vmatpush.msra.mxu0 %v937
      %v939 = vand.u32 %v508, 4294901760
      %940 = vmatpush.msra.mxu0 %v939
      %v941 = vand.u32 %v819, 4294901760
      %v942 = vsub.f32 %v819, %v941
      %v943 = vand.u32 %v942, 4294901760
      %944 = vmatmul.f32.gmra.mxu0 %v943
      %v945 = vpop.f32.mrf.mxu0
      %v946 = vadd.f32 %v919, %v945
      %947 = vdwg.mxu0
      %948 = vmatpush.msra.mxu0 0.0
      %949 = vmatpush.msra.mxu0 0.0
      %950 = vmatpush.msra.mxu0 0.0
      %951 = vmatpush.msra.mxu0 0.0
      %952 = vmatpush.msra.mxu0 0.0
      %953 = vmatpush.msra.mxu0 0.0
      %954 = vmatpush.msra.mxu0 0.0
      %955 = vmatpush.msra.mxu0 0.0
      %956 = vmatpush.msra.mxu0 0.0
      %957 = vmatpush.msra.mxu0 0.0
      %958 = vmatpush.msra.mxu0 0.0
      %959 = vmatpush.msra.mxu0 0.0
      %v960 = vand.u32 %v511, 4294901760
      %v961 = vsub.f32 %v511, %v960
      %v962 = vand.u32 %v961, 4294901760
      %963 = vmatpush.msra.mxu0 %v962
      %v964 = vand.u32 %v510, 4294901760
      %v965 = vsub.f32 %v510, %v964
      %v966 = vand.u32 %v965, 4294901760
      %967 = vmatpush.msra.mxu0 %v966
      %v968 = vand.u32 %v509, 4294901760
      %v969 = vsub.f32 %v509, %v968
      %v970 = vand.u32 %v969, 4294901760
      %971 = vmatpush.msra.mxu0 %v970
      %v972 = vand.u32 %v508, 4294901760
      %v973 = vsub.f32 %v508, %v972
      %v974 = vand.u32 %v973, 4294901760
      %975 = vmatpush.msra.mxu0 %v974
      %v976 = vand.u32 %v819, 4294901760
      %977 = vmatmul.f32.gmra.mxu0 %v976
      %v978 = vpop.f32.mrf.mxu0
      %v979 = vadd.f32 %v946, %v978
      %980 = vdwg.mxu0
      %981 = vmatpush.msra.mxu0 0.0
      %982 = vmatpush.msra.mxu0 0.0
      %983 = vmatpush.msra.mxu0 0.0
      %984 = vmatpush.msra.mxu0 0.0
      %985 = vmatpush.msra.mxu0 0.0
      %986 = vmatpush.msra.mxu0 0.0
      %987 = vmatpush.msra.mxu0 0.0
      %988 = vmatpush.msra.mxu0 0.0
      %989 = vmatpush.msra.mxu0 0.0
      %990 = vmatpush.msra.mxu0 0.0
      %991 = vmatpush.msra.mxu0 0.0
      %992 = vmatpush.msra.mxu0 0.0
      %v993 = vand.u32 %v511, 4294901760
      %994 = vmatpush.msra.mxu0 %v993
      %v995 = vand.u32 %v510, 4294901760
      %996 = vmatpush.msra.mxu0 %v995
      %v997 = vand.u32 %v509, 4294901760
      %998 = vmatpush.msra.mxu0 %v997
      %v999 = vand.u32 %v508, 4294901760
      %1000 = vmatpush.msra.mxu0 %v999
      %v1001 = vand.u32 %v819, 4294901760
      %1002 = vmatmul.f32.gmra.mxu0 %v1001
      %v1003 = vpop.f32.mrf.mxu0
      %v1004 = vadd.f32 %v979, %v1003
      %1005 = vdwg.mxu0
      %v1006 = vadd.f32 %v817, %v1004
      %v1007 = vmul.f32 %v1006, 0.5
      %v1008 = vtanh.pop %v1007
      %v1009 = vadd.f32 %v1008, 1.0
      %v1010 = vmul.f32 %v1009, 0.5
      %v1011 = vtanh.pop %v1006
      %1013 = vrot.lane.b32.xlu0 %v816, 32
      %v1014 = vpop.permute.xlu0 %1013
      %v1016 = vmul.f32 %v1010, %v1014
      %1018 = vrot.lane.b32.xlu0 %v1011, 32
      %v1019 = vpop.permute.xlu0 %1018
      %v1021 = vmul.f32 %v1010, %v1019
      %1023 = vrot.lane.b32.xlu0 %v1021, 32
      %v1024 = vpop.permute.xlu0 %1023
      %v1026 = vadd.f32 %v1016, %v1024
      %v1027 = vtanh.pop %v1026
      %1029 = vrot.lane.b32.xlu0 %v1027, 32
      %v1030 = vpop.permute.xlu0 %1029
      %v1032 = vmul.f32 %v1010, %v1030
      %1034 = vrot.lane.b32.xlu0 %v1032, 64
      %v1035 = vpop.permute.xlu0 %1034
      %1037 = vst.msk [vmem:[#allocation3] sm:$0xff] %vm520, %v1035
      %s1038 = scalar_lea.vmem [#allocation2], 8
      %v1039 = vld [vmem:[%s1038] sm:$0xff]
      %v1040 = vsel %vm520, %v1035, 0
      %1042 = vmatpush.msra.mxu0 0.0
      %1043 = vmatpush.msra.mxu0 0.0
      %1044 = vmatpush.msra.mxu0 0.0
      %1045 = vmatpush.msra.mxu0 0.0
      %1046 = vmatpush.msra.mxu0 0.0
      %1047 = vmatpush.msra.mxu0 0.0
      %1048 = vmatpush.msra.mxu0 0.0
      %1049 = vmatpush.msra.mxu0 0.0
      %1050 = vmatpush.msra.mxu0 0.0
      %1051 = vmatpush.msra.mxu0 0.0
      %1052 = vmatpush.msra.mxu0 0.0
      %1053 = vmatpush.msra.mxu0 0.0
      %v1054 = vand.u32 %v511, 4294901760
      %1055 = vmatpush.msra.mxu0 %v1054
      %v1056 = vand.u32 %v510, 4294901760
      %1057 = vmatpush.msra.mxu0 %v1056
      %v1058 = vand.u32 %v509, 4294901760
      %1059 = vmatpush.msra.mxu0 %v1058
      %v1060 = vand.u32 %v508, 4294901760
      %1061 = vmatpush.msra.mxu0 %v1060
      %v1062 = vand.u32 %v1040, 4294901760
      %v1063 = vsub.f32 %v1040, %v1062
      %v1064 = vand.u32 %v1063, 4294901760
      %v1065 = vsub.f32 %v1063, %v1064
      %v1066 = vand.u32 %v1065, 4294901760
      %1067 = vmatmul.f32.gmra.mxu0 %v1066
      %v1068 = vpop.f32.mrf.mxu0
      %v1069 = vadd.f32 0.0, %v1068
      %1070 = vdwg.mxu0
      %1071 = vmatpush.msra.mxu0 0.0
      %1072 = vmatpush.msra.mxu0 0.0
      %1073 = vmatpush.msra.mxu0 0.0
      %1074 = vmatpush.msra.mxu0 0.0
      %1075 = vmatpush.msra.mxu0 0.0
      %1076 = vmatpush.msra.mxu0 0.0
      %1077 = vmatpush.msra.mxu0 0.0
      %1078 = vmatpush.msra.mxu0 0.0
      %1079 = vmatpush.msra.mxu0 0.0
      %1080 = vmatpush.msra.mxu0 0.0
      %1081 = vmatpush.msra.mxu0 0.0
      %1082 = vmatpush.msra.mxu0 0.0
      %v1083 = vand.u32 %v511, 4294901760
      %v1084 = vsub.f32 %v511, %v1083
      %v1085 = vand.u32 %v1084, 4294901760
      %v1086 = vsub.f32 %v1084, %v1085
      %v1087 = vand.u32 %v1086, 4294901760
      %1088 = vmatpush.msra.mxu0 %v1087
      %v1089 = vand.u32 %v510, 4294901760
      %v1090 = vsub.f32 %v510, %v1089
      %v1091 = vand.u32 %v1090, 4294901760
      %v1092 = vsub.f32 %v1090, %v1091
      %v1093 = vand.u32 %v1092, 4294901760
      %1094 = vmatpush.msra.mxu0 %v1093
      %v1095 = vand.u32 %v509, 4294901760
      %v1096 = vsub.f32 %v509, %v1095
      %v1097 = vand.u32 %v1096, 4294901760
      %v1098 = vsub.f32 %v1096, %v1097
      %v1099 = vand.u32 %v1098, 4294901760
      %1100 = vmatpush.msra.mxu0 %v1099
      %v1101 = vand.u32 %v508, 4294901760
      %v1102 = vsub.f32 %v508, %v1101
      %v1103 = vand.u32 %v1102, 4294901760
      %v1104 = vsub.f32 %v1102, %v1103
      %v1105 = vand.u32 %v1104, 4294901760
      %1106 = vmatpush.msra.mxu0 %v1105
      %v1107 = vand.u32 %v1040, 4294901760
      %1108 = vmatmul.f32.gmra.mxu0 %v1107
      %v1109 = vpop.f32.mrf.mxu0
      %v1110 = vadd.f32 %v1069, %v1109
      %1111 = vdwg.mxu0
      %1112 = vmatpush.msra.mxu0 0.0
      %1113 = vmatpush.msra.mxu0 0.0
      %1114 = vmatpush.msra.mxu0 0.0
      %1115 = vmatpush.msra.mxu0 0.0
      %1116 = vmatpush.msra.mxu0 0.0
      %1117 = vmatpush.msra.mxu0 0.0
      %1118 = vmatpush.msra.mxu0 0.0
      %1119 = vmatpush.msra.mxu0 0.0
      %1120 = vmatpush.msra.mxu0 0.0
      %1121 = vmatpush.msra.mxu0 0.0
      %1122 = vmatpush.msra.mxu0 0.0
      %1123 = vmatpush.msra.mxu0 0.0
      %v1124 = vand.u32 %v511, 4294901760
      %v1125 = vsub.f32 %v511, %v1124
      %1126 = vmatpush.msra.mxu0 %v1125
      %v1127 = vand.u32 %v510, 4294901760
      %v1128 = vsub.f32 %v510, %v1127
      %1129 = vmatpush.msra.mxu0 %v1128
      %v1130 = vand.u32 %v509, 4294901760
      %v1131 = vsub.f32 %v509, %v1130
      %1132 = vmatpush.msra.mxu0 %v1131
      %v1133 = vand.u32 %v508, 4294901760
      %v1134 = vsub.f32 %v508, %v1133
      %1135 = vmatpush.msra.mxu0 %v1134
      %v1136 = vand.u32 %v1040, 4294901760
      %v1137 = vsub.f32 %v1040, %v1136
      %1138 = vmatmul.f32.gmra.mxu0 %v1137
      %v1139 = vpop.f32.mrf.mxu0
      %v1140 = vadd.f32 %v1110, %v1139
      %1141 = vdwg.mxu0
      %1142 = vmatpush.msra.mxu0 0.0
      %1143 = vmatpush.msra.mxu0 0.0
      %1144 = vmatpush.msra.mxu0 0.0
      %1145 = vmatpush.msra.mxu0 0.0
      %1146 = vmatpush.msra.mxu0 0.0
      %1147 = vmatpush.msra.mxu0 0.0
      %1148 = vmatpush.msra.mxu0 0.0
      %1149 = vmatpush.msra.mxu0 0.0
      %1150 = vmatpush.msra.mxu0 0.0
      %1151 = vmatpush.msra.mxu0 0.0
      %1152 = vmatpush.msra.mxu0 0.0
      %1153 = vmatpush.msra.mxu0 0.0
      %v1154 = vand.u32 %v511, 4294901760
      %1155 = vmatpush.msra.mxu0 %v1154
      %v1156 = vand.u32 %v510, 4294901760
      %1157 = vmatpush.msra.mxu0 %v1156
      %v1158 = vand.u32 %v509, 4294901760
      %1159 = vmatpush.msra.mxu0 %v1158
      %v1160 = vand.u32 %v508, 4294901760
      %1161 = vmatpush.msra.mxu0 %v1160
      %v1162 = vand.u32 %v1040, 4294901760
      %v1163 = vsub.f32 %v1040, %v1162
      %v1164 = vand.u32 %v1163, 4294901760
      %1165 = vmatmul.f32.gmra.mxu0 %v1164
      %v1166 = vpop.f32.mrf.mxu0
      %v1167 = vadd.f32 %v1140, %v1166
      %1168 = vdwg.mxu0
      %1169 = vmatpush.msra.mxu0 0.0
      %1170 = vmatpush.msra.mxu0 0.0
      %1171 = vmatpush.msra.mxu0 0.0
      %1172 = vmatpush.msra.mxu0 0.0
      %1173 = vmatpush.msra.mxu0 0.0
      %1174 = vmatpush.msra.mxu0 0.0
      %1175 = vmatpush.msra.mxu0 0.0
      %1176 = vmatpush.msra.mxu0 0.0
      %1177 = vmatpush.msra.mxu0 0.0
      %1178 = vmatpush.msra.mxu0 0.0
      %1179 = vmatpush.msra.mxu0 0.0
      %1180 = vmatpush.msra.mxu0 0.0
      %v1181 = vand.u32 %v511, 4294901760
      %v1182 = vsub.f32 %v511, %v1181
      %v1183 = vand.u32 %v1182, 4294901760
      %1184 = vmatpush.msra.mxu0 %v1183
      %v1185 = vand.u32 %v510, 4294901760
      %v1186 = vsub.f32 %v510, %v1185
      %v1187 = vand.u32 %v1186, 4294901760
      %1188 = vmatpush.msra.mxu0 %v1187
      %v1189 = vand.u32 %v509, 4294901760
      %v1190 = vsub.f32 %v509, %v1189
      %v1191 = vand.u32 %v1190, 4294901760
      %1192 = vmatpush.msra.mxu0 %v1191
      %v1193 = vand.u32 %v508, 4294901760
      %v1194 = vsub.f32 %v508, %v1193
      %v1195 = vand.u32 %v1194, 4294901760
      %1196 = vmatpush.msra.mxu0 %v1195
      %v1197 = vand.u32 %v1040, 4294901760
      %1198 = vmatmul.f32.gmra.mxu0 %v1197
      %v1199 = vpop.f32.mrf.mxu0
      %v1200 = vadd.f32 %v1167, %v1199
      %1201 = vdwg.mxu0
      %1202 = vmatpush.msra.mxu0 0.0
      %1203 = vmatpush.msra.mxu0 0.0
      %1204 = vmatpush.msra.mxu0 0.0
      %1205 = vmatpush.msra.mxu0 0.0
      %1206 = vmatpush.msra.mxu0 0.0
      %1207 = vmatpush.msra.mxu0 0.0
      %1208 = vmatpush.msra.mxu0 0.0
      %1209 = vmatpush.msra.mxu0 0.0
      %1210 = vmatpush.msra.mxu0 0.0
      %1211 = vmatpush.msra.mxu0 0.0
      %1212 = vmatpush.msra.mxu0 0.0
      %1213 = vmatpush.msra.mxu0 0.0
      %v1214 = vand.u32 %v511, 4294901760
      %1215 = vmatpush.msra.mxu0 %v1214
      %v1216 = vand.u32 %v510, 4294901760
      %1217 = vmatpush.msra.mxu0 %v1216
      %v1218 = vand.u32 %v509, 4294901760
      %1219 = vmatpush.msra.mxu0 %v1218
      %v1220 = vand.u32 %v508, 4294901760
      %1221 = vmatpush.msra.mxu0 %v1220
      %v1222 = vand.u32 %v1040, 4294901760
      %1223 = vmatmul.f32.gmra.mxu0 %v1222
      %v1224 = vpop.f32.mrf.mxu0
      %v1225 = vadd.f32 %v1200, %v1224
      %1226 = vdwg.mxu0
      %v1227 = vadd.f32 %v1039, %v1225
      %v1228 = vmul.f32 %v1227, 0.5
      %v1229 = vtanh.pop %v1228
      %v1230 = vadd.f32 %v1229, 1.0
      %v1231 = vmul.f32 %v1230, 0.5
      %v1232 = vtanh.pop %v1227
      %v1233 = vmul.f32 %v1231, %v1026
      %1235 = vrot.lane.b32.xlu0 %v1232, 32
      %v1236 = vpop.permute.xlu0 %1235
      %v1238 = vmul.f32 %v1231, %v1236
      %1240 = vrot.lane.b32.xlu0 %v1238, 32
      %v1241 = vpop.permute.xlu0 %1240
      %v1243 = vadd.f32 %v1233, %v1241
      %v1244 = vtanh.pop %v1243
      %1246 = vrot.lane.b32.xlu0 %v1244, 32
      %v1247 = vpop.permute.xlu0 %1246
      %v1249 = vmul.f32 %v1231, %v1247
      %1251 = vrot.lane.b32.xlu0 %v1249, 64
      %v1252 = vpop.permute.xlu0 %1251
      %s1254 = scalar_lea.vmem [#allocation3], 8
      %1255 = vst.msk [vmem:[%s1254] sm:$0xff] %vm520, %v1252
      %s1256 = scalar_lea.vmem [#allocation2], 16
      %v1257 = vld [vmem:[%s1256] sm:$0xff]
      %v1258 = vsel %vm520, %v1252, 0
      %1260 = vmatpush.msra.mxu0 0.0
      %1261 = vmatpush.msra.mxu0 0.0
      %1262 = vmatpush.msra.mxu0 0.0
      %1263 = vmatpush.msra.mxu0 0.0
      %1264 = vmatpush.msra.mxu0 0.0
      %1265 = vmatpush.msra.mxu0 0.0
      %1266 = vmatpush.msra.mxu0 0.0
      %1267 = vmatpush.msra.mxu0 0.0
      %1268 = vmatpush.msra.mxu0 0.0
      %1269 = vmatpush.msra.mxu0 0.0
      %1270 = vmatpush.msra.mxu0 0.0
      %1271 = vmatpush.msra.mxu0 0.0
      %v1272 = vand.u32 %v511, 4294901760
      %1273 = vmatpush.msra.mxu0 %v1272
      %v1274 = vand.u32 %v510, 4294901760
      %1275 = vmatpush.msra.mxu0 %v1274
      %v1276 = vand.u32 %v509, 4294901760
      %1277 = vmatpush.msra.mxu0 %v1276
      %v1278 = vand.u32 %v508, 4294901760
      %1279 = vmatpush.msra.mxu0 %v1278
      %v1280 = vand.u32 %v1258, 4294901760
      %v1281 = vsub.f32 %v1258, %v1280
      %v1282 = vand.u32 %v1281, 4294901760
      %v1283 = vsub.f32 %v1281, %v1282
      %v1284 = vand.u32 %v1283, 4294901760
      %1285 = vmatmul.f32.gmra.mxu0 %v1284
      %v1286 = vpop.f32.mrf.mxu0
      %v1287 = vadd.f32 0.0, %v1286
      %1288 = vdwg.mxu0
      %1289 = vmatpush.msra.mxu0 0.0
      %1290 = vmatpush.msra.mxu0 0.0
      %1291 = vmatpush.msra.mxu0 0.0
      %1292 = vmatpush.msra.mxu0 0.0
      %1293 = vmatpush.msra.mxu0 0.0
      %1294 = vmatpush.msra.mxu0 0.0
      %1295 = vmatpush.msra.mxu0 0.0
      %1296 = vmatpush.msra.mxu0 0.0
      %1297 = vmatpush.msra.mxu0 0.0
      %1298 = vmatpush.msra.mxu0 0.0
      %1299 = vmatpush.msra.mxu0 0.0
      %1300 = vmatpush.msra.mxu0 0.0
      %v1301 = vand.u32 %v511, 4294901760
      %v1302 = vsub.f32 %v511, %v1301
      %v1303 = vand.u32 %v1302, 4294901760
      %v1304 = vsub.f32 %v1302, %v1303
      %v1305 = vand.u32 %v1304, 4294901760
      %1306 = vmatpush.msra.mxu0 %v1305
      %v1307 = vand.u32 %v510, 4294901760
      %v1308 = vsub.f32 %v510, %v1307
      %v1309 = vand.u32 %v1308, 4294901760
      %v1310 = vsub.f32 %v1308, %v1309
      %v1311 = vand.u32 %v1310, 4294901760
      %1312 = vmatpush.msra.mxu0 %v1311
      %v1313 = vand.u32 %v509, 4294901760
      %v1314 = vsub.f32 %v509, %v1313
      %v1315 = vand.u32 %v1314, 4294901760
      %v1316 = vsub.f32 %v1314, %v1315
      %v1317 = vand.u32 %v1316, 4294901760
      %1318 = vmatpush.msra.mxu0 %v1317
      %v1319 = vand.u32 %v508, 4294901760
      %v1320 = vsub.f32 %v508, %v1319
      %v1321 = vand.u32 %v1320, 4294901760
      %v1322 = vsub.f32 %v1320, %v1321
      %v1323 = vand.u32 %v1322, 4294901760
      %1324 = vmatpush.msra.mxu0 %v1323
      %v1325 = vand.u32 %v1258, 4294901760
      %1326 = vmatmul.f32.gmra.mxu0 %v1325
      %v1327 = vpop.f32.mrf.mxu0
      %v1328 = vadd.f32 %v1287, %v1327
      %1329 = vdwg.mxu0
      %1330 = vmatpush.msra.mxu0 0.0
      %1331 = vmatpush.msra.mxu0 0.0
      %1332 = vmatpush.msra.mxu0 0.0
      %1333 = vmatpush.msra.mxu0 0.0
      %1334 = vmatpush.msra.mxu0 0.0
      %1335 = vmatpush.msra.mxu0 0.0
      %1336 = vmatpush.msra.mxu0 0.0
      %1337 = vmatpush.msra.mxu0 0.0
      %1338 = vmatpush.msra.mxu0 0.0
      %1339 = vmatpush.msra.mxu0 0.0
      %1340 = vmatpush.msra.mxu0 0.0
      %1341 = vmatpush.msra.mxu0 0.0
      %v1342 = vand.u32 %v511, 4294901760
      %v1343 = vsub.f32 %v511, %v1342
      %1344 = vmatpush.msra.mxu0 %v1343
      %v1345 = vand.u32 %v510, 4294901760
      %v1346 = vsub.f32 %v510, %v1345
      %1347 = vmatpush.msra.mxu0 %v1346
      %v1348 = vand.u32 %v509, 4294901760
      %v1349 = vsub.f32 %v509, %v1348
      %1350 = vmatpush.msra.mxu0 %v1349
      %v1351 = vand.u32 %v508, 4294901760
      %v1352 = vsub.f32 %v508, %v1351
      %1353 = vmatpush.msra.mxu0 %v1352
      %v1354 = vand.u32 %v1258, 4294901760
      %v1355 = vsub.f32 %v1258, %v1354
      %1356 = vmatmul.f32.gmra.mxu0 %v1355
      %v1357 = vpop.f32.mrf.mxu0
      %v1358 = vadd.f32 %v1328, %v1357
      %1359 = vdwg.mxu0
      %1360 = vmatpush.msra.mxu0 0.0
      %1361 = vmatpush.msra.mxu0 0.0
      %1362 = vmatpush.msra.mxu0 0.0
      %1363 = vmatpush.msra.mxu0 0.0
      %1364 = vmatpush.msra.mxu0 0.0
      %1365 = vmatpush.msra.mxu0 0.0
      %1366 = vmatpush.msra.mxu0 0.0
      %1367 = vmatpush.msra.mxu0 0.0
      %1368 = vmatpush.msra.mxu0 0.0
      %1369 = vmatpush.msra.mxu0 0.0
      %1370 = vmatpush.msra.mxu0 0.0
      %1371 = vmatpush.msra.mxu0 0.0
      %v1372 = vand.u32 %v511, 4294901760
      %1373 = vmatpush.msra.mxu0 %v1372
      %v1374 = vand.u32 %v510, 4294901760
      %1375 = vmatpush.msra.mxu0 %v1374
      %v1376 = vand.u32 %v509, 4294901760
      %1377 = vmatpush.msra.mxu0 %v1376
      %v1378 = vand.u32 %v508, 4294901760
      %1379 = vmatpush.msra.mxu0 %v1378
      %v1380 = vand.u32 %v1258, 4294901760
      %v1381 = vsub.f32 %v1258, %v1380
      %v1382 = vand.u32 %v1381, 4294901760
      %1383 = vmatmul.f32.gmra.mxu0 %v1382
      %v1384 = vpop.f32.mrf.mxu0
      %v1385 = vadd.f32 %v1358, %v1384
      %1386 = vdwg.mxu0
      %1387 = vmatpush.msra.mxu0 0.0
      %1388 = vmatpush.msra.mxu0 0.0
      %1389 = vmatpush.msra.mxu0 0.0
      %1390 = vmatpush.msra.mxu0 0.0
      %1391 = vmatpush.msra.mxu0 0.0
      %1392 = vmatpush.msra.mxu0 0.0
      %1393 = vmatpush.msra.mxu0 0.0
      %1394 = vmatpush.msra.mxu0 0.0
      %1395 = vmatpush.msra.mxu0 0.0
      %1396 = vmatpush.msra.mxu0 0.0
      %1397 = vmatpush.msra.mxu0 0.0
      %1398 = vmatpush.msra.mxu0 0.0
      %v1399 = vand.u32 %v511, 4294901760
      %v1400 = vsub.f32 %v511, %v1399
      %v1401 = vand.u32 %v1400, 4294901760
      %1402 = vmatpush.msra.mxu0 %v1401
      %v1403 = vand.u32 %v510, 4294901760
      %v1404 = vsub.f32 %v510, %v1403
      %v1405 = vand.u32 %v1404, 4294901760
      %1406 = vmatpush.msra.mxu0 %v1405
      %v1407 = vand.u32 %v509, 4294901760
      %v1408 = vsub.f32 %v509, %v1407
      %v1409 = vand.u32 %v1408, 4294901760
      %1410 = vmatpush.msra.mxu0 %v1409
      %v1411 = vand.u32 %v508, 4294901760
      %v1412 = vsub.f32 %v508, %v1411
      %v1413 = vand.u32 %v1412, 4294901760
      %1414 = vmatpush.msra.mxu0 %v1413
      %v1415 = vand.u32 %v1258, 4294901760
      %1416 = vmatmul.f32.gmra.mxu0 %v1415
      %v1417 = vpop.f32.mrf.mxu0
      %v1418 = vadd.f32 %v1385, %v1417
      %1419 = vdwg.mxu0
      %1420 = vmatpush.msra.mxu0 0.0
      %1421 = vmatpush.msra.mxu0 0.0
      %1422 = vmatpush.msra.mxu0 0.0
      %1423 = vmatpush.msra.mxu0 0.0
      %1424 = vmatpush.msra.mxu0 0.0
      %1425 = vmatpush.msra.mxu0 0.0
      %1426 = vmatpush.msra.mxu0 0.0
      %1427 = vmatpush.msra.mxu0 0.0
      %1428 = vmatpush.msra.mxu0 0.0
      %1429 = vmatpush.msra.mxu0 0.0
      %1430 = vmatpush.msra.mxu0 0.0
      %1431 = vmatpush.msra.mxu0 0.0
      %v1432 = vand.u32 %v511, 4294901760
      %1433 = vmatpush.msra.mxu0 %v1432
      %v1434 = vand.u32 %v510, 4294901760
      %1435 = vmatpush.msra.mxu0 %v1434
      %v1436 = vand.u32 %v509, 4294901760
      %1437 = vmatpush.msra.mxu0 %v1436
      %v1438 = vand.u32 %v508, 4294901760
      %1439 = vmatpush.msra.mxu0 %v1438
      %v1440 = vand.u32 %v1258, 4294901760
      %1441 = vmatmul.f32.gmra.mxu0 %v1440
      %v1442 = vpop.f32.mrf.mxu0
      %v1443 = vadd.f32 %v1418, %v1442
      %1444 = vdwg.mxu0
      %v1445 = vadd.f32 %v1257, %v1443
      %v1446 = vmul.f32 %v1445, 0.5
      %v1447 = vtanh.pop %v1446
      %v1448 = vadd.f32 %v1447, 1.0
      %v1449 = vmul.f32 %v1448, 0.5
      %v1450 = vtanh.pop %v1445
      %v1451 = vmul.f32 %v1449, %v1243
      %1453 = vrot.lane.b32.xlu0 %v1450, 32
      %v1454 = vpop.permute.xlu0 %1453
      %v1456 = vmul.f32 %v1449, %v1454
      %1458 = vrot.lane.b32.xlu0 %v1456, 32
      %v1459 = vpop.permute.xlu0 %1458
      %v1461 = vadd.f32 %v1451, %v1459
      %v1462 = vtanh.pop %v1461
      %1464 = vrot.lane.b32.xlu0 %v1462, 32
      %v1465 = vpop.permute.xlu0 %1464
      %v1467 = vmul.f32 %v1449, %v1465
      %1469 = vrot.lane.b32.xlu0 %v1467, 64
      %v1470 = vpop.permute.xlu0 %1469
      %s1472 = scalar_lea.vmem [#allocation3], 16
      %1473 = vst.msk [vmem:[%s1472] sm:$0xff] %vm520, %v1470
      %s1474 = scalar_lea.vmem [#allocation2], 24
      %v1475 = vld [vmem:[%s1474] sm:$0xff]
      %v1476 = vsel %vm520, %v1470, 0
      %1478 = vmatpush.msra.mxu0 0.0
      %1479 = vmatpush.msra.mxu0 0.0
      %1480 = vmatpush.msra.mxu0 0.0
      %1481 = vmatpush.msra.mxu0 0.0
      %1482 = vmatpush.msra.mxu0 0.0
      %1483 = vmatpush.msra.mxu0 0.0
      %1484 = vmatpush.msra.mxu0 0.0
      %1485 = vmatpush.msra.mxu0 0.0
      %1486 = vmatpush.msra.mxu0 0.0
      %1487 = vmatpush.msra.mxu0 0.0
      %1488 = vmatpush.msra.mxu0 0.0
      %1489 = vmatpush.msra.mxu0 0.0
      %v1490 = vand.u32 %v511, 4294901760
      %1491 = vmatpush.msra.mxu0 %v1490
      %v1492 = vand.u32 %v510, 4294901760
      %1493 = vmatpush.msra.mxu0 %v1492
      %v1494 = vand.u32 %v509, 4294901760
      %1495 = vmatpush.msra.mxu0 %v1494
      %v1496 = vand.u32 %v508, 4294901760
      %1497 = vmatpush.msra.mxu0 %v1496
      %v1498 = vand.u32 %v1476, 4294901760
      %v1499 = vsub.f32 %v1476, %v1498
      %v1500 = vand.u32 %v1499, 4294901760
      %v1501 = vsub.f32 %v1499, %v1500
      %v1502 = vand.u32 %v1501, 4294901760
      %1503 = vmatmul.f32.gmra.mxu0 %v1502
      %v1504 = vpop.f32.mrf.mxu0
      %v1505 = vadd.f32 0.0, %v1504
      %1506 = vdwg.mxu0
      %1507 = vmatpush.msra.mxu0 0.0
      %1508 = vmatpush.msra.mxu0 0.0
      %1509 = vmatpush.msra.mxu0 0.0
      %1510 = vmatpush.msra.mxu0 0.0
      %1511 = vmatpush.msra.mxu0 0.0
      %1512 = vmatpush.msra.mxu0 0.0
      %1513 = vmatpush.msra.mxu0 0.0
      %1514 = vmatpush.msra.mxu0 0.0
      %1515 = vmatpush.msra.mxu0 0.0
      %1516 = vmatpush.msra.mxu0 0.0
      %1517 = vmatpush.msra.mxu0 0.0
      %1518 = vmatpush.msra.mxu0 0.0
      %v1519 = vand.u32 %v511, 4294901760
      %v1520 = vsub.f32 %v511, %v1519
      %v1521 = vand.u32 %v1520, 4294901760
      %v1522 = vsub.f32 %v1520, %v1521
      %v1523 = vand.u32 %v1522, 4294901760
      %1524 = vmatpush.msra.mxu0 %v1523
      %v1525 = vand.u32 %v510, 4294901760
      %v1526 = vsub.f32 %v510, %v1525
      %v1527 = vand.u32 %v1526, 4294901760
      %v1528 = vsub.f32 %v1526, %v1527
      %v1529 = vand.u32 %v1528, 4294901760
      %1530 = vmatpush.msra.mxu0 %v1529
      %v1531 = vand.u32 %v509, 4294901760
      %v1532 = vsub.f32 %v509, %v1531
      %v1533 = vand.u32 %v1532, 4294901760
      %v1534 = vsub.f32 %v1532, %v1533
      %v1535 = vand.u32 %v1534, 4294901760
      %1536 = vmatpush.msra.mxu0 %v1535
      %v1537 = vand.u32 %v508, 4294901760
      %v1538 = vsub.f32 %v508, %v1537
      %v1539 = vand.u32 %v1538, 4294901760
      %v1540 = vsub.f32 %v1538, %v1539
      %v1541 = vand.u32 %v1540, 4294901760
      %1542 = vmatpush.msra.mxu0 %v1541
      %v1543 = vand.u32 %v1476, 4294901760
      %1544 = vmatmul.f32.gmra.mxu0 %v1543
      %v1545 = vpop.f32.mrf.mxu0
      %v1546 = vadd.f32 %v1505, %v1545
      %1547 = vdwg.mxu0
      %1548 = vmatpush.msra.mxu0 0.0
      %1549 = vmatpush.msra.mxu0 0.0
      %1550 = vmatpush.msra.mxu0 0.0
      %1551 = vmatpush.msra.mxu0 0.0
      %1552 = vmatpush.msra.mxu0 0.0
      %1553 = vmatpush.msra.mxu0 0.0
      %1554 = vmatpush.msra.mxu0 0.0
      %1555 = vmatpush.msra.mxu0 0.0
      %1556 = vmatpush.msra.mxu0 0.0
      %1557 = vmatpush.msra.mxu0 0.0
      %1558 = vmatpush.msra.mxu0 0.0
      %1559 = vmatpush.msra.mxu0 0.0
      %v1560 = vand.u32 %v511, 4294901760
      %v1561 = vsub.f32 %v511, %v1560
      %1562 = vmatpush.msra.mxu0 %v1561
      %v1563 = vand.u32 %v510, 4294901760
      %v1564 = vsub.f32 %v510, %v1563
      %1565 = vmatpush.msra.mxu0 %v1564
      %v1566 = vand.u32 %v509, 4294901760
      %v1567 = vsub.f32 %v509, %v1566
      %1568 = vmatpush.msra.mxu0 %v1567
      %v1569 = vand.u32 %v508, 4294901760
      %v1570 = vsub.f32 %v508, %v1569
      %1571 = vmatpush.msra.mxu0 %v1570
      %v1572 = vand.u32 %v1476, 4294901760
      %v1573 = vsub.f32 %v1476, %v1572
      %1574 = vmatmul.f32.gmra.mxu0 %v1573
      %v1575 = vpop.f32.mrf.mxu0
      %v1576 = vadd.f32 %v1546, %v1575
      %1577 = vdwg.mxu0
      %1578 = vmatpush.msra.mxu0 0.0
      %1579 = vmatpush.msra.mxu0 0.0
      %1580 = vmatpush.msra.mxu0 0.0
      %1581 = vmatpush.msra.mxu0 0.0
      %1582 = vmatpush.msra.mxu0 0.0
      %1583 = vmatpush.msra.mxu0 0.0
      %1584 = vmatpush.msra.mxu0 0.0
      %1585 = vmatpush.msra.mxu0 0.0
      %1586 = vmatpush.msra.mxu0 0.0
      %1587 = vmatpush.msra.mxu0 0.0
      %1588 = vmatpush.msra.mxu0 0.0
      %1589 = vmatpush.msra.mxu0 0.0
      %v1590 = vand.u32 %v511, 4294901760
      %1591 = vmatpush.msra.mxu0 %v1590
      %v1592 = vand.u32 %v510, 4294901760
      %1593 = vmatpush.msra.mxu0 %v1592
      %v1594 = vand.u32 %v509, 4294901760
      %1595 = vmatpush.msra.mxu0 %v1594
      %v1596 = vand.u32 %v508, 4294901760
      %1597 = vmatpush.msra.mxu0 %v1596
      %v1598 = vand.u32 %v1476, 4294901760
      %v1599 = vsub.f32 %v1476, %v1598
      %v1600 = vand.u32 %v1599, 4294901760
      %1601 = vmatmul.f32.gmra.mxu0 %v1600
      %v1602 = vpop.f32.mrf.mxu0
      %v1603 = vadd.f32 %v1576, %v1602
      %1604 = vdwg.mxu0
      %1605 = vmatpush.msra.mxu0 0.0
      %1606 = vmatpush.msra.mxu0 0.0
      %1607 = vmatpush.msra.mxu0 0.0
      %1608 = vmatpush.msra.mxu0 0.0
      %1609 = vmatpush.msra.mxu0 0.0
      %1610 = vmatpush.msra.mxu0 0.0
      %1611 = vmatpush.msra.mxu0 0.0
      %1612 = vmatpush.msra.mxu0 0.0
      %1613 = vmatpush.msra.mxu0 0.0
      %1614 = vmatpush.msra.mxu0 0.0
      %1615 = vmatpush.msra.mxu0 0.0
      %1616 = vmatpush.msra.mxu0 0.0
      %v1617 = vand.u32 %v511, 4294901760
      %v1618 = vsub.f32 %v511, %v1617
      %v1619 = vand.u32 %v1618, 4294901760
      %1620 = vmatpush.msra.mxu0 %v1619
      %v1621 = vand.u32 %v510, 4294901760
      %v1622 = vsub.f32 %v510, %v1621
      %v1623 = vand.u32 %v1622, 4294901760
      %1624 = vmatpush.msra.mxu0 %v1623
      %v1625 = vand.u32 %v509, 4294901760
      %v1626 = vsub.f32 %v509, %v1625
      %v1627 = vand.u32 %v1626, 4294901760
      %1628 = vmatpush.msra.mxu0 %v1627
      %v1629 = vand.u32 %v508, 4294901760
      %v1630 = vsub.f32 %v508, %v1629
      %v1631 = vand.u32 %v1630, 4294901760
      %1632 = vmatpush.msra.mxu0 %v1631
      %v1633 = vand.u32 %v1476, 4294901760
      %1634 = vmatmul.f32.gmra.mxu0 %v1633
      %v1635 = vpop.f32.mrf.mxu0
      %v1636 = vadd.f32 %v1603, %v1635
      %1637 = vdwg.mxu0
      %1638 = vmatpush.msra.mxu0 0.0
      %1639 = vmatpush.msra.mxu0 0.0
      %1640 = vmatpush.msra.mxu0 0.0
      %1641 = vmatpush.msra.mxu0 0.0
      %1642 = vmatpush.msra.mxu0 0.0
      %1643 = vmatpush.msra.mxu0 0.0
      %1644 = vmatpush.msra.mxu0 0.0
      %1645 = vmatpush.msra.mxu0 0.0
      %1646 = vmatpush.msra.mxu0 0.0
      %1647 = vmatpush.msra.mxu0 0.0
      %1648 = vmatpush.msra.mxu0 0.0
      %1649 = vmatpush.msra.mxu0 0.0
      %v1650 = vand.u32 %v511, 4294901760
      %1651 = vmatpush.msra.mxu0 %v1650
      %v1652 = vand.u32 %v510, 4294901760
      %1653 = vmatpush.msra.mxu0 %v1652
      %v1654 = vand.u32 %v509, 4294901760
      %1655 = vmatpush.msra.mxu0 %v1654
      %v1656 = vand.u32 %v508, 4294901760
      %1657 = vmatpush.msra.mxu0 %v1656
      %v1658 = vand.u32 %v1476, 4294901760
      %1659 = vmatmul.f32.gmra.mxu0 %v1658
      %v1660 = vpop.f32.mrf.mxu0
      %v1661 = vadd.f32 %v1636, %v1660
      %1662 = vdwg.mxu0
      %v1663 = vadd.f32 %v1475, %v1661
      %v1664 = vmul.f32 %v1663, 0.5
      %v1665 = vtanh.pop %v1664
      %v1666 = vadd.f32 %v1665, 1.0
      %v1667 = vmul.f32 %v1666, 0.5
      %v1668 = vtanh.pop %v1663
      %v1669 = vmul.f32 %v1667, %v1461
      %1671 = vrot.lane.b32.xlu0 %v1668, 32
      %v1672 = vpop.permute.xlu0 %1671
      %v1674 = vmul.f32 %v1667, %v1672
      %1676 = vrot.lane.b32.xlu0 %v1674, 32
      %v1677 = vpop.permute.xlu0 %1676
      %v1679 = vadd.f32 %v1669, %v1677
      %v1680 = vtanh.pop %v1679
      %1682 = vrot.lane.b32.xlu0 %v1680, 32
      %v1683 = vpop.permute.xlu0 %1682
      %v1685 = vmul.f32 %v1667, %v1683
      %1687 = vrot.lane.b32.xlu0 %v1685, 64
      %v1688 = vpop.permute.xlu0 %1687
      %s1690 = scalar_lea.vmem [#allocation3], 24
      %1691 = vst.msk [vmem:[%s1690] sm:$0xff] %vm520, %v1688
      %1692 = vst.msk [vmem:[#allocation4] sm:$0xff] %vm520, %v1688
      %1694 = vrot.lane.b32.xlu0 %v1679, 96
      %v1695 = vpop.permute.xlu0 %1694
      %1697 = vst.msk [vmem:[#allocation5] sm:$0xff] %vm520, %v1695
      %v1698 = vld [vmem:[%s4] sm:$0xff]
      %v1699 = vld [vmem:[%s4 + $0x8] sm:$0xff]
      %v1700 = vld [vmem:[%s4 + $0x10] sm:$0xff]
      %v1701 = vld [vmem:[%s4 + $0x18] sm:$0xff]
      %v1702 = vld [vmem:[%s5] sm:$0xff]
      %v1703 = vld [vmem:[%s5 + $0x8] sm:$0xff]
      %v1704 = vld [vmem:[%s5 + $0x10] sm:$0xff]
      %v1705 = vld [vmem:[%s5 + $0x18] sm:$0xff]
      %v1706 = vld [vmem:[%s6] sm:$0x1]
      %v1707 = vld [vmem:[#allocation3] sm:$0xff]
      %v1708 = vld [vmem:[#allocation3 + $0x8] sm:$0xff]
      %v1709 = vld [vmem:[#allocation3 + $0x10] sm:$0xff]
      %v1710 = vld [vmem:[#allocation3 + $0x18] sm:$0xff]
      %v1712 = vperm.slane %v1706, 0
      %v1715 = vsel %vm520, %v1707, 0
      %v1718 = vsel %vm520, %v1708, 0
      %v1721 = vsel %vm520, %v1709, 0
      %v1724 = vsel %vm520, %v1710, 0
      %1726 = vmatpush.msra.mxu0 0.0
      %1727 = vmatpush.msra.mxu0 0.0
      %1728 = vmatpush.msra.mxu0 0.0
      %1729 = vmatpush.msra.mxu0 0.0
      %1730 = vmatpush.msra.mxu0 0.0
      %1731 = vmatpush.msra.mxu0 0.0
      %1732 = vmatpush.msra.mxu0 0.0
      %1733 = vmatpush.msra.mxu0 0.0
      %1734 = vmatpush.msra.mxu0 0.0
      %1735 = vmatpush.msra.mxu0 0.0
      %1736 = vmatpush.msra.mxu0 0.0
      %1737 = vmatpush.msra.mxu0 0.0
      %v1738 = vand.u32 %v1701, 4294901760
      %1739 = vmatpush.msra.mxu0 %v1738
      %v1740 = vand.u32 %v1700, 4294901760
      %1741 = vmatpush.msra.mxu0 %v1740
      %v1742 = vand.u32 %v1699, 4294901760
      %1743 = vmatpush.msra.mxu0 %v1742
      %v1744 = vand.u32 %v1698, 4294901760
      %1745 = vmatpush.msra.mxu0 %v1744
      %v1746 = vand.u32 %v1715, 4294901760
      %v1747 = vsub.f32 %v1715, %v1746
      %v1748 = vand.u32 %v1747, 4294901760
      %v1749 = vsub.f32 %v1747, %v1748
      %v1750 = vand.u32 %v1749, 4294901760
      %1751 = vmatmul.f32.gmra.mxu0 %v1750
      %v1752 = vpop.f32.mrf.mxu0
      %v1753 = vadd.f32 %v1712, %v1752
      %v1754 = vand.u32 %v1718, 4294901760
      %v1755 = vsub.f32 %v1718, %v1754
      %v1756 = vand.u32 %v1755, 4294901760
      %v1757 = vsub.f32 %v1755, %v1756
      %v1758 = vand.u32 %v1757, 4294901760
      %1759 = vmatmul.f32.gmra.mxu0 %v1758
      %v1760 = vpop.f32.mrf.mxu0
      %v1761 = vadd.f32 %v1712, %v1760
      %v1762 = vand.u32 %v1721, 4294901760
      %v1763 = vsub.f32 %v1721, %v1762
      %v1764 = vand.u32 %v1763, 4294901760
      %v1765 = vsub.f32 %v1763, %v1764
      %v1766 = vand.u32 %v1765, 4294901760
      %1767 = vmatmul.f32.gmra.mxu0 %v1766
      %v1768 = vpop.f32.mrf.mxu0
      %v1769 = vadd.f32 %v1712, %v1768
      %v1770 = vand.u32 %v1724, 4294901760
      %v1771 = vsub.f32 %v1724, %v1770
      %v1772 = vand.u32 %v1771, 4294901760
      %v1773 = vsub.f32 %v1771, %v1772
      %v1774 = vand.u32 %v1773, 4294901760
      %1775 = vmatmul.f32.gmra.mxu0 %v1774
      %v1776 = vpop.f32.mrf.mxu0
      %v1777 = vadd.f32 %v1712, %v1776
      %1778 = vdwg.mxu0
      %1779 = vmatpush.msra.mxu0 0.0
      %1780 = vmatpush.msra.mxu0 0.0
      %1781 = vmatpush.msra.mxu0 0.0
      %1782 = vmatpush.msra.mxu0 0.0
      %1783 = vmatpush.msra.mxu0 0.0
      %1784 = vmatpush.msra.mxu0 0.0
      %1785 = vmatpush.msra.mxu0 0.0
      %1786 = vmatpush.msra.mxu0 0.0
      %1787 = vmatpush.msra.mxu0 0.0
      %1788 = vmatpush.msra.mxu0 0.0
      %1789 = vmatpush.msra.mxu0 0.0
      %1790 = vmatpush.msra.mxu0 0.0
      %v1791 = vand.u32 %v1701, 4294901760
      %v1792 = vsub.f32 %v1701, %v1791
      %v1793 = vand.u32 %v1792, 4294901760
      %v1794 = vsub.f32 %v1792, %v1793
      %v1795 = vand.u32 %v1794, 4294901760
      %1796 = vmatpush.msra.mxu0 %v1795
      %v1797 = vand.u32 %v1700, 4294901760
      %v1798 = vsub.f32 %v1700, %v1797
      %v1799 = vand.u32 %v1798, 4294901760
      %v1800 = vsub.f32 %v1798, %v1799
      %v1801 = vand.u32 %v1800, 4294901760
      %1802 = vmatpush.msra.mxu0 %v1801
      %v1803 = vand.u32 %v1699, 4294901760
      %v1804 = vsub.f32 %v1699, %v1803
      %v1805 = vand.u32 %v1804, 4294901760
      %v1806 = vsub.f32 %v1804, %v1805
      %v1807 = vand.u32 %v1806, 4294901760
      %1808 = vmatpush.msra.mxu0 %v1807
      %v1809 = vand.u32 %v1698, 4294901760
      %v1810 = vsub.f32 %v1698, %v1809
      %v1811 = vand.u32 %v1810, 4294901760
      %v1812 = vsub.f32 %v1810, %v1811
      %v1813 = vand.u32 %v1812, 4294901760
      %1814 = vmatpush.msra.mxu0 %v1813
      %v1815 = vand.u32 %v1715, 4294901760
      %1816 = vmatmul.f32.gmra.mxu0 %v1815
      %v1817 = vpop.f32.mrf.mxu0
      %v1818 = vadd.f32 %v1753, %v1817
      %v1819 = vand.u32 %v1718, 4294901760
      %1820 = vmatmul.f32.gmra.mxu0 %v1819
      %v1821 = vpop.f32.mrf.mxu0
      %v1822 = vadd.f32 %v1761, %v1821
      %v1823 = vand.u32 %v1721, 4294901760
      %1824 = vmatmul.f32.gmra.mxu0 %v1823
      %v1825 = vpop.f32.mrf.mxu0
      %v1826 = vadd.f32 %v1769, %v1825
      %v1827 = vand.u32 %v1724, 4294901760
      %1828 = vmatmul.f32.gmra.mxu0 %v1827
      %v1829 = vpop.f32.mrf.mxu0
      %v1830 = vadd.f32 %v1777, %v1829
      %1831 = vdwg.mxu0
      %1832 = vmatpush.msra.mxu0 0.0
      %1833 = vmatpush.msra.mxu0 0.0
      %1834 = vmatpush.msra.mxu0 0.0
      %1835 = vmatpush.msra.mxu0 0.0
      %1836 = vmatpush.msra.mxu0 0.0
      %1837 = vmatpush.msra.mxu0 0.0
      %1838 = vmatpush.msra.mxu0 0.0
      %1839 = vmatpush.msra.mxu0 0.0
      %1840 = vmatpush.msra.mxu0 0.0
      %1841 = vmatpush.msra.mxu0 0.0
      %1842 = vmatpush.msra.mxu0 0.0
      %1843 = vmatpush.msra.mxu0 0.0
      %v1844 = vand.u32 %v1701, 4294901760
      %v1845 = vsub.f32 %v1701, %v1844
      %1846 = vmatpush.msra.mxu0 %v1845
      %v1847 = vand.u32 %v1700, 4294901760
      %v1848 = vsub.f32 %v1700, %v1847
      %1849 = vmatpush.msra.mxu0 %v1848
      %v1850 = vand.u32 %v1699, 4294901760
      %v1851 = vsub.f32 %v1699, %v1850
      %1852 = vmatpush.msra.mxu0 %v1851
      %v1853 = vand.u32 %v1698, 4294901760
      %v1854 = vsub.f32 %v1698, %v1853
      %1855 = vmatpush.msra.mxu0 %v1854
      %v1856 = vand.u32 %v1715, 4294901760
      %v1857 = vsub.f32 %v1715, %v1856
      %1858 = vmatmul.f32.gmra.mxu0 %v1857
      %v1859 = vpop.f32.mrf.mxu0
      %v1860 = vadd.f32 %v1818, %v1859
      %v1861 = vand.u32 %v1718, 4294901760
      %v1862 = vsub.f32 %v1718, %v1861
      %1863 = vmatmul.f32.gmra.mxu0 %v1862
      %v1864 = vpop.f32.mrf.mxu0
      %v1865 = vadd.f32 %v1822, %v1864
      %v1866 = vand.u32 %v1721, 4294901760
      %v1867 = vsub.f32 %v1721, %v1866
      %1868 = vmatmul.f32.gmra.mxu0 %v1867
      %v1869 = vpop.f32.mrf.mxu0
      %v1870 = vadd.f32 %v1826, %v1869
      %v1871 = vand.u32 %v1724, 4294901760
      %v1872 = vsub.f32 %v1724, %v1871
      %1873 = vmatmul.f32.gmra.mxu0 %v1872
      %v1874 = vpop.f32.mrf.mxu0
      %v1875 = vadd.f32 %v1830, %v1874
      %1876 = vdwg.mxu0
      %1877 = vmatpush.msra.mxu0 0.0
      %1878 = vmatpush.msra.mxu0 0.0
      %1879 = vmatpush.msra.mxu0 0.0
      %1880 = vmatpush.msra.mxu0 0.0
      %1881 = vmatpush.msra.mxu0 0.0
      %1882 = vmatpush.msra.mxu0 0.0
      %1883 = vmatpush.msra.mxu0 0.0
      %1884 = vmatpush.msra.mxu0 0.0
      %1885 = vmatpush.msra.mxu0 0.0
      %1886 = vmatpush.msra.mxu0 0.0
      %1887 = vmatpush.msra.mxu0 0.0
      %1888 = vmatpush.msra.mxu0 0.0
      %v1889 = vand.u32 %v1701, 4294901760
      %1890 = vmatpush.msra.mxu0 %v1889
      %v1891 = vand.u32 %v1700, 4294901760
      %1892 = vmatpush.msra.mxu0 %v1891
      %v1893 = vand.u32 %v1699, 4294901760
      %1894 = vmatpush.msra.mxu0 %v1893
      %v1895 = vand.u32 %v1698, 4294901760
      %1896 = vmatpush.msra.mxu0 %v1895
      %v1897 = vand.u32 %v1715, 4294901760
      %v1898 = vsub.f32 %v1715, %v1897
      %v1899 = vand.u32 %v1898, 4294901760
      %1900 = vmatmul.f32.gmra.mxu0 %v1899
      %v1901 = vpop.f32.mrf.mxu0
      %v1902 = vadd.f32 %v1860, %v1901
      %v1903 = vand.u32 %v1718, 4294901760
      %v1904 = vsub.f32 %v1718, %v1903
      %v1905 = vand.u32 %v1904, 4294901760
      %1906 = vmatmul.f32.gmra.mxu0 %v1905
      %v1907 = vpop.f32.mrf.mxu0
      %v1908 = vadd.f32 %v1865, %v1907
      %v1909 = vand.u32 %v1721, 4294901760
      %v1910 = vsub.f32 %v1721, %v1909
      %v1911 = vand.u32 %v1910, 4294901760
      %1912 = vmatmul.f32.gmra.mxu0 %v1911
      %v1913 = vpop.f32.mrf.mxu0
      %v1914 = vadd.f32 %v1870, %v1913
      %v1915 = vand.u32 %v1724, 4294901760
      %v1916 = vsub.f32 %v1724, %v1915
      %v1917 = vand.u32 %v1916, 4294901760
      %1918 = vmatmul.f32.gmra.mxu0 %v1917
      %v1919 = vpop.f32.mrf.mxu0
      %v1920 = vadd.f32 %v1875, %v1919
      %1921 = vdwg.mxu0
      %1922 = vmatpush.msra.mxu0 0.0
      %1923 = vmatpush.msra.mxu0 0.0
      %1924 = vmatpush.msra.mxu0 0.0
      %1925 = vmatpush.msra.mxu0 0.0
      %1926 = vmatpush.msra.mxu0 0.0
      %1927 = vmatpush.msra.mxu0 0.0
      %1928 = vmatpush.msra.mxu0 0.0
      %1929 = vmatpush.msra.mxu0 0.0
      %1930 = vmatpush.msra.mxu0 0.0
      %1931 = vmatpush.msra.mxu0 0.0
      %1932 = vmatpush.msra.mxu0 0.0
      %1933 = vmatpush.msra.mxu0 0.0
      %v1934 = vand.u32 %v1701, 4294901760
      %v1935 = vsub.f32 %v1701, %v1934
      %v1936 = vand.u32 %v1935, 4294901760
      %1937 = vmatpush.msra.mxu0 %v1936
      %v1938 = vand.u32 %v1700, 4294901760
      %v1939 = vsub.f32 %v1700, %v1938
      %v1940 = vand.u32 %v1939, 4294901760
      %1941 = vmatpush.msra.mxu0 %v1940
      %v1942 = vand.u32 %v1699, 4294901760
      %v1943 = vsub.f32 %v1699, %v1942
      %v1944 = vand.u32 %v1943, 4294901760
      %1945 = vmatpush.msra.mxu0 %v1944
      %v1946 = vand.u32 %v1698, 4294901760
      %v1947 = vsub.f32 %v1698, %v1946
      %v1948 = vand.u32 %v1947, 4294901760
      %1949 = vmatpush.msra.mxu0 %v1948
      %v1950 = vand.u32 %v1715, 4294901760
      %1951 = vmatmul.f32.gmra.mxu0 %v1950
      %v1952 = vpop.f32.mrf.mxu0
      %v1953 = vadd.f32 %v1902, %v1952
      %v1954 = vand.u32 %v1718, 4294901760
      %1955 = vmatmul.f32.gmra.mxu0 %v1954
      %v1956 = vpop.f32.mrf.mxu0
      %v1957 = vadd.f32 %v1908, %v1956
      %v1958 = vand.u32 %v1721, 4294901760
      %1959 = vmatmul.f32.gmra.mxu0 %v1958
      %v1960 = vpop.f32.mrf.mxu0
      %v1961 = vadd.f32 %v1914, %v1960
      %v1962 = vand.u32 %v1724, 4294901760
      %1963 = vmatmul.f32.gmra.mxu0 %v1962
      %v1964 = vpop.f32.mrf.mxu0
      %v1965 = vadd.f32 %v1920, %v1964
      %1966 = vdwg.mxu0
      %1967 = vmatpush.msra.mxu0 0.0
      %1968 = vmatpush.msra.mxu0 0.0
      %1969 = vmatpush.msra.mxu0 0.0
      %1970 = vmatpush.msra.mxu0 0.0
      %1971 = vmatpush.msra.mxu0 0.0
      %1972 = vmatpush.msra.mxu0 0.0
      %1973 = vmatpush.msra.mxu0 0.0
      %1974 = vmatpush.msra.mxu0 0.0
      %1975 = vmatpush.msra.mxu0 0.0
      %1976 = vmatpush.msra.mxu0 0.0
      %1977 = vmatpush.msra.mxu0 0.0
      %1978 = vmatpush.msra.mxu0 0.0
      %v1979 = vand.u32 %v1701, 4294901760
      %1980 = vmatpush.msra.mxu0 %v1979
      %v1981 = vand.u32 %v1700, 4294901760
      %1982 = vmatpush.msra.mxu0 %v1981
      %v1983 = vand.u32 %v1699, 4294901760
      %1984 = vmatpush.msra.mxu0 %v1983
      %v1985 = vand.u32 %v1698, 4294901760
      %1986 = vmatpush.msra.mxu0 %v1985
      %v1987 = vand.u32 %v1715, 4294901760
      %1988 = vmatmul.f32.gmra.mxu0 %v1987
      %v1989 = vpop.f32.mrf.mxu0
      %v1990 = vadd.f32 %v1953, %v1989
      %v1991 = vand.u32 %v1718, 4294901760
      %1992 = vmatmul.f32.gmra.mxu0 %v1991
      %v1993 = vpop.f32.mrf.mxu0
      %v1994 = vadd.f32 %v1957, %v1993
      %v1995 = vand.u32 %v1721, 4294901760
      %1996 = vmatmul.f32.gmra.mxu0 %v1995
      %v1997 = vpop.f32.mrf.mxu0
      %v1998 = vadd.f32 %v1961, %v1997
      %v1999 = vand.u32 %v1724, 4294901760
      %2000 = vmatmul.f32.gmra.mxu0 %v1999
      %v2001 = vpop.f32.mrf.mxu0
      %v2002 = vadd.f32 %v1965, %v2001
      %2003 = vdwg.mxu0
      %2004 = vst [vmem:[#allocation2] sm:$0xff] %v1990
      %2005 = vst [vmem:[#allocation2 + $0x8] sm:$0xff] %v1994
      %2006 = vst [vmem:[#allocation2 + $0x10] sm:$0xff] %v1998
      %2007 = vst [vmem:[#allocation2 + $0x18] sm:$0xff] %v2002
      %s2008 = scalar_lea.vmem [#allocation4], 8
      %v2009 = vld [vmem:[%s2008] sm:$0xff]
      %s2010 = scalar_lea.vmem [#allocation5], 8
      %v2011 = vld [vmem:[%s2010] sm:$0xff]
      %v2012 = vld [vmem:[#allocation2] sm:$0xff]
      %v2014 = vsel %vm520, %v2009, 0
      %2016 = vmatpush.msra.mxu0 0.0
      %2017 = vmatpush.msra.mxu0 0.0
      %2018 = vmatpush.msra.mxu0 0.0
      %2019 = vmatpush.msra.mxu0 0.0
      %2020 = vmatpush.msra.mxu0 0.0
      %2021 = vmatpush.msra.mxu0 0.0
      %2022 = vmatpush.msra.mxu0 0.0
      %2023 = vmatpush.msra.mxu0 0.0
      %2024 = vmatpush.msra.mxu0 0.0
      %2025 = vmatpush.msra.mxu0 0.0
      %2026 = vmatpush.msra.mxu0 0.0
      %2027 = vmatpush.msra.mxu0 0.0
      %v2028 = vand.u32 %v1705, 4294901760
      %2029 = vmatpush.msra.mxu0 %v2028
      %v2030 = vand.u32 %v1704, 4294901760
      %2031 = vmatpush.msra.mxu0 %v2030
      %v2032 = vand.u32 %v1703, 4294901760
      %2033 = vmatpush.msra.mxu0 %v2032
      %v2034 = vand.u32 %v1702, 4294901760
      %2035 = vmatpush.msra.mxu0 %v2034
      %v2036 = vand.u32 %v2014, 4294901760
      %v2037 = vsub.f32 %v2014, %v2036
      %v2038 = vand.u32 %v2037, 4294901760
      %v2039 = vsub.f32 %v2037, %v2038
      %v2040 = vand.u32 %v2039, 4294901760
      %2041 = vmatmul.f32.gmra.mxu0 %v2040
      %v2042 = vpop.f32.mrf.mxu0
      %v2043 = vadd.f32 0.0, %v2042
      %2044 = vdwg.mxu0
      %2045 = vmatpush.msra.mxu0 0.0
      %2046 = vmatpush.msra.mxu0 0.0
      %2047 = vmatpush.msra.mxu0 0.0
      %2048 = vmatpush.msra.mxu0 0.0
      %2049 = vmatpush.msra.mxu0 0.0
      %2050 = vmatpush.msra.mxu0 0.0
      %2051 = vmatpush.msra.mxu0 0.0
      %2052 = vmatpush.msra.mxu0 0.0
      %2053 = vmatpush.msra.mxu0 0.0
      %2054 = vmatpush.msra.mxu0 0.0
      %2055 = vmatpush.msra.mxu0 0.0
      %2056 = vmatpush.msra.mxu0 0.0
      %v2057 = vand.u32 %v1705, 4294901760
      %v2058 = vsub.f32 %v1705, %v2057
      %v2059 = vand.u32 %v2058, 4294901760
      %v2060 = vsub.f32 %v2058, %v2059
      %v2061 = vand.u32 %v2060, 4294901760
      %2062 = vmatpush.msra.mxu0 %v2061
      %v2063 = vand.u32 %v1704, 4294901760
      %v2064 = vsub.f32 %v1704, %v2063
      %v2065 = vand.u32 %v2064, 4294901760
      %v2066 = vsub.f32 %v2064, %v2065
      %v2067 = vand.u32 %v2066, 4294901760
      %2068 = vmatpush.msra.mxu0 %v2067
      %v2069 = vand.u32 %v1703, 4294901760
      %v2070 = vsub.f32 %v1703, %v2069
      %v2071 = vand.u32 %v2070, 4294901760
      %v2072 = vsub.f32 %v2070, %v2071
      %v2073 = vand.u32 %v2072, 4294901760
      %2074 = vmatpush.msra.mxu0 %v2073
      %v2075 = vand.u32 %v1702, 4294901760
      %v2076 = vsub.f32 %v1702, %v2075
      %v2077 = vand.u32 %v2076, 4294901760
      %v2078 = vsub.f32 %v2076, %v2077
      %v2079 = vand.u32 %v2078, 4294901760
      %2080 = vmatpush.msra.mxu0 %v2079
      %v2081 = vand.u32 %v2014, 4294901760
      %2082 = vmatmul.f32.gmra.mxu0 %v2081
      %v2083 = vpop.f32.mrf.mxu0
      %v2084 = vadd.f32 %v2043, %v2083
      %2085 = vdwg.mxu0
      %2086 = vmatpush.msra.mxu0 0.0
      %2087 = vmatpush.msra.mxu0 0.0
      %2088 = vmatpush.msra.mxu0 0.0
      %2089 = vmatpush.msra.mxu0 0.0
      %2090 = vmatpush.msra.mxu0 0.0
      %2091 = vmatpush.msra.mxu0 0.0
      %2092 = vmatpush.msra.mxu0 0.0
      %2093 = vmatpush.msra.mxu0 0.0
      %2094 = vmatpush.msra.mxu0 0.0
      %2095 = vmatpush.msra.mxu0 0.0
      %2096 = vmatpush.msra.mxu0 0.0
      %2097 = vmatpush.msra.mxu0 0.0
      %v2098 = vand.u32 %v1705, 4294901760
      %v2099 = vsub.f32 %v1705, %v2098
      %2100 = vmatpush.msra.mxu0 %v2099
      %v2101 = vand.u32 %v1704, 4294901760
      %v2102 = vsub.f32 %v1704, %v2101
      %2103 = vmatpush.msra.mxu0 %v2102
      %v2104 = vand.u32 %v1703, 4294901760
      %v2105 = vsub.f32 %v1703, %v2104
      %2106 = vmatpush.msra.mxu0 %v2105
      %v2107 = vand.u32 %v1702, 4294901760
      %v2108 = vsub.f32 %v1702, %v2107
      %2109 = vmatpush.msra.mxu0 %v2108
      %v2110 = vand.u32 %v2014, 4294901760
      %v2111 = vsub.f32 %v2014, %v2110
      %2112 = vmatmul.f32.gmra.mxu0 %v2111
      %v2113 = vpop.f32.mrf.mxu0
      %v2114 = vadd.f32 %v2084, %v2113
      %2115 = vdwg.mxu0
      %2116 = vmatpush.msra.mxu0 0.0
      %2117 = vmatpush.msra.mxu0 0.0
      %2118 = vmatpush.msra.mxu0 0.0
      %2119 = vmatpush.msra.mxu0 0.0
      %2120 = vmatpush.msra.mxu0 0.0
      %2121 = vmatpush.msra.mxu0 0.0
      %2122 = vmatpush.msra.mxu0 0.0
      %2123 = vmatpush.msra.mxu0 0.0
      %2124 = vmatpush.msra.mxu0 0.0
      %2125 = vmatpush.msra.mxu0 0.0
      %2126 = vmatpush.msra.mxu0 0.0
      %2127 = vmatpush.msra.mxu0 0.0
      %v2128 = vand.u32 %v1705, 4294901760
      %2129 = vmatpush.msra.mxu0 %v2128
      %v2130 = vand.u32 %v1704, 4294901760
      %2131 = vmatpush.msra.mxu0 %v2130
      %v2132 = vand.u32 %v1703, 4294901760
      %2133 = vmatpush.msra.mxu0 %v2132
      %v2134 = vand.u32 %v1702, 4294901760
      %2135 = vmatpush.msra.mxu0 %v2134
      %v2136 = vand.u32 %v2014, 4294901760
      %v2137 = vsub.f32 %v2014, %v2136
      %v2138 = vand.u32 %v2137, 4294901760
      %2139 = vmatmul.f32.gmra.mxu0 %v2138
      %v2140 = vpop.f32.mrf.mxu0
      %v2141 = vadd.f32 %v2114, %v2140
      %2142 = vdwg.mxu0
      %2143 = vmatpush.msra.mxu0 0.0
      %2144 = vmatpush.msra.mxu0 0.0
      %2145 = vmatpush.msra.mxu0 0.0
      %2146 = vmatpush.msra.mxu0 0.0
      %2147 = vmatpush.msra.mxu0 0.0
      %2148 = vmatpush.msra.mxu0 0.0
      %2149 = vmatpush.msra.mxu0 0.0
      %2150 = vmatpush.msra.mxu0 0.0
      %2151 = vmatpush.msra.mxu0 0.0
      %2152 = vmatpush.msra.mxu0 0.0
      %2153 = vmatpush.msra.mxu0 0.0
      %2154 = vmatpush.msra.mxu0 0.0
      %v2155 = vand.u32 %v1705, 4294901760
      %v2156 = vsub.f32 %v1705, %v2155
      %v2157 = vand.u32 %v2156, 4294901760
      %2158 = vmatpush.msra.mxu0 %v2157
      %v2159 = vand.u32 %v1704, 4294901760
      %v2160 = vsub.f32 %v1704, %v2159
      %v2161 = vand.u32 %v2160, 4294901760
      %2162 = vmatpush.msra.mxu0 %v2161
      %v2163 = vand.u32 %v1703, 4294901760
      %v2164 = vsub.f32 %v1703, %v2163
      %v2165 = vand.u32 %v2164, 4294901760
      %2166 = vmatpush.msra.mxu0 %v2165
      %v2167 = vand.u32 %v1702, 4294901760
      %v2168 = vsub.f32 %v1702, %v2167
      %v2169 = vand.u32 %v2168, 4294901760
      %2170 = vmatpush.msra.mxu0 %v2169
      %v2171 = vand.u32 %v2014, 4294901760
      %2172 = vmatmul.f32.gmra.mxu0 %v2171
      %v2173 = vpop.f32.mrf.mxu0
      %v2174 = vadd.f32 %v2141, %v2173
      %2175 = vdwg.mxu0
      %2176 = vmatpush.msra.mxu0 0.0
      %2177 = vmatpush.msra.mxu0 0.0
      %2178 = vmatpush.msra.mxu0 0.0
      %2179 = vmatpush.msra.mxu0 0.0
      %2180 = vmatpush.msra.mxu0 0.0
      %2181 = vmatpush.msra.mxu0 0.0
      %2182 = vmatpush.msra.mxu0 0.0
      %2183 = vmatpush.msra.mxu0 0.0
      %2184 = vmatpush.msra.mxu0 0.0
      %2185 = vmatpush.msra.mxu0 0.0
      %2186 = vmatpush.msra.mxu0 0.0
      %2187 = vmatpush.msra.mxu0 0.0
      %v2188 = vand.u32 %v1705, 4294901760
      %2189 = vmatpush.msra.mxu0 %v2188
      %v2190 = vand.u32 %v1704, 4294901760
      %2191 = vmatpush.msra.mxu0 %v2190
      %v2192 = vand.u32 %v1703, 4294901760
      %2193 = vmatpush.msra.mxu0 %v2192
      %v2194 = vand.u32 %v1702, 4294901760
      %2195 = vmatpush.msra.mxu0 %v2194
      %v2196 = vand.u32 %v2014, 4294901760
      %2197 = vmatmul.f32.gmra.mxu0 %v2196
      %v2198 = vpop.f32.mrf.mxu0
      %v2199 = vadd.f32 %v2174, %v2198
      %2200 = vdwg.mxu0
      %v2201 = vadd.f32 %v2012, %v2199
      %v2202 = vmul.f32 %v2201, 0.5
      %v2203 = vtanh.pop %v2202
      %v2204 = vadd.f32 %v2203, 1.0
      %v2205 = vmul.f32 %v2204, 0.5
      %v2206 = vtanh.pop %v2201
      %2208 = vrot.lane.b32.xlu0 %v2011, 32
      %v2209 = vpop.permute.xlu0 %2208
      %v2211 = vmul.f32 %v2205, %v2209
      %2213 = vrot.lane.b32.xlu0 %v2206, 32
      %v2214 = vpop.permute.xlu0 %2213
      %v2216 = vmul.f32 %v2205, %v2214
      %2218 = vrot.lane.b32.xlu0 %v2216, 32
      %v2219 = vpop.permute.xlu0 %2218
      %v2221 = vadd.f32 %v2211, %v2219
      %v2222 = vtanh.pop %v2221
      %2224 = vrot.lane.b32.xlu0 %v2222, 32
      %v2225 = vpop.permute.xlu0 %2224
      %v2227 = vmul.f32 %v2205, %v2225
      %2229 = vrot.lane.b32.xlu0 %v2227, 64
      %v2230 = vpop.permute.xlu0 %2229
      %2232 = vst.msk [vmem:[%s477] sm:$0xff] %vm520, %v2230
      %v2233 = vld [vmem:[%s1038] sm:$0xff]
      %v2234 = vsel %vm520, %v2230, 0
      %2236 = vmatpush.msra.mxu0 0.0
      %2237 = vmatpush.msra.mxu0 0.0
      %2238 = vmatpush.msra.mxu0 0.0
      %2239 = vmatpush.msra.mxu0 0.0
      %2240 = vmatpush.msra.mxu0 0.0
      %2241 = vmatpush.msra.mxu0 0.0
      %2242 = vmatpush.msra.mxu0 0.0
      %2243 = vmatpush.msra.mxu0 0.0
      %2244 = vmatpush.msra.mxu0 0.0
      %2245 = vmatpush.msra.mxu0 0.0
      %2246 = vmatpush.msra.mxu0 0.0
      %2247 = vmatpush.msra.mxu0 0.0
      %v2248 = vand.u32 %v1705, 4294901760
      %2249 = vmatpush.msra.mxu0 %v2248
      %v2250 = vand.u32 %v1704, 4294901760
      %2251 = vmatpush.msra.mxu0 %v2250
      %v2252 = vand.u32 %v1703, 4294901760
      %2253 = vmatpush.msra.mxu0 %v2252
      %v2254 = vand.u32 %v1702, 4294901760
      %2255 = vmatpush.msra.mxu0 %v2254
      %v2256 = vand.u32 %v2234, 4294901760
      %v2257 = vsub.f32 %v2234, %v2256
      %v2258 = vand.u32 %v2257, 4294901760
      %v2259 = vsub.f32 %v2257, %v2258
      %v2260 = vand.u32 %v2259, 4294901760
      %2261 = vmatmul.f32.gmra.mxu0 %v2260
      %v2262 = vpop.f32.mrf.mxu0
      %v2263 = vadd.f32 0.0, %v2262
      %2264 = vdwg.mxu0
      %2265 = vmatpush.msra.mxu0 0.0
      %2266 = vmatpush.msra.mxu0 0.0
      %2267 = vmatpush.msra.mxu0 0.0
      %2268 = vmatpush.msra.mxu0 0.0
      %2269 = vmatpush.msra.mxu0 0.0
      %2270 = vmatpush.msra.mxu0 0.0
      %2271 = vmatpush.msra.mxu0 0.0
      %2272 = vmatpush.msra.mxu0 0.0
      %2273 = vmatpush.msra.mxu0 0.0
      %2274 = vmatpush.msra.mxu0 0.0
      %2275 = vmatpush.msra.mxu0 0.0
      %2276 = vmatpush.msra.mxu0 0.0
      %v2277 = vand.u32 %v1705, 4294901760
      %v2278 = vsub.f32 %v1705, %v2277
      %v2279 = vand.u32 %v2278, 4294901760
      %v2280 = vsub.f32 %v2278, %v2279
      %v2281 = vand.u32 %v2280, 4294901760
      %2282 = vmatpush.msra.mxu0 %v2281
      %v2283 = vand.u32 %v1704, 4294901760
      %v2284 = vsub.f32 %v1704, %v2283
      %v2285 = vand.u32 %v2284, 4294901760
      %v2286 = vsub.f32 %v2284, %v2285
      %v2287 = vand.u32 %v2286, 4294901760
      %2288 = vmatpush.msra.mxu0 %v2287
      %v2289 = vand.u32 %v1703, 4294901760
      %v2290 = vsub.f32 %v1703, %v2289
      %v2291 = vand.u32 %v2290, 4294901760
      %v2292 = vsub.f32 %v2290, %v2291
      %v2293 = vand.u32 %v2292, 4294901760
      %2294 = vmatpush.msra.mxu0 %v2293
      %v2295 = vand.u32 %v1702, 4294901760
      %v2296 = vsub.f32 %v1702, %v2295
      %v2297 = vand.u32 %v2296, 4294901760
      %v2298 = vsub.f32 %v2296, %v2297
      %v2299 = vand.u32 %v2298, 4294901760
      %2300 = vmatpush.msra.mxu0 %v2299
      %v2301 = vand.u32 %v2234, 4294901760
      %2302 = vmatmul.f32.gmra.mxu0 %v2301
      %v2303 = vpop.f32.mrf.mxu0
      %v2304 = vadd.f32 %v2263, %v2303
      %2305 = vdwg.mxu0
      %2306 = vmatpush.msra.mxu0 0.0
      %2307 = vmatpush.msra.mxu0 0.0
      %2308 = vmatpush.msra.mxu0 0.0
      %2309 = vmatpush.msra.mxu0 0.0
      %2310 = vmatpush.msra.mxu0 0.0
      %2311 = vmatpush.msra.mxu0 0.0
      %2312 = vmatpush.msra.mxu0 0.0
      %2313 = vmatpush.msra.mxu0 0.0
      %2314 = vmatpush.msra.mxu0 0.0
      %2315 = vmatpush.msra.mxu0 0.0
      %2316 = vmatpush.msra.mxu0 0.0
      %2317 = vmatpush.msra.mxu0 0.0
      %v2318 = vand.u32 %v1705, 4294901760
      %v2319 = vsub.f32 %v1705, %v2318
      %2320 = vmatpush.msra.mxu0 %v2319
      %v2321 = vand.u32 %v1704, 4294901760
      %v2322 = vsub.f32 %v1704, %v2321
      %2323 = vmatpush.msra.mxu0 %v2322
      %v2324 = vand.u32 %v1703, 4294901760
      %v2325 = vsub.f32 %v1703, %v2324
      %2326 = vmatpush.msra.mxu0 %v2325
      %v2327 = vand.u32 %v1702, 4294901760
      %v2328 = vsub.f32 %v1702, %v2327
      %2329 = vmatpush.msra.mxu0 %v2328
      %v2330 = vand.u32 %v2234, 4294901760
      %v2331 = vsub.f32 %v2234, %v2330
      %2332 = vmatmul.f32.gmra.mxu0 %v2331
      %v2333 = vpop.f32.mrf.mxu0
      %v2334 = vadd.f32 %v2304, %v2333
      %2335 = vdwg.mxu0
      %2336 = vmatpush.msra.mxu0 0.0
      %2337 = vmatpush.msra.mxu0 0.0
      %2338 = vmatpush.msra.mxu0 0.0
      %2339 = vmatpush.msra.mxu0 0.0
      %2340 = vmatpush.msra.mxu0 0.0
      %2341 = vmatpush.msra.mxu0 0.0
      %2342 = vmatpush.msra.mxu0 0.0
      %2343 = vmatpush.msra.mxu0 0.0
      %2344 = vmatpush.msra.mxu0 0.0
      %2345 = vmatpush.msra.mxu0 0.0
      %2346 = vmatpush.msra.mxu0 0.0
      %2347 = vmatpush.msra.mxu0 0.0
      %v2348 = vand.u32 %v1705, 4294901760
      %2349 = vmatpush.msra.mxu0 %v2348
      %v2350 = vand.u32 %v1704, 4294901760
      %2351 = vmatpush.msra.mxu0 %v2350
      %v2352 = vand.u32 %v1703, 4294901760
      %2353 = vmatpush.msra.mxu0 %v2352
      %v2354 = vand.u32 %v1702, 4294901760
      %2355 = vmatpush.msra.mxu0 %v2354
      %v2356 = vand.u32 %v2234, 4294901760
      %v2357 = vsub.f32 %v2234, %v2356
      %v2358 = vand.u32 %v2357, 4294901760
      %2359 = vmatmul.f32.gmra.mxu0 %v2358
      %v2360 = vpop.f32.mrf.mxu0
      %v2361 = vadd.f32 %v2334, %v2360
      %2362 = vdwg.mxu0
      %2363 = vmatpush.msra.mxu0 0.0
      %2364 = vmatpush.msra.mxu0 0.0
      %2365 = vmatpush.msra.mxu0 0.0
      %2366 = vmatpush.msra.mxu0 0.0
      %2367 = vmatpush.msra.mxu0 0.0
      %2368 = vmatpush.msra.mxu0 0.0
      %2369 = vmatpush.msra.mxu0 0.0
      %2370 = vmatpush.msra.mxu0 0.0
      %2371 = vmatpush.msra.mxu0 0.0
      %2372 = vmatpush.msra.mxu0 0.0
      %2373 = vmatpush.msra.mxu0 0.0
      %2374 = vmatpush.msra.mxu0 0.0
      %v2375 = vand.u32 %v1705, 4294901760
      %v2376 = vsub.f32 %v1705, %v2375
      %v2377 = vand.u32 %v2376, 4294901760
      %2378 = vmatpush.msra.mxu0 %v2377
      %v2379 = vand.u32 %v1704, 4294901760
      %v2380 = vsub.f32 %v1704, %v2379
      %v2381 = vand.u32 %v2380, 4294901760
      %2382 = vmatpush.msra.mxu0 %v2381
      %v2383 = vand.u32 %v1703, 4294901760
      %v2384 = vsub.f32 %v1703, %v2383
      %v2385 = vand.u32 %v2384, 4294901760
      %2386 = vmatpush.msra.mxu0 %v2385
      %v2387 = vand.u32 %v1702, 4294901760
      %v2388 = vsub.f32 %v1702, %v2387
      %v2389 = vand.u32 %v2388, 4294901760
      %2390 = vmatpush.msra.mxu0 %v2389
      %v2391 = vand.u32 %v2234, 4294901760
      %2392 = vmatmul.f32.gmra.mxu0 %v2391
      %v2393 = vpop.f32.mrf.mxu0
      %v2394 = vadd.f32 %v2361, %v2393
      %2395 = vdwg.mxu0
      %2396 = vmatpush.msra.mxu0 0.0
      %2397 = vmatpush.msra.mxu0 0.0
      %2398 = vmatpush.msra.mxu0 0.0
      %2399 = vmatpush.msra.mxu0 0.0
      %2400 = vmatpush.msra.mxu0 0.0
      %2401 = vmatpush.msra.mxu0 0.0
      %2402 = vmatpush.msra.mxu0 0.0
      %2403 = vmatpush.msra.mxu0 0.0
      %2404 = vmatpush.msra.mxu0 0.0
      %2405 = vmatpush.msra.mxu0 0.0
      %2406 = vmatpush.msra.mxu0 0.0
      %2407 = vmatpush.msra.mxu0 0.0
      %v2408 = vand.u32 %v1705, 4294901760
      %2409 = vmatpush.msra.mxu0 %v2408
      %v2410 = vand.u32 %v1704, 4294901760
      %2411 = vmatpush.msra.mxu0 %v2410
      %v2412 = vand.u32 %v1703, 4294901760
      %2413 = vmatpush.msra.mxu0 %v2412
      %v2414 = vand.u32 %v1702, 4294901760
      %2415 = vmatpush.msra.mxu0 %v2414
      %v2416 = vand.u32 %v2234, 4294901760
      %2417 = vmatmul.f32.gmra.mxu0 %v2416
      %v2418 = vpop.f32.mrf.mxu0
      %v2419 = vadd.f32 %v2394, %v2418
      %2420 = vdwg.mxu0
      %v2421 = vadd.f32 %v2233, %v2419
      %v2422 = vmul.f32 %v2421, 0.5
      %v2423 = vtanh.pop %v2422
      %v2424 = vadd.f32 %v2423, 1.0
      %v2425 = vmul.f32 %v2424, 0.5
      %v2426 = vtanh.pop %v2421
      %v2427 = vmul.f32 %v2425, %v2221
      %2429 = vrot.lane.b32.xlu0 %v2426, 32
      %v2430 = vpop.permute.xlu0 %2429
      %v2432 = vmul.f32 %v2425, %v2430
      %2434 = vrot.lane.b32.xlu0 %v2432, 32
      %v2435 = vpop.permute.xlu0 %2434
      %v2437 = vadd.f32 %v2427, %v2435
      %v2438 = vtanh.pop %v2437
      %2440 = vrot.lane.b32.xlu0 %v2438, 32
      %v2441 = vpop.permute.xlu0 %2440
      %v2443 = vmul.f32 %v2425, %v2441
      %2445 = vrot.lane.b32.xlu0 %v2443, 64
      %v2446 = vpop.permute.xlu0 %2445
      %s2448 = scalar_lea.vmem %s477, 8
      %2449 = vst.msk [vmem:[%s2448] sm:$0xff] %vm520, %v2446
      %v2450 = vld [vmem:[%s1256] sm:$0xff]
      %v2451 = vsel %vm520, %v2446, 0
      %2453 = vmatpush.msra.mxu0 0.0
      %2454 = vmatpush.msra.mxu0 0.0
      %2455 = vmatpush.msra.mxu0 0.0
      %2456 = vmatpush.msra.mxu0 0.0
      %2457 = vmatpush.msra.mxu0 0.0
      %2458 = vmatpush.msra.mxu0 0.0
      %2459 = vmatpush.msra.mxu0 0.0
      %2460 = vmatpush.msra.mxu0 0.0
      %2461 = vmatpush.msra.mxu0 0.0
      %2462 = vmatpush.msra.mxu0 0.0
      %2463 = vmatpush.msra.mxu0 0.0
      %2464 = vmatpush.msra.mxu0 0.0
      %v2465 = vand.u32 %v1705, 4294901760
      %2466 = vmatpush.msra.mxu0 %v2465
      %v2467 = vand.u32 %v1704, 4294901760
      %2468 = vmatpush.msra.mxu0 %v2467
      %v2469 = vand.u32 %v1703, 4294901760
      %2470 = vmatpush.msra.mxu0 %v2469
      %v2471 = vand.u32 %v1702, 4294901760
      %2472 = vmatpush.msra.mxu0 %v2471
      %v2473 = vand.u32 %v2451, 4294901760
      %v2474 = vsub.f32 %v2451, %v2473
      %v2475 = vand.u32 %v2474, 4294901760
      %v2476 = vsub.f32 %v2474, %v2475
      %v2477 = vand.u32 %v2476, 4294901760
      %2478 = vmatmul.f32.gmra.mxu0 %v2477
      %v2479 = vpop.f32.mrf.mxu0
      %v2480 = vadd.f32 0.0, %v2479
      %2481 = vdwg.mxu0
      %2482 = vmatpush.msra.mxu0 0.0
      %2483 = vmatpush.msra.mxu0 0.0
      %2484 = vmatpush.msra.mxu0 0.0
      %2485 = vmatpush.msra.mxu0 0.0
      %2486 = vmatpush.msra.mxu0 0.0
      %2487 = vmatpush.msra.mxu0 0.0
      %2488 = vmatpush.msra.mxu0 0.0
      %2489 = vmatpush.msra.mxu0 0.0
      %2490 = vmatpush.msra.mxu0 0.0
      %2491 = vmatpush.msra.mxu0 0.0
      %2492 = vmatpush.msra.mxu0 0.0
      %2493 = vmatpush.msra.mxu0 0.0
      %v2494 = vand.u32 %v1705, 4294901760
      %v2495 = vsub.f32 %v1705, %v2494
      %v2496 = vand.u32 %v2495, 4294901760
      %v2497 = vsub.f32 %v2495, %v2496
      %v2498 = vand.u32 %v2497, 4294901760
      %2499 = vmatpush.msra.mxu0 %v2498
      %v2500 = vand.u32 %v1704, 4294901760
      %v2501 = vsub.f32 %v1704, %v2500
      %v2502 = vand.u32 %v2501, 4294901760
      %v2503 = vsub.f32 %v2501, %v2502
      %v2504 = vand.u32 %v2503, 4294901760
      %2505 = vmatpush.msra.mxu0 %v2504
      %v2506 = vand.u32 %v1703, 4294901760
      %v2507 = vsub.f32 %v1703, %v2506
      %v2508 = vand.u32 %v2507, 4294901760
      %v2509 = vsub.f32 %v2507, %v2508
      %v2510 = vand.u32 %v2509, 4294901760
      %2511 = vmatpush.msra.mxu0 %v2510
      %v2512 = vand.u32 %v1702, 4294901760
      %v2513 = vsub.f32 %v1702, %v2512
      %v2514 = vand.u32 %v2513, 4294901760
      %v2515 = vsub.f32 %v2513, %v2514
      %v2516 = vand.u32 %v2515, 4294901760
      %2517 = vmatpush.msra.mxu0 %v2516
      %v2518 = vand.u32 %v2451, 4294901760
      %2519 = vmatmul.f32.gmra.mxu0 %v2518
      %v2520 = vpop.f32.mrf.mxu0
      %v2521 = vadd.f32 %v2480, %v2520
      %2522 = vdwg.mxu0
      %2523 = vmatpush.msra.mxu0 0.0
      %2524 = vmatpush.msra.mxu0 0.0
      %2525 = vmatpush.msra.mxu0 0.0
      %2526 = vmatpush.msra.mxu0 0.0
      %2527 = vmatpush.msra.mxu0 0.0
      %2528 = vmatpush.msra.mxu0 0.0
      %2529 = vmatpush.msra.mxu0 0.0
      %2530 = vmatpush.msra.mxu0 0.0
      %2531 = vmatpush.msra.mxu0 0.0
      %2532 = vmatpush.msra.mxu0 0.0
      %2533 = vmatpush.msra.mxu0 0.0
      %2534 = vmatpush.msra.mxu0 0.0
      %v2535 = vand.u32 %v1705, 4294901760
      %v2536 = vsub.f32 %v1705, %v2535
      %2537 = vmatpush.msra.mxu0 %v2536
      %v2538 = vand.u32 %v1704, 4294901760
      %v2539 = vsub.f32 %v1704, %v2538
      %2540 = vmatpush.msra.mxu0 %v2539
      %v2541 = vand.u32 %v1703, 4294901760
      %v2542 = vsub.f32 %v1703, %v2541
      %2543 = vmatpush.msra.mxu0 %v2542
      %v2544 = vand.u32 %v1702, 4294901760
      %v2545 = vsub.f32 %v1702, %v2544
      %2546 = vmatpush.msra.mxu0 %v2545
      %v2547 = vand.u32 %v2451, 4294901760
      %v2548 = vsub.f32 %v2451, %v2547
      %2549 = vmatmul.f32.gmra.mxu0 %v2548
      %v2550 = vpop.f32.mrf.mxu0
      %v2551 = vadd.f32 %v2521, %v2550
      %2552 = vdwg.mxu0
      %2553 = vmatpush.msra.mxu0 0.0
      %2554 = vmatpush.msra.mxu0 0.0
      %2555 = vmatpush.msra.mxu0 0.0
      %2556 = vmatpush.msra.mxu0 0.0
      %2557 = vmatpush.msra.mxu0 0.0
      %2558 = vmatpush.msra.mxu0 0.0
      %2559 = vmatpush.msra.mxu0 0.0
      %2560 = vmatpush.msra.mxu0 0.0
      %2561 = vmatpush.msra.mxu0 0.0
      %2562 = vmatpush.msra.mxu0 0.0
      %2563 = vmatpush.msra.mxu0 0.0
      %2564 = vmatpush.msra.mxu0 0.0
      %v2565 = vand.u32 %v1705, 4294901760
      %2566 = vmatpush.msra.mxu0 %v2565
      %v2567 = vand.u32 %v1704, 4294901760
      %2568 = vmatpush.msra.mxu0 %v2567
      %v2569 = vand.u32 %v1703, 4294901760
      %2570 = vmatpush.msra.mxu0 %v2569
      %v2571 = vand.u32 %v1702, 4294901760
      %2572 = vmatpush.msra.mxu0 %v2571
      %v2573 = vand.u32 %v2451, 4294901760
      %v2574 = vsub.f32 %v2451, %v2573
      %v2575 = vand.u32 %v2574, 4294901760
      %2576 = vmatmul.f32.gmra.mxu0 %v2575
      %v2577 = vpop.f32.mrf.mxu0
      %v2578 = vadd.f32 %v2551, %v2577
      %2579 = vdwg.mxu0
      %2580 = vmatpush.msra.mxu0 0.0
      %2581 = vmatpush.msra.mxu0 0.0
      %2582 = vmatpush.msra.mxu0 0.0
      %2583 = vmatpush.msra.mxu0 0.0
      %2584 = vmatpush.msra.mxu0 0.0
      %2585 = vmatpush.msra.mxu0 0.0
      %2586 = vmatpush.msra.mxu0 0.0
      %2587 = vmatpush.msra.mxu0 0.0
      %2588 = vmatpush.msra.mxu0 0.0
      %2589 = vmatpush.msra.mxu0 0.0
      %2590 = vmatpush.msra.mxu0 0.0
      %2591 = vmatpush.msra.mxu0 0.0
      %v2592 = vand.u32 %v1705, 4294901760
      %v2593 = vsub.f32 %v1705, %v2592
      %v2594 = vand.u32 %v2593, 4294901760
      %2595 = vmatpush.msra.mxu0 %v2594
      %v2596 = vand.u32 %v1704, 4294901760
      %v2597 = vsub.f32 %v1704, %v2596
      %v2598 = vand.u32 %v2597, 4294901760
      %2599 = vmatpush.msra.mxu0 %v2598
      %v2600 = vand.u32 %v1703, 4294901760
      %v2601 = vsub.f32 %v1703, %v2600
      %v2602 = vand.u32 %v2601, 4294901760
      %2603 = vmatpush.msra.mxu0 %v2602
      %v2604 = vand.u32 %v1702, 4294901760
      %v2605 = vsub.f32 %v1702, %v2604
      %v2606 = vand.u32 %v2605, 4294901760
      %2607 = vmatpush.msra.mxu0 %v2606
      %v2608 = vand.u32 %v2451, 4294901760
      %2609 = vmatmul.f32.gmra.mxu0 %v2608
      %v2610 = vpop.f32.mrf.mxu0
      %v2611 = vadd.f32 %v2578, %v2610
      %2612 = vdwg.mxu0
      %2613 = vmatpush.msra.mxu0 0.0
      %2614 = vmatpush.msra.mxu0 0.0
      %2615 = vmatpush.msra.mxu0 0.0
      %2616 = vmatpush.msra.mxu0 0.0
      %2617 = vmatpush.msra.mxu0 0.0
      %2618 = vmatpush.msra.mxu0 0.0
      %2619 = vmatpush.msra.mxu0 0.0
      %2620 = vmatpush.msra.mxu0 0.0
      %2621 = vmatpush.msra.mxu0 0.0
      %2622 = vmatpush.msra.mxu0 0.0
      %2623 = vmatpush.msra.mxu0 0.0
      %2624 = vmatpush.msra.mxu0 0.0
      %v2625 = vand.u32 %v1705, 4294901760
      %2626 = vmatpush.msra.mxu0 %v2625
      %v2627 = vand.u32 %v1704, 4294901760
      %2628 = vmatpush.msra.mxu0 %v2627
      %v2629 = vand.u32 %v1703, 4294901760
      %2630 = vmatpush.msra.mxu0 %v2629
      %v2631 = vand.u32 %v1702, 4294901760
      %2632 = vmatpush.msra.mxu0 %v2631
      %v2633 = vand.u32 %v2451, 4294901760
      %2634 = vmatmul.f32.gmra.mxu0 %v2633
      %v2635 = vpop.f32.mrf.mxu0
      %v2636 = vadd.f32 %v2611, %v2635
      %2637 = vdwg.mxu0
      %v2638 = vadd.f32 %v2450, %v2636
      %v2639 = vmul.f32 %v2638, 0.5
      %v2640 = vtanh.pop %v2639
      %v2641 = vadd.f32 %v2640, 1.0
      %v2642 = vmul.f32 %v2641, 0.5
      %v2643 = vtanh.pop %v2638
      %v2644 = vmul.f32 %v2642, %v2437
      %2646 = vrot.lane.b32.xlu0 %v2643, 32
      %v2647 = vpop.permute.xlu0 %2646
      %v2649 = vmul.f32 %v2642, %v2647
      %2651 = vrot.lane.b32.xlu0 %v2649, 32
      %v2652 = vpop.permute.xlu0 %2651
      %v2654 = vadd.f32 %v2644, %v2652
      %v2655 = vtanh.pop %v2654
      %2657 = vrot.lane.b32.xlu0 %v2655, 32
      %v2658 = vpop.permute.xlu0 %2657
      %v2660 = vmul.f32 %v2642, %v2658
      %2662 = vrot.lane.b32.xlu0 %v2660, 64
      %v2663 = vpop.permute.xlu0 %2662
      %s2665 = scalar_lea.vmem %s477, 16
      %2666 = vst.msk [vmem:[%s2665] sm:$0xff] %vm520, %v2663
      %v2667 = vld [vmem:[%s1474] sm:$0xff]
      %v2668 = vsel %vm520, %v2663, 0
      %2670 = vmatpush.msra.mxu0 0.0
      %2671 = vmatpush.msra.mxu0 0.0
      %2672 = vmatpush.msra.mxu0 0.0
      %2673 = vmatpush.msra.mxu0 0.0
      %2674 = vmatpush.msra.mxu0 0.0
      %2675 = vmatpush.msra.mxu0 0.0
      %2676 = vmatpush.msra.mxu0 0.0
      %2677 = vmatpush.msra.mxu0 0.0
      %2678 = vmatpush.msra.mxu0 0.0
      %2679 = vmatpush.msra.mxu0 0.0
      %2680 = vmatpush.msra.mxu0 0.0
      %2681 = vmatpush.msra.mxu0 0.0
      %v2682 = vand.u32 %v1705, 4294901760
      %2683 = vmatpush.msra.mxu0 %v2682
      %v2684 = vand.u32 %v1704, 4294901760
      %2685 = vmatpush.msra.mxu0 %v2684
      %v2686 = vand.u32 %v1703, 4294901760
      %2687 = vmatpush.msra.mxu0 %v2686
      %v2688 = vand.u32 %v1702, 4294901760
      %2689 = vmatpush.msra.mxu0 %v2688
      %v2690 = vand.u32 %v2668, 4294901760
      %v2691 = vsub.f32 %v2668, %v2690
      %v2692 = vand.u32 %v2691, 4294901760
      %v2693 = vsub.f32 %v2691, %v2692
      %v2694 = vand.u32 %v2693, 4294901760
      %2695 = vmatmul.f32.gmra.mxu0 %v2694
      %v2696 = vpop.f32.mrf.mxu0
      %v2697 = vadd.f32 0.0, %v2696
      %2698 = vdwg.mxu0
      %2699 = vmatpush.msra.mxu0 0.0
      %2700 = vmatpush.msra.mxu0 0.0
      %2701 = vmatpush.msra.mxu0 0.0
      %2702 = vmatpush.msra.mxu0 0.0
      %2703 = vmatpush.msra.mxu0 0.0
      %2704 = vmatpush.msra.mxu0 0.0
      %2705 = vmatpush.msra.mxu0 0.0
      %2706 = vmatpush.msra.mxu0 0.0
      %2707 = vmatpush.msra.mxu0 0.0
      %2708 = vmatpush.msra.mxu0 0.0
      %2709 = vmatpush.msra.mxu0 0.0
      %2710 = vmatpush.msra.mxu0 0.0
      %v2711 = vand.u32 %v1705, 4294901760
      %v2712 = vsub.f32 %v1705, %v2711
      %v2713 = vand.u32 %v2712, 4294901760
      %v2714 = vsub.f32 %v2712, %v2713
      %v2715 = vand.u32 %v2714, 4294901760
      %2716 = vmatpush.msra.mxu0 %v2715
      %v2717 = vand.u32 %v1704, 4294901760
      %v2718 = vsub.f32 %v1704, %v2717
      %v2719 = vand.u32 %v2718, 4294901760
      %v2720 = vsub.f32 %v2718, %v2719
      %v2721 = vand.u32 %v2720, 4294901760
      %2722 = vmatpush.msra.mxu0 %v2721
      %v2723 = vand.u32 %v1703, 4294901760
      %v2724 = vsub.f32 %v1703, %v2723
      %v2725 = vand.u32 %v2724, 4294901760
      %v2726 = vsub.f32 %v2724, %v2725
      %v2727 = vand.u32 %v2726, 4294901760
      %2728 = vmatpush.msra.mxu0 %v2727
      %v2729 = vand.u32 %v1702, 4294901760
      %v2730 = vsub.f32 %v1702, %v2729
      %v2731 = vand.u32 %v2730, 4294901760
      %v2732 = vsub.f32 %v2730, %v2731
      %v2733 = vand.u32 %v2732, 4294901760
      %2734 = vmatpush.msra.mxu0 %v2733
      %v2735 = vand.u32 %v2668, 4294901760
      %2736 = vmatmul.f32.gmra.mxu0 %v2735
      %v2737 = vpop.f32.mrf.mxu0
      %v2738 = vadd.f32 %v2697, %v2737
      %2739 = vdwg.mxu0
      %2740 = vmatpush.msra.mxu0 0.0
      %2741 = vmatpush.msra.mxu0 0.0
      %2742 = vmatpush.msra.mxu0 0.0
      %2743 = vmatpush.msra.mxu0 0.0
      %2744 = vmatpush.msra.mxu0 0.0
      %2745 = vmatpush.msra.mxu0 0.0
      %2746 = vmatpush.msra.mxu0 0.0
      %2747 = vmatpush.msra.mxu0 0.0
      %2748 = vmatpush.msra.mxu0 0.0
      %2749 = vmatpush.msra.mxu0 0.0
      %2750 = vmatpush.msra.mxu0 0.0
      %2751 = vmatpush.msra.mxu0 0.0
      %v2752 = vand.u32 %v1705, 4294901760
      %v2753 = vsub.f32 %v1705, %v2752
      %2754 = vmatpush.msra.mxu0 %v2753
      %v2755 = vand.u32 %v1704, 4294901760
      %v2756 = vsub.f32 %v1704, %v2755
      %2757 = vmatpush.msra.mxu0 %v2756
      %v2758 = vand.u32 %v1703, 4294901760
      %v2759 = vsub.f32 %v1703, %v2758
      %2760 = vmatpush.msra.mxu0 %v2759
      %v2761 = vand.u32 %v1702, 4294901760
      %v2762 = vsub.f32 %v1702, %v2761
      %2763 = vmatpush.msra.mxu0 %v2762
      %v2764 = vand.u32 %v2668, 4294901760
      %v2765 = vsub.f32 %v2668, %v2764
      %2766 = vmatmul.f32.gmra.mxu0 %v2765
      %v2767 = vpop.f32.mrf.mxu0
      %v2768 = vadd.f32 %v2738, %v2767
      %2769 = vdwg.mxu0
      %2770 = vmatpush.msra.mxu0 0.0
      %2771 = vmatpush.msra.mxu0 0.0
      %2772 = vmatpush.msra.mxu0 0.0
      %2773 = vmatpush.msra.mxu0 0.0
      %2774 = vmatpush.msra.mxu0 0.0
      %2775 = vmatpush.msra.mxu0 0.0
      %2776 = vmatpush.msra.mxu0 0.0
      %2777 = vmatpush.msra.mxu0 0.0
      %2778 = vmatpush.msra.mxu0 0.0
      %2779 = vmatpush.msra.mxu0 0.0
      %2780 = vmatpush.msra.mxu0 0.0
      %2781 = vmatpush.msra.mxu0 0.0
      %v2782 = vand.u32 %v1705, 4294901760
      %2783 = vmatpush.msra.mxu0 %v2782
      %v2784 = vand.u32 %v1704, 4294901760
      %2785 = vmatpush.msra.mxu0 %v2784
      %v2786 = vand.u32 %v1703, 4294901760
      %2787 = vmatpush.msra.mxu0 %v2786
      %v2788 = vand.u32 %v1702, 4294901760
      %2789 = vmatpush.msra.mxu0 %v2788
      %v2790 = vand.u32 %v2668, 4294901760
      %v2791 = vsub.f32 %v2668, %v2790
      %v2792 = vand.u32 %v2791, 4294901760
      %2793 = vmatmul.f32.gmra.mxu0 %v2792
      %v2794 = vpop.f32.mrf.mxu0
      %v2795 = vadd.f32 %v2768, %v2794
      %2796 = vdwg.mxu0
      %2797 = vmatpush.msra.mxu0 0.0
      %2798 = vmatpush.msra.mxu0 0.0
      %2799 = vmatpush.msra.mxu0 0.0
      %2800 = vmatpush.msra.mxu0 0.0
      %2801 = vmatpush.msra.mxu0 0.0
      %2802 = vmatpush.msra.mxu0 0.0
      %2803 = vmatpush.msra.mxu0 0.0
      %2804 = vmatpush.msra.mxu0 0.0
      %2805 = vmatpush.msra.mxu0 0.0
      %2806 = vmatpush.msra.mxu0 0.0
      %2807 = vmatpush.msra.mxu0 0.0
      %2808 = vmatpush.msra.mxu0 0.0
      %v2809 = vand.u32 %v1705, 4294901760
      %v2810 = vsub.f32 %v1705, %v2809
      %v2811 = vand.u32 %v2810, 4294901760
      %2812 = vmatpush.msra.mxu0 %v2811
      %v2813 = vand.u32 %v1704, 4294901760
      %v2814 = vsub.f32 %v1704, %v2813
      %v2815 = vand.u32 %v2814, 4294901760
      %2816 = vmatpush.msra.mxu0 %v2815
      %v2817 = vand.u32 %v1703, 4294901760
      %v2818 = vsub.f32 %v1703, %v2817
      %v2819 = vand.u32 %v2818, 4294901760
      %2820 = vmatpush.msra.mxu0 %v2819
      %v2821 = vand.u32 %v1702, 4294901760
      %v2822 = vsub.f32 %v1702, %v2821
      %v2823 = vand.u32 %v2822, 4294901760
      %2824 = vmatpush.msra.mxu0 %v2823
      %v2825 = vand.u32 %v2668, 4294901760
      %2826 = vmatmul.f32.gmra.mxu0 %v2825
      %v2827 = vpop.f32.mrf.mxu0
      %v2828 = vadd.f32 %v2795, %v2827
      %2829 = vdwg.mxu0
      %2830 = vmatpush.msra.mxu0 0.0
      %2831 = vmatpush.msra.mxu0 0.0
      %2832 = vmatpush.msra.mxu0 0.0
      %2833 = vmatpush.msra.mxu0 0.0
      %2834 = vmatpush.msra.mxu0 0.0
      %2835 = vmatpush.msra.mxu0 0.0
      %2836 = vmatpush.msra.mxu0 0.0
      %2837 = vmatpush.msra.mxu0 0.0
      %2838 = vmatpush.msra.mxu0 0.0
      %2839 = vmatpush.msra.mxu0 0.0
      %2840 = vmatpush.msra.mxu0 0.0
      %2841 = vmatpush.msra.mxu0 0.0
      %v2842 = vand.u32 %v1705, 4294901760
      %2843 = vmatpush.msra.mxu0 %v2842
      %v2844 = vand.u32 %v1704, 4294901760
      %2845 = vmatpush.msra.mxu0 %v2844
      %v2846 = vand.u32 %v1703, 4294901760
      %2847 = vmatpush.msra.mxu0 %v2846
      %v2848 = vand.u32 %v1702, 4294901760
      %2849 = vmatpush.msra.mxu0 %v2848
      %v2850 = vand.u32 %v2668, 4294901760
      %2851 = vmatmul.f32.gmra.mxu0 %v2850
      %v2852 = vpop.f32.mrf.mxu0
      %v2853 = vadd.f32 %v2828, %v2852
      %2854 = vdwg.mxu0
      %v2855 = vadd.f32 %v2667, %v2853
      %v2856 = vmul.f32 %v2855, 0.5
      %v2857 = vtanh.pop %v2856
      %v2858 = vadd.f32 %v2857, 1.0
      %v2859 = vmul.f32 %v2858, 0.5
      %v2860 = vtanh.pop %v2855
      %v2861 = vmul.f32 %v2859, %v2654
      %2863 = vrot.lane.b32.xlu0 %v2860, 32
      %v2864 = vpop.permute.xlu0 %2863
      %v2866 = vmul.f32 %v2859, %v2864
      %2868 = vrot.lane.b32.xlu0 %v2866, 32
      %v2869 = vpop.permute.xlu0 %2868
      %v2871 = vadd.f32 %v2861, %v2869
      %v2872 = vtanh.pop %v2871
      %2874 = vrot.lane.b32.xlu0 %v2872, 32
      %v2875 = vpop.permute.xlu0 %2874
      %v2877 = vmul.f32 %v2859, %v2875
      %2879 = vrot.lane.b32.xlu0 %v2877, 64
      %v2880 = vpop.permute.xlu0 %2879
      %s2882 = scalar_lea.vmem %s477, 24
      %2883 = vst.msk [vmem:[%s2882] sm:$0xff] %vm520, %v2880
      %2884 = vst.msk [vmem:[%s2008] sm:$0xff] %vm520, %v2880
      %2886 = vrot.lane.b32.xlu0 %v2871, 96
      %v2887 = vpop.permute.xlu0 %2886
      %2889 = vst.msk [vmem:[%s2010] sm:$0xff] %vm520, %v2887
      %p2890 = scmp.eq.s32.totalorder %s28, 1
      // Predicated region
      $region61: #{decoder_forward.1} parent=55 // pred_check
        %p2891 = pneg %p2890
      $region62: #{decoder_forward.1} parent=55 // pred_check_branch
        %2893 = sbr.rel (%p2891) target = $region64
      $region63: #{decoder_forward.1} parent=55 // pred_region
        %v2894 = vld [vmem:[#allocation4] sm:$0xff]
        %v2895 = vld [vmem:[#allocation4 + $0x8] sm:$0xff]
        %2896 = vst.msk [vmem:[%s485] sm:$0xff] %vm520, %v2894
        %2897 = vst.msk [vmem:[%s485 + $0x8] sm:$0xff] %vm520, %v2895
        %v2898 = vld [vmem:[#allocation5] sm:$0xff]
        %v2899 = vld [vmem:[#allocation5 + $0x8] sm:$0xff]
        %2900 = vst.msk [vmem:[%s490] sm:$0xff] %vm520, %v2898
        %2901 = vst.msk [vmem:[%s490 + $0x8] sm:$0xff] %vm520, %v2899
      $region64: #{decoder_forward.1} parent=55 // pred_fallthru
        _
      %s2902 = smul.u32 %s27, 2
      %s2903 = sadd.s32 %s2902, %s28
      %s2904 = smul.u32 4, %s2903
      %p2905 = scmp.lt.s32.totalorder %s2904, 7
      %s2906 = scalar_select %p2905, %s2904, 7
      %s2907 = smul.addr %s2906, 8
      %s2908 = scalar_lea.vmem %s9, %s2907
      %p2909 = scmp.lt.s32.totalorder %s27, 0
      %s2910 = scalar_select %p2909, %s27, 0
      %s2911 = smul.addr %s2910, 2
      %s2912 = smul.addr %s2911, 8
      %s2913 = scalar_lea.vmem %s10, %s2912
      %p2914 = scmp.lt.s32.totalorder %s27, 0
      %s2915 = scalar_select %p2914, %s27, 0
      %s2916 = smul.addr %s2915, 2
      %s2917 = smul.addr %s2916, 8
      %s2918 = scalar_lea.vmem %s11, %s2917
      // Predicated region
      $region65: #{decoder_forward.1} parent=55 // pred_check
        %p2919 = pneg %p265
      $region66: #{decoder_forward.1} parent=55 // pred_check_branch
        %2921 = sbr.rel (%p2919) target = $region68
      $region67: #{decoder_forward.1} parent=55 // pred_region
        %s2922 = smul.u32 %s27, 2
        %s2923 = sadd.s32 %s2922, %s28
        %s2924 = smul.u32 4, %s2923
      $region68: #{decoder_forward.1} parent=55 // pred_fallthru
        _
      // Predicated region
      $region69: #{decoder_forward.1} parent=55 // pred_check
        %p2925 = pneg %p291
      $region70: #{decoder_forward.1} parent=55 // pred_check_branch
        %2927 = sbr.rel (%p2925) target = $region72
      $region71: #{decoder_forward.1} parent=55 // pred_region
        _
      $region72: #{decoder_forward.1} parent=55 // pred_fallthru
        _
      // Predicated region
      $region73: #{decoder_forward.1} parent=55 // pred_check
        %p2928 = pneg %p317
      $region74: #{decoder_forward.1} parent=55 // pred_check_branch
        %2930 = sbr.rel (%p2928) target = $region76
      $region75: #{decoder_forward.1} parent=55 // pred_region
        _
      $region76: #{decoder_forward.1} parent=55 // pred_fallthru
        _
      // Predicated region
      $region77: #{decoder_forward.1} parent=55 // pred_check
        %p2931 = pneg %p291
      $region78: #{decoder_forward.1} parent=55 // pred_check_branch
        %2933 = sbr.rel (%p2931) target = $region80
      $region79: #{decoder_forward.1} parent=55 // pred_region
        %p2934 = scmp.lt.s32.totalorder %s27, 0
        %s2935 = scalar_select %p2934, %s27, 0
        %s2936 = smul.addr %s2935, 2
        %s2937 = smul.addr %s2936, 8
        %s2938 = scalar_lea.vmem %s10, %s2937
      $region80: #{decoder_forward.1} parent=55 // pred_fallthru
        _
      // Predicated region
      $region81: #{decoder_forward.1} parent=55 // pred_check
        %p2939 = pneg %p317
      $region82: #{decoder_forward.1} parent=55 // pred_check_branch
        %2941 = sbr.rel (%p2939) target = $region84
      $region83: #{decoder_forward.1} parent=55 // pred_region
        %p2942 = scmp.lt.s32.totalorder %s27, 0
        %s2943 = scalar_select %p2942, %s27, 0
        %s2944 = smul.addr %s2943, 2
        %s2945 = smul.addr %s2944, 8
        %s2946 = scalar_lea.vmem %s11, %s2945
      $region84: #{decoder_forward.1} parent=55 // pred_fallthru
        _
    $region56: #{decoder_forward.1} parent=5 // pred_fallthru
      _
    %p2947 = scmp.le.s32.totalorder 2, %s18
    // Predicated region
    $region85: #{decoder_forward.1} parent=5 // pred_check
      %p2948 = pneg %p2947
    $region86: #{decoder_forward.1} parent=5 // pred_check_branch
      %2950 = sbr.rel (%p2948) target = $region88
    $region87: #{decoder_forward.1} parent=5 // pred_region
      %s2951 = ssub.s32 %s18, 2
      // Predicated region
      $region89: #{decoder_forward.1} parent=87 // pred_check
        %p2952 = pneg %p271
      $region90: #{decoder_forward.1} parent=87 // pred_check_branch
        %2954 = sbr.rel (%p2952) target = $region92
      $region91: #{decoder_forward.1} parent=87 // pred_region
        %s2955 = smul.u32 %s29, 2
        %s2956 = sadd.s32 %s2955, %s30
        %s2957 = smul.u32 4, %s2956
        %p2958 = scmp.lt.s32.totalorder %s2957, 7
        %s2959 = scalar_select %p2958, %s2957, 7
        %s2960 = smul.addr %s2959, 8
        %s2961 = scalar_lea.vmem %s9, %s2960
      $region92: #{decoder_forward.1} parent=87 // pred_fallthru
        _
    $region88: #{decoder_forward.1} parent=5 // pred_fallthru
      _
  $region6: #{decoder_forward.1} parent=0 // loop_footer
    %s22 = sadd.s32 1, %s18
  $region7: #{decoder_forward.1} parent=0 // loop_footer_branch
    %17 = sbr.rel target = $region3
  $region8: #{decoder_forward.1} parent=0 // loop_exit
    _

</llo_original>
